<compile_context>
chip_gen: v6e
topology: v6e:2x2x1
jax: 0.10.0
libtpu: 0.0.40
codegen_flags: <defaults>
</compile_context>

<pallas_src>
import functools

import jax
import jax.numpy as jnp
from jax import lax
from jax.experimental import pallas as pl
from jax.experimental.pallas import tpu as pltpu


# ----------------------------------------------------------------------------
# fused RAB kernel (one image per grid step, everything VMEM/vreg resident)
# ----------------------------------------------------------------------------
def _row_shift(p, d, width):
    """q[y, :] = p[y + d, :]; rows shifted past the edge become zero."""
    if d == 0:
        return p
    z = jnp.zeros((abs(d), width), jnp.float32)
    if d > 0:
        return jnp.concatenate([p[d:], z], axis=0)
    return jnp.concatenate([z, p[:d]], axis=0)


def _rab_kernel(x_ref, w1_ref, b1_ref, w2_ref, b2_ref, wsp_ref,
                sel_ref, avg_ref, exp_ref, out_ref, *, H, W, C):
    f32 = jnp.float32
    WC = W * C
    x0 = x_ref[0].astype(f32)                                   # (H, WC) lane-dense

    def conv3(t, w_ref, b_ref, relu):
        # operand row y = [t[y-1] | t[y] | t[y+1]] (vertical zero padding);
        # horizontal taps + padding are folded into the (3*WC, WC) weight.
        op = jnp.concatenate(
            [_row_shift(t, -1, WC), t, _row_shift(t, 1, WC)], axis=1)   # (H, 3WC)
        y = jnp.dot(op, w_ref[...], preferred_element_type=f32) + b_ref[...]
        return jnp.maximum(y, 0.0) if relu else y

    def res(t):                                  # t + conv2(relu(conv1(t)))
        return t + conv3(conv3(t, w1_ref, b1_ref, True), w2_ref, b2_ref, False)

    x1 = res(x0)
    x2 = res(x1)
    x3 = res(x2)
    x3_1 = x1 + x3
    x4 = res(x3_1)
    x4_1 = x0 + x4

    # ------------------------------- SAB -------------------------------
    # channel max: log-fold over each C-wide lane group; the group max lands on
    # the group's first lane and is extracted with a 0/1 selection matmul.
    m = x4_1
    k = C // 2
    while k:
        m = jnp.maximum(m, jnp.concatenate([m[:, k:], m[:, :k]], axis=1))
        k //= 2
    pmax = jnp.dot(m, sel_ref[...], preferred_element_type=f32)          # (H, W)
    pmean = jnp.dot(x4_1, avg_ref[...], preferred_element_type=f32)      # (H, W)

    # 5x5 spatial conv (2->1, pad 2, no bias) as one matmul over stacked
    # vertically-shifted copies of the two pooled maps.
    op5 = jnp.concatenate(
        [_row_shift(pmax, d, W) for d in (-2, -1, 0, 1, 2)]
        + [_row_shift(pmean, d, W) for d in (-2, -1, 0, 1, 2)], axis=1)  # (H, 10W)
    s = jnp.dot(op5, wsp_ref[...], preferred_element_type=f32)           # (H, W)
    s = jnp.maximum(s, 0.0)                     # ReLU inside SAB's Basic block
    scale = 1.0 / (1.0 + jnp.exp(-s))           # exact sigmoid (approx rcp was
                                                # the source of the tol failure)
    scale_wc = jnp.dot(scale, exp_ref[...], preferred_element_type=f32)  # (H, WC)

    out = x0 + x4_1 * scale_wc                  # x + x4_1 * scale
    out_ref[...] = out[None].astype(out_ref.dtype)


# ----------------------------------------------------------------------------
# wrapper: weight preprocessing (block-banded "row conv" matrices) + pallas_call
# ----------------------------------------------------------------------------
def _conv3_row_matrix(w_oihw, W):
    """(Cout, Cin, 3, 3) -> (3*W*Cin, W*Cout) row-conv matrix (folds dx + h-pad)."""
    w = jnp.transpose(w_oihw, (2, 3, 1, 0))            # (kh, kw, Cin, Cout)
    kh, kw, Cin, Cout = w.shape
    pad = (kw - 1) // 2
    shift = jnp.stack([jnp.eye(W, W, k=pad - dx, dtype=w.dtype) for dx in range(kw)])
    blocks = jnp.einsum('dab,ydij->yaibj', shift, w)   # (kh, W, Cin, W, Cout)
    return blocks.reshape(kh * W * Cin, W * Cout)


def _conv5_row_matrix(wsp, W):
    """(1, 2, 5, 5) -> (2*5*W, W) row-conv matrix for the SAB spatial conv."""
    w = wsp[0]                                         # (2, 5, 5) [cin, dy, dx]
    cin, kh, kw = w.shape
    pad = (kw - 1) // 2
    shift = jnp.stack([jnp.eye(W, W, k=pad - dx, dtype=w.dtype) for dx in range(kw)])
    blocks = jnp.einsum('dab,cyd->cyab', shift, w)     # (cin, kh, W, W)
    return blocks.reshape(cin * kh * W, W)


@jax.jit
def rab_forward(x_nchw, w1, b1, w2, b2, wsp):
    B, C, H, W = x_nchw.shape
    assert C & (C - 1) == 0, "channel count must be a power of two"
    WC = W * C
    f32 = jnp.float32

    # NCHW -> NHWC -> lane-dense (B, H, W*C)
    x = jnp.transpose(x_nchw, (0, 2, 3, 1)).reshape(B, H, WC)

    w1row = _conv3_row_matrix(w1.astype(f32), W)       # (3*WC, WC)
    w2row = _conv3_row_matrix(w2.astype(f32), W)
    b1row = jnp.tile(b1.astype(f32), W).reshape(1, WC)
    b2row = jnp.tile(b2.astype(f32), W).reshape(1, WC)
    wsprow = _conv5_row_matrix(wsp.astype(f32), W)     # (10*W, W)

    expm = jnp.repeat(jnp.eye(W, dtype=f32), C, axis=1)                   # (W, WC)
    avgm = expm.T / C                                                     # (WC, W)
    selm = (jnp.arange(WC)[:, None] == (jnp.arange(W) * C)[None, :]).astype(f32)

    kern = functools.partial(_rab_kernel, H=H, W=W, C=C)

    def full(shape):
        return pl.BlockSpec(shape, lambda b: (0,) * len(shape))

    out = pl.pallas_call(
        kern,
        out_shape=jax.ShapeDtypeStruct((B, H, WC), x_nchw.dtype),
        grid=(B,),
        in_specs=[
            pl.BlockSpec((1, H, WC), lambda b: (b, 0, 0)),   # x (per image)
            full((3 * WC, WC)),                              # w1 row matrix
            full((1, WC)),                                   # b1 (lane layout)
            full((3 * WC, WC)),                              # w2 row matrix
            full((1, WC)),                                   # b2
            full((2 * 5 * W, W)),                            # SAB 5x5 row matrix
            full((WC, W)),                                   # max-select matrix
            full((WC, W)),                                   # mean matrix
            full((W, WC)),                                   # scale-expand matrix
        ],
        out_specs=pl.BlockSpec((1, H, WC), lambda b: (b, 0, 0)),
        compiler_params=pltpu.CompilerParams(dimension_semantics=("parallel",)),
    )(x, w1row, b1row, w2row, b2row, wsprow, selm, avgm, expm)

    return jnp.transpose(out.reshape(B, H, W, C), (0, 3, 1, 2))           # -> NCHW


# ----------------------------------------------------------------------------
# Pure-JAX reference (mirrors the PyTorch graph, NCHW)
# ----------------------------------------------------------------------------
def _conv_nchw(x, w, b, pad):
    out = lax.conv_general_dilated(
        x, w, window_strides=(1, 1), padding=((pad, pad), (pad, pad)),
        dimension_numbers=("NCHW", "OIHW", "NCHW"))
    if b is not None:
        out = out + b[None, :, None, None]
    return out


def rab_reference(x, w1, b1, w2, b2, wsp):
    def res(t):
        h = jnp.maximum(_conv_nchw(t, w1, b1, 1), 0.0)
        return _conv_nchw(h, w2, b2, 1)

    x1 = x + res(x)
    x2 = x1 + res(x1)
    x3 = x2 + res(x2)
    x3_1 = x1 + x3
    x4 = x3_1 + res(x3_1)
    x4_1 = x + x4
    pool = jnp.concatenate(
        [jnp.max(x4_1, axis=1, keepdims=True),
         jnp.mean(x4_1, axis=1, keepdims=True)], axis=1)
    sp = jnp.maximum(_conv_nchw(pool, wsp, None, 2), 0.0)   # Basic = conv + ReLU
    scale = 1.0 / (1.0 + jnp.exp(-sp))
    x5 = x4_1 * scale
    return x + x5


if __name__ == "__main__":
    B, C, H, W = 2, 16, 16, 16
    key = jax.random.PRNGKey(0)
    k1, k2, k3, k4, k5, kx = jax.random.split(key, 6)

    w1 = jax.random.normal(k1, (C, C, 3, 3), jnp.float32) * 0.05
    b1 = jax.random.normal(k2, (C,), jnp.float32) * 0.05
    w2 = jax.random.normal(k3, (C, C, 3, 3), jnp.float32) * 0.05
    b2 = jax.random.normal(k4, (C,), jnp.float32) * 0.05
    wsp = jax.random.normal(k5, (1, 2, 5, 5), jnp.float32) * 0.1
    x = jax.random.normal(kx, (B, C, H, W), jnp.float32)

    out = jax.block_until_ready(rab_forward(x, w1, b1, w2, b2, wsp))
    ref = jax.block_until_ready(rab_reference(x, w1, b1, w2, b2, wsp))

    assert out.shape == x.shape, (out.shape, x.shape)
    max_err = float(jnp.max(jnp.abs(out - ref)))
    assert max_err < 1e-2, f"max abs err too large: {max_err}"
    print("KERNEL_OK")
</pallas_src>

<mosaic_0001>
module attributes {stable_mosaic.version = 11 : i64} {
  func.func @_rab_kernel(%arg0: i32, %arg1: memref<1x16x256xf32, #tpu.memory_space<vmem>>, %arg2: memref<768x256xf32, #tpu.memory_space<vmem>>, %arg3: memref<1x256xf32, #tpu.memory_space<vmem>>, %arg4: memref<768x256xf32, #tpu.memory_space<vmem>>, %arg5: memref<1x256xf32, #tpu.memory_space<vmem>>, %arg6: memref<160x16xf32, #tpu.memory_space<vmem>>, %arg7: memref<256x16xf32, #tpu.memory_space<vmem>>, %arg8: memref<256x16xf32, #tpu.memory_space<vmem>>, %arg9: memref<16x256xf32, #tpu.memory_space<vmem>>, %arg10: memref<1x16x256xf32, #tpu.memory_space<vmem>>) attributes {dimension_semantics = [#tpu.dimension_semantics<parallel>], iteration_bounds = array<i64: 2>, scalar_prefetch = 0 : i64, scratch_operands = 0 : i64, tpu.core_type = #tpu.core_type<tc>, window_params = [{transform_indices = @transform_0, window_bounds = array<i64: 1, 16, 256>}, {pipeline_mode = #tpu.pipeline_mode<synchronous>, transform_indices = @transform_1, window_bounds = array<i64: 768, 256>}, {pipeline_mode = #tpu.pipeline_mode<synchronous>, transform_indices = @transform_2, window_bounds = array<i64: 1, 256>}, {pipeline_mode = #tpu.pipeline_mode<synchronous>, transform_indices = @transform_3, window_bounds = array<i64: 768, 256>}, {pipeline_mode = #tpu.pipeline_mode<synchronous>, transform_indices = @transform_4, window_bounds = array<i64: 1, 256>}, {pipeline_mode = #tpu.pipeline_mode<synchronous>, transform_indices = @transform_5, window_bounds = array<i64: 160, 16>}, {pipeline_mode = #tpu.pipeline_mode<synchronous>, transform_indices = @transform_6, window_bounds = array<i64: 256, 16>}, {pipeline_mode = #tpu.pipeline_mode<synchronous>, transform_indices = @transform_7, window_bounds = array<i64: 256, 16>}, {pipeline_mode = #tpu.pipeline_mode<synchronous>, transform_indices = @transform_8, window_bounds = array<i64: 16, 256>}, {transform_indices = @transform_9, window_bounds = array<i64: 1, 16, 256>}]} {
    %c0 = arith.constant 0 : index
    %c0_0 = arith.constant 0 : index
    %c0_1 = arith.constant 0 : index
    %0 = vector.load %arg1[%c0, %c0_0, %c0_1] : memref<1x16x256xf32, #tpu.memory_space<vmem>>, vector<1x16x256xf32>
    %1 = vector.shape_cast %0 : vector<1x16x256xf32> to vector<16x256xf32>
    %cst = arith.constant 0.000000e+00 : f32
    %2 = vector.broadcast %cst : f32 to vector<1x256xf32>
    %3 = vector.extract_strided_slice %1 {offsets = [0, 0], sizes = [15, 256], strides = [1, 1]} : vector<16x256xf32> to vector<15x256xf32>
    %4 = tpu.concatenate %2, %3 in 0 : vector<1x256xf32>, vector<15x256xf32> -> vector<16x256xf32>
    %cst_2 = arith.constant 0.000000e+00 : f32
    %5 = vector.broadcast %cst_2 : f32 to vector<1x256xf32>
    %6 = vector.extract_strided_slice %1 {offsets = [1, 0], sizes = [15, 256], strides = [1, 1]} : vector<16x256xf32> to vector<15x256xf32>
    %7 = tpu.concatenate %6, %5 in 0 : vector<15x256xf32>, vector<1x256xf32> -> vector<16x256xf32>
    %8 = tpu.concatenate %4, %1, %7 in 1 : vector<16x256xf32>, vector<16x256xf32>, vector<16x256xf32> -> vector<16x768xf32>
    %c0_3 = arith.constant 0 : index
    %c0_4 = arith.constant 0 : index
    %9 = vector.load %arg2[%c0_3, %c0_4] : memref<768x256xf32, #tpu.memory_space<vmem>>, vector<768x256xf32>
    %cst_5 = arith.constant dense<0.000000e+00> : vector<16x256xf32>
    %10 = tpu.matmul %8, %9, %cst_5 {dimension_numbers = #tpu.dot_dimension_numbers<[1], [0], [0], [1], [0, 0, 1, 1], [], []>} : vector<16x768xf32>, vector<768x256xf32>, vector<16x256xf32> -> vector<16x256xf32>
    %c0_6 = arith.constant 0 : index
    %c0_7 = arith.constant 0 : index
    %11 = vector.load %arg3[%c0_6, %c0_7] : memref<1x256xf32, #tpu.memory_space<vmem>>, vector<1x256xf32>
    %12 = vector.broadcast %11 : vector<1x256xf32> to vector<16x256xf32>
    %13 = arith.addf %10, %12 : vector<16x256xf32>
    %cst_8 = arith.constant 0.000000e+00 : f32
    %14 = vector.broadcast %cst_8 : f32 to vector<16x256xf32>
    %15 = arith.maximumf %13, %14 : vector<16x256xf32>
    %cst_9 = arith.constant 0.000000e+00 : f32
    %16 = vector.broadcast %cst_9 : f32 to vector<1x256xf32>
    %17 = vector.extract_strided_slice %15 {offsets = [0, 0], sizes = [15, 256], strides = [1, 1]} : vector<16x256xf32> to vector<15x256xf32>
    %18 = tpu.concatenate %16, %17 in 0 : vector<1x256xf32>, vector<15x256xf32> -> vector<16x256xf32>
    %cst_10 = arith.constant 0.000000e+00 : f32
    %19 = vector.broadcast %cst_10 : f32 to vector<1x256xf32>
    %20 = vector.extract_strided_slice %15 {offsets = [1, 0], sizes = [15, 256], strides = [1, 1]} : vector<16x256xf32> to vector<15x256xf32>
    %21 = tpu.concatenate %20, %19 in 0 : vector<15x256xf32>, vector<1x256xf32> -> vector<16x256xf32>
    %22 = tpu.concatenate %18, %15, %21 in 1 : vector<16x256xf32>, vector<16x256xf32>, vector<16x256xf32> -> vector<16x768xf32>
    %c0_11 = arith.constant 0 : index
    %c0_12 = arith.constant 0 : index
    %23 = vector.load %arg4[%c0_11, %c0_12] : memref<768x256xf32, #tpu.memory_space<vmem>>, vector<768x256xf32>
    %cst_13 = arith.constant dense<0.000000e+00> : vector<16x256xf32>
    %24 = tpu.matmul %22, %23, %cst_13 {dimension_numbers = #tpu.dot_dimension_numbers<[1], [0], [0], [1], [0, 0, 1, 1], [], []>} : vector<16x768xf32>, vector<768x256xf32>, vector<16x256xf32> -> vector<16x256xf32>
    %c0_14 = arith.constant 0 : index
    %c0_15 = arith.constant 0 : index
    %25 = vector.load %arg5[%c0_14, %c0_15] : memref<1x256xf32, #tpu.memory_space<vmem>>, vector<1x256xf32>
    %26 = vector.broadcast %25 : vector<1x256xf32> to vector<16x256xf32>
    %27 = arith.addf %24, %26 : vector<16x256xf32>
    %28 = arith.addf %1, %27 : vector<16x256xf32>
    %cst_16 = arith.constant 0.000000e+00 : f32
    %29 = vector.broadcast %cst_16 : f32 to vector<1x256xf32>
    %30 = vector.extract_strided_slice %28 {offsets = [0, 0], sizes = [15, 256], strides = [1, 1]} : vector<16x256xf32> to vector<15x256xf32>
    %31 = tpu.concatenate %29, %30 in 0 : vector<1x256xf32>, vector<15x256xf32> -> vector<16x256xf32>
    %cst_17 = arith.constant 0.000000e+00 : f32
    %32 = vector.broadcast %cst_17 : f32 to vector<1x256xf32>
    %33 = vector.extract_strided_slice %28 {offsets = [1, 0], sizes = [15, 256], strides = [1, 1]} : vector<16x256xf32> to vector<15x256xf32>
    %34 = tpu.concatenate %33, %32 in 0 : vector<15x256xf32>, vector<1x256xf32> -> vector<16x256xf32>
    %35 = tpu.concatenate %31, %28, %34 in 1 : vector<16x256xf32>, vector<16x256xf32>, vector<16x256xf32> -> vector<16x768xf32>
    %c0_18 = arith.constant 0 : index
    %c0_19 = arith.constant 0 : index
    %36 = vector.load %arg2[%c0_18, %c0_19] : memref<768x256xf32, #tpu.memory_space<vmem>>, vector<768x256xf32>
    %cst_20 = arith.constant dense<0.000000e+00> : vector<16x256xf32>
    %37 = tpu.matmul %35, %36, %cst_20 {dimension_numbers = #tpu.dot_dimension_numbers<[1], [0], [0], [1], [0, 0, 1, 1], [], []>} : vector<16x768xf32>, vector<768x256xf32>, vector<16x256xf32> -> vector<16x256xf32>
    %c0_21 = arith.constant 0 : index
    %c0_22 = arith.constant 0 : index
    %38 = vector.load %arg3[%c0_21, %c0_22] : memref<1x256xf32, #tpu.memory_space<vmem>>, vector<1x256xf32>
    %39 = vector.broadcast %38 : vector<1x256xf32> to vector<16x256xf32>
    %40 = arith.addf %37, %39 : vector<16x256xf32>
    %cst_23 = arith.constant 0.000000e+00 : f32
    %41 = vector.broadcast %cst_23 : f32 to vector<16x256xf32>
    %42 = arith.maximumf %40, %41 : vector<16x256xf32>
    %cst_24 = arith.constant 0.000000e+00 : f32
    %43 = vector.broadcast %cst_24 : f32 to vector<1x256xf32>
    %44 = vector.extract_strided_slice %42 {offsets = [0, 0], sizes = [15, 256], strides = [1, 1]} : vector<16x256xf32> to vector<15x256xf32>
    %45 = tpu.concatenate %43, %44 in 0 : vector<1x256xf32>, vector<15x256xf32> -> vector<16x256xf32>
    %cst_25 = arith.constant 0.000000e+00 : f32
    %46 = vector.broadcast %cst_25 : f32 to vector<1x256xf32>
    %47 = vector.extract_strided_slice %42 {offsets = [1, 0], sizes = [15, 256], strides = [1, 1]} : vector<16x256xf32> to vector<15x256xf32>
    %48 = tpu.concatenate %47, %46 in 0 : vector<15x256xf32>, vector<1x256xf32> -> vector<16x256xf32>
    %49 = tpu.concatenate %45, %42, %48 in 1 : vector<16x256xf32>, vector<16x256xf32>, vector<16x256xf32> -> vector<16x768xf32>
    %c0_26 = arith.constant 0 : index
    %c0_27 = arith.constant 0 : index
    %50 = vector.load %arg4[%c0_26, %c0_27] : memref<768x256xf32, #tpu.memory_space<vmem>>, vector<768x256xf32>
    %cst_28 = arith.constant dense<0.000000e+00> : vector<16x256xf32>
    %51 = tpu.matmul %49, %50, %cst_28 {dimension_numbers = #tpu.dot_dimension_numbers<[1], [0], [0], [1], [0, 0, 1, 1], [], []>} : vector<16x768xf32>, vector<768x256xf32>, vector<16x256xf32> -> vector<16x256xf32>
    %c0_29 = arith.constant 0 : index
    %c0_30 = arith.constant 0 : index
    %52 = vector.load %arg5[%c0_29, %c0_30] : memref<1x256xf32, #tpu.memory_space<vmem>>, vector<1x256xf32>
    %53 = vector.broadcast %52 : vector<1x256xf32> to vector<16x256xf32>
    %54 = arith.addf %51, %53 : vector<16x256xf32>
    %55 = arith.addf %28, %54 : vector<16x256xf32>
    %cst_31 = arith.constant 0.000000e+00 : f32
    %56 = vector.broadcast %cst_31 : f32 to vector<1x256xf32>
    %57 = vector.extract_strided_slice %55 {offsets = [0, 0], sizes = [15, 256], strides = [1, 1]} : vector<16x256xf32> to vector<15x256xf32>
    %58 = tpu.concatenate %56, %57 in 0 : vector<1x256xf32>, vector<15x256xf32> -> vector<16x256xf32>
    %cst_32 = arith.constant 0.000000e+00 : f32
    %59 = vector.broadcast %cst_32 : f32 to vector<1x256xf32>
    %60 = vector.extract_strided_slice %55 {offsets = [1, 0], sizes = [15, 256], strides = [1, 1]} : vector<16x256xf32> to vector<15x256xf32>
    %61 = tpu.concatenate %60, %59 in 0 : vector<15x256xf32>, vector<1x256xf32> -> vector<16x256xf32>
    %62 = tpu.concatenate %58, %55, %61 in 1 : vector<16x256xf32>, vector<16x256xf32>, vector<16x256xf32> -> vector<16x768xf32>
    %c0_33 = arith.constant 0 : index
    %c0_34 = arith.constant 0 : index
    %63 = vector.load %arg2[%c0_33, %c0_34] : memref<768x256xf32, #tpu.memory_space<vmem>>, vector<768x256xf32>
    %cst_35 = arith.constant dense<0.000000e+00> : vector<16x256xf32>
    %64 = tpu.matmul %62, %63, %cst_35 {dimension_numbers = #tpu.dot_dimension_numbers<[1], [0], [0], [1], [0, 0, 1, 1], [], []>} : vector<16x768xf32>, vector<768x256xf32>, vector<16x256xf32> -> vector<16x256xf32>
    %c0_36 = arith.constant 0 : index
    %c0_37 = arith.constant 0 : index
    %65 = vector.load %arg3[%c0_36, %c0_37] : memref<1x256xf32, #tpu.memory_space<vmem>>, vector<1x256xf32>
    %66 = vector.broadcast %65 : vector<1x256xf32> to vector<16x256xf32>
    %67 = arith.addf %64, %66 : vector<16x256xf32>
    %cst_38 = arith.constant 0.000000e+00 : f32
    %68 = vector.broadcast %cst_38 : f32 to vector<16x256xf32>
    %69 = arith.maximumf %67, %68 : vector<16x256xf32>
    %cst_39 = arith.constant 0.000000e+00 : f32
    %70 = vector.broadcast %cst_39 : f32 to vector<1x256xf32>
    %71 = vector.extract_strided_slice %69 {offsets = [0, 0], sizes = [15, 256], strides = [1, 1]} : vector<16x256xf32> to vector<15x256xf32>
    %72 = tpu.concatenate %70, %71 in 0 : vector<1x256xf32>, vector<15x256xf32> -> vector<16x256xf32>
    %cst_40 = arith.constant 0.000000e+00 : f32
    %73 = vector.broadcast %cst_40 : f32 to vector<1x256xf32>
    %74 = vector.extract_strided_slice %69 {offsets = [1, 0], sizes = [15, 256], strides = [1, 1]} : vector<16x256xf32> to vector<15x256xf32>
    %75 = tpu.concatenate %74, %73 in 0 : vector<15x256xf32>, vector<1x256xf32> -> vector<16x256xf32>
    %76 = tpu.concatenate %72, %69, %75 in 1 : vector<16x256xf32>, vector<16x256xf32>, vector<16x256xf32> -> vector<16x768xf32>
    %c0_41 = arith.constant 0 : index
    %c0_42 = arith.constant 0 : index
    %77 = vector.load %arg4[%c0_41, %c0_42] : memref<768x256xf32, #tpu.memory_space<vmem>>, vector<768x256xf32>
    %cst_43 = arith.constant dense<0.000000e+00> : vector<16x256xf32>
    %78 = tpu.matmul %76, %77, %cst_43 {dimension_numbers = #tpu.dot_dimension_numbers<[1], [0], [0], [1], [0, 0, 1, 1], [], []>} : vector<16x768xf32>, vector<768x256xf32>, vector<16x256xf32> -> vector<16x256xf32>
    %c0_44 = arith.constant 0 : index
    %c0_45 = arith.constant 0 : index
    %79 = vector.load %arg5[%c0_44, %c0_45] : memref<1x256xf32, #tpu.memory_space<vmem>>, vector<1x256xf32>
    %80 = vector.broadcast %79 : vector<1x256xf32> to vector<16x256xf32>
    %81 = arith.addf %78, %80 : vector<16x256xf32>
    %82 = arith.addf %55, %81 : vector<16x256xf32>
    %83 = arith.addf %28, %82 : vector<16x256xf32>
    %cst_46 = arith.constant 0.000000e+00 : f32
    %84 = vector.broadcast %cst_46 : f32 to vector<1x256xf32>
    %85 = vector.extract_strided_slice %83 {offsets = [0, 0], sizes = [15, 256], strides = [1, 1]} : vector<16x256xf32> to vector<15x256xf32>
    %86 = tpu.concatenate %84, %85 in 0 : vector<1x256xf32>, vector<15x256xf32> -> vector<16x256xf32>
    %cst_47 = arith.constant 0.000000e+00 : f32
    %87 = vector.broadcast %cst_47 : f32 to vector<1x256xf32>
    %88 = vector.extract_strided_slice %83 {offsets = [1, 0], sizes = [15, 256], strides = [1, 1]} : vector<16x256xf32> to vector<15x256xf32>
    %89 = tpu.concatenate %88, %87 in 0 : vector<15x256xf32>, vector<1x256xf32> -> vector<16x256xf32>
    %90 = tpu.concatenate %86, %83, %89 in 1 : vector<16x256xf32>, vector<16x256xf32>, vector<16x256xf32> -> vector<16x768xf32>
    %c0_48 = arith.constant 0 : index
    %c0_49 = arith.constant 0 : index
    %91 = vector.load %arg2[%c0_48, %c0_49] : memref<768x256xf32, #tpu.memory_space<vmem>>, vector<768x256xf32>
    %cst_50 = arith.constant dense<0.000000e+00> : vector<16x256xf32>
    %92 = tpu.matmul %90, %91, %cst_50 {dimension_numbers = #tpu.dot_dimension_numbers<[1], [0], [0], [1], [0, 0, 1, 1], [], []>} : vector<16x768xf32>, vector<768x256xf32>, vector<16x256xf32> -> vector<16x256xf32>
    %c0_51 = arith.constant 0 : index
    %c0_52 = arith.constant 0 : index
    %93 = vector.load %arg3[%c0_51, %c0_52] : memref<1x256xf32, #tpu.memory_space<vmem>>, vector<1x256xf32>
    %94 = vector.broadcast %93 : vector<1x256xf32> to vector<16x256xf32>
    %95 = arith.addf %92, %94 : vector<16x256xf32>
    %cst_53 = arith.constant 0.000000e+00 : f32
    %96 = vector.broadcast %cst_53 : f32 to vector<16x256xf32>
    %97 = arith.maximumf %95, %96 : vector<16x256xf32>
    %cst_54 = arith.constant 0.000000e+00 : f32
    %98 = vector.broadcast %cst_54 : f32 to vector<1x256xf32>
    %99 = vector.extract_strided_slice %97 {offsets = [0, 0], sizes = [15, 256], strides = [1, 1]} : vector<16x256xf32> to vector<15x256xf32>
    %100 = tpu.concatenate %98, %99 in 0 : vector<1x256xf32>, vector<15x256xf32> -> vector<16x256xf32>
    %cst_55 = arith.constant 0.000000e+00 : f32
    %101 = vector.broadcast %cst_55 : f32 to vector<1x256xf32>
    %102 = vector.extract_strided_slice %97 {offsets = [1, 0], sizes = [15, 256], strides = [1, 1]} : vector<16x256xf32> to vector<15x256xf32>
    %103 = tpu.concatenate %102, %101 in 0 : vector<15x256xf32>, vector<1x256xf32> -> vector<16x256xf32>
    %104 = tpu.concatenate %100, %97, %103 in 1 : vector<16x256xf32>, vector<16x256xf32>, vector<16x256xf32> -> vector<16x768xf32>
    %c0_56 = arith.constant 0 : index
    %c0_57 = arith.constant 0 : index
    %105 = vector.load %arg4[%c0_56, %c0_57] : memref<768x256xf32, #tpu.memory_space<vmem>>, vector<768x256xf32>
    %cst_58 = arith.constant dense<0.000000e+00> : vector<16x256xf32>
    %106 = tpu.matmul %104, %105, %cst_58 {dimension_numbers = #tpu.dot_dimension_numbers<[1], [0], [0], [1], [0, 0, 1, 1], [], []>} : vector<16x768xf32>, vector<768x256xf32>, vector<16x256xf32> -> vector<16x256xf32>
    %c0_59 = arith.constant 0 : index
    %c0_60 = arith.constant 0 : index
    %107 = vector.load %arg5[%c0_59, %c0_60] : memref<1x256xf32, #tpu.memory_space<vmem>>, vector<1x256xf32>
    %108 = vector.broadcast %107 : vector<1x256xf32> to vector<16x256xf32>
    %109 = arith.addf %106, %108 : vector<16x256xf32>
    %110 = arith.addf %83, %109 : vector<16x256xf32>
    %111 = arith.addf %1, %110 : vector<16x256xf32>
    %112 = vector.extract_strided_slice %111 {offsets = [0, 8], sizes = [16, 248], strides = [1, 1]} : vector<16x256xf32> to vector<16x248xf32>
    %113 = vector.extract_strided_slice %111 {offsets = [0, 0], sizes = [16, 8], strides = [1, 1]} : vector<16x256xf32> to vector<16x8xf32>
    %114 = tpu.concatenate %112, %113 in 1 : vector<16x248xf32>, vector<16x8xf32> -> vector<16x256xf32>
    %115 = arith.maximumf %111, %114 : vector<16x256xf32>
    %116 = vector.extract_strided_slice %115 {offsets = [0, 4], sizes = [16, 252], strides = [1, 1]} : vector<16x256xf32> to vector<16x252xf32>
    %117 = vector.extract_strided_slice %115 {offsets = [0, 0], sizes = [16, 4], strides = [1, 1]} : vector<16x256xf32> to vector<16x4xf32>
    %118 = tpu.concatenate %116, %117 in 1 : vector<16x252xf32>, vector<16x4xf32> -> vector<16x256xf32>
    %119 = arith.maximumf %115, %118 : vector<16x256xf32>
    %120 = vector.extract_strided_slice %119 {offsets = [0, 2], sizes = [16, 254], strides = [1, 1]} : vector<16x256xf32> to vector<16x254xf32>
    %121 = vector.extract_strided_slice %119 {offsets = [0, 0], sizes = [16, 2], strides = [1, 1]} : vector<16x256xf32> to vector<16x2xf32>
    %122 = tpu.concatenate %120, %121 in 1 : vector<16x254xf32>, vector<16x2xf32> -> vector<16x256xf32>
    %123 = arith.maximumf %119, %122 : vector<16x256xf32>
    %124 = vector.extract_strided_slice %123 {offsets = [0, 1], sizes = [16, 255], strides = [1, 1]} : vector<16x256xf32> to vector<16x255xf32>
    %125 = vector.extract_strided_slice %123 {offsets = [0, 0], sizes = [16, 1], strides = [1, 1]} : vector<16x256xf32> to vector<16x1xf32>
    %126 = tpu.concatenate %124, %125 in 1 : vector<16x255xf32>, vector<16x1xf32> -> vector<16x256xf32>
    %127 = arith.maximumf %123, %126 : vector<16x256xf32>
    %c0_61 = arith.constant 0 : index
    %c0_62 = arith.constant 0 : index
    %128 = vector.load %arg7[%c0_61, %c0_62] : memref<256x16xf32, #tpu.memory_space<vmem>>, vector<256x16xf32>
    %cst_63 = arith.constant dense<0.000000e+00> : vector<16x16xf32>
    %129 = tpu.matmul %127, %128, %cst_63 {dimension_numbers = #tpu.dot_dimension_numbers<[1], [0], [0], [1], [0, 0, 1, 1], [], []>} : vector<16x256xf32>, vector<256x16xf32>, vector<16x16xf32> -> vector<16x16xf32>
    %c0_64 = arith.constant 0 : index
    %c0_65 = arith.constant 0 : index
    %130 = vector.load %arg8[%c0_64, %c0_65] : memref<256x16xf32, #tpu.memory_space<vmem>>, vector<256x16xf32>
    %cst_66 = arith.constant dense<0.000000e+00> : vector<16x16xf32>
    %131 = tpu.matmul %111, %130, %cst_66 {dimension_numbers = #tpu.dot_dimension_numbers<[1], [0], [0], [1], [0, 0, 1, 1], [], []>} : vector<16x256xf32>, vector<256x16xf32>, vector<16x16xf32> -> vector<16x16xf32>
    %cst_67 = arith.constant 0.000000e+00 : f32
    %132 = vector.broadcast %cst_67 : f32 to vector<2x16xf32>
    %133 = vector.extract_strided_slice %129 {offsets = [0, 0], sizes = [14, 16], strides = [1, 1]} : vector<16x16xf32> to vector<14x16xf32>
    %134 = tpu.concatenate %132, %133 in 0 : vector<2x16xf32>, vector<14x16xf32> -> vector<16x16xf32>
    %cst_68 = arith.constant 0.000000e+00 : f32
    %135 = vector.broadcast %cst_68 : f32 to vector<1x16xf32>
    %136 = vector.extract_strided_slice %129 {offsets = [0, 0], sizes = [15, 16], strides = [1, 1]} : vector<16x16xf32> to vector<15x16xf32>
    %137 = tpu.concatenate %135, %136 in 0 : vector<1x16xf32>, vector<15x16xf32> -> vector<16x16xf32>
    %cst_69 = arith.constant 0.000000e+00 : f32
    %138 = vector.broadcast %cst_69 : f32 to vector<1x16xf32>
    %139 = vector.extract_strided_slice %129 {offsets = [1, 0], sizes = [15, 16], strides = [1, 1]} : vector<16x16xf32> to vector<15x16xf32>
    %140 = tpu.concatenate %139, %138 in 0 : vector<15x16xf32>, vector<1x16xf32> -> vector<16x16xf32>
    %cst_70 = arith.constant 0.000000e+00 : f32
    %141 = vector.broadcast %cst_70 : f32 to vector<2x16xf32>
    %142 = vector.extract_strided_slice %129 {offsets = [2, 0], sizes = [14, 16], strides = [1, 1]} : vector<16x16xf32> to vector<14x16xf32>
    %143 = tpu.concatenate %142, %141 in 0 : vector<14x16xf32>, vector<2x16xf32> -> vector<16x16xf32>
    %cst_71 = arith.constant 0.000000e+00 : f32
    %144 = vector.broadcast %cst_71 : f32 to vector<2x16xf32>
    %145 = vector.extract_strided_slice %131 {offsets = [0, 0], sizes = [14, 16], strides = [1, 1]} : vector<16x16xf32> to vector<14x16xf32>
    %146 = tpu.concatenate %144, %145 in 0 : vector<2x16xf32>, vector<14x16xf32> -> vector<16x16xf32>
    %cst_72 = arith.constant 0.000000e+00 : f32
    %147 = vector.broadcast %cst_72 : f32 to vector<1x16xf32>
    %148 = vector.extract_strided_slice %131 {offsets = [0, 0], sizes = [15, 16], strides = [1, 1]} : vector<16x16xf32> to vector<15x16xf32>
    %149 = tpu.concatenate %147, %148 in 0 : vector<1x16xf32>, vector<15x16xf32> -> vector<16x16xf32>
    %cst_73 = arith.constant 0.000000e+00 : f32
    %150 = vector.broadcast %cst_73 : f32 to vector<1x16xf32>
    %151 = vector.extract_strided_slice %131 {offsets = [1, 0], sizes = [15, 16], strides = [1, 1]} : vector<16x16xf32> to vector<15x16xf32>
    %152 = tpu.concatenate %151, %150 in 0 : vector<15x16xf32>, vector<1x16xf32> -> vector<16x16xf32>
    %cst_74 = arith.constant 0.000000e+00 : f32
    %153 = vector.broadcast %cst_74 : f32 to vector<2x16xf32>
    %154 = vector.extract_strided_slice %131 {offsets = [2, 0], sizes = [14, 16], strides = [1, 1]} : vector<16x16xf32> to vector<14x16xf32>
    %155 = tpu.concatenate %154, %153 in 0 : vector<14x16xf32>, vector<2x16xf32> -> vector<16x16xf32>
    %156 = tpu.concatenate %134, %137, %129, %140, %143, %146, %149, %131, %152, %155 in 1 : vector<16x16xf32>, vector<16x16xf32>, vector<16x16xf32>, vector<16x16xf32>, vector<16x16xf32>, vector<16x16xf32>, vector<16x16xf32>, vector<16x16xf32>, vector<16x16xf32>, vector<16x16xf32> -> vector<16x160xf32>
    %c0_75 = arith.constant 0 : index
    %c0_76 = arith.constant 0 : index
    %157 = vector.load %arg6[%c0_75, %c0_76] : memref<160x16xf32, #tpu.memory_space<vmem>>, vector<160x16xf32>
    %cst_77 = arith.constant dense<0.000000e+00> : vector<16x16xf32>
    %158 = tpu.matmul %156, %157, %cst_77 {dimension_numbers = #tpu.dot_dimension_numbers<[1], [0], [0], [1], [0, 0, 1, 1], [], []>} : vector<16x160xf32>, vector<160x16xf32>, vector<16x16xf32> -> vector<16x16xf32>
    %cst_78 = arith.constant 0.000000e+00 : f32
    %159 = vector.broadcast %cst_78 : f32 to vector<16x16xf32>
    %160 = arith.maximumf %158, %159 : vector<16x16xf32>
    %cst_79 = arith.constant 0.000000e+00 : f32
    %161 = vector.broadcast %cst_79 : f32 to vector<16x16xf32>
    %162 = arith.subf %161, %160 : vector<16x16xf32>
    %163 = math.exp %162 : vector<16x16xf32>
    %cst_80 = arith.constant 1.000000e+00 : f32
    %164 = vector.broadcast %cst_80 : f32 to vector<16x16xf32>
    %165 = arith.addf %164, %163 : vector<16x16xf32>
    %cst_81 = arith.constant 1.000000e+00 : f32
    %166 = vector.broadcast %cst_81 : f32 to vector<16x16xf32>
    %167 = arith.divf %166, %165 : vector<16x16xf32>
    %c0_82 = arith.constant 0 : index
    %c0_83 = arith.constant 0 : index
    %168 = vector.load %arg9[%c0_82, %c0_83] : memref<16x256xf32, #tpu.memory_space<vmem>>, vector<16x256xf32>
    %cst_84 = arith.constant dense<0.000000e+00> : vector<16x256xf32>
    %169 = tpu.matmul %167, %168, %cst_84 {dimension_numbers = #tpu.dot_dimension_numbers<[1], [0], [0], [1], [0, 0, 1, 1], [], []>} : vector<16x16xf32>, vector<16x256xf32>, vector<16x256xf32> -> vector<16x256xf32>
    %170 = arith.mulf %111, %169 : vector<16x256xf32>
    %171 = arith.addf %1, %170 : vector<16x256xf32>
    %172 = vector.shape_cast %171 : vector<16x256xf32> to vector<1x16x256xf32>
    %c0_85 = arith.constant 0 : index
    %c0_86 = arith.constant 0 : index
    %c0_87 = arith.constant 0 : index
    %173 = vector.load %arg10[%c0_85, %c0_86, %c0_87] : memref<1x16x256xf32, #tpu.memory_space<vmem>>, vector<1x16x256xf32>
    tpu.vector_store %arg10[%c0_85, %c0_86, %c0_87], %172 {strides = array<i32>} : memref<1x16x256xf32, #tpu.memory_space<vmem>>, vector<1x16x256xf32>,
    return
  }
  func.func @transform_0(%arg0: i32) -> (i32, i32, i32) {
    %c0_i32 = arith.constant 0 : i32
    %c0_i32_0 = arith.constant 0 : i32
    %c0_i32_1 = arith.constant 0 : i32
    return %arg0, %c0_i32, %c0_i32_0 : i32, i32, i32
  }
  func.func @transform_1(%arg0: i32) -> (i32, i32) {
    %c0_i32 = arith.constant 0 : i32
    %c0_i32_0 = arith.constant 0 : i32
    %c0_i32_1 = arith.constant 0 : i32
    return %c0_i32, %c0_i32_0 : i32, i32
  }
  func.func @transform_2(%arg0: i32) -> (i32, i32) {
    %c0_i32 = arith.constant 0 : i32
    %c0_i32_0 = arith.constant 0 : i32
    %c0_i32_1 = arith.constant 0 : i32
    return %c0_i32, %c0_i32_0 : i32, i32
  }
  func.func @transform_3(%arg0: i32) -> (i32, i32) {
    %c0_i32 = arith.constant 0 : i32
    %c0_i32_0 = arith.constant 0 : i32
    %c0_i32_1 = arith.constant 0 : i32
    return %c0_i32, %c0_i32_0 : i32, i32
  }
  func.func @transform_4(%arg0: i32) -> (i32, i32) {
    %c0_i32 = arith.constant 0 : i32
    %c0_i32_0 = arith.constant 0 : i32
    %c0_i32_1 = arith.constant 0 : i32
    return %c0_i32, %c0_i32_0 : i32, i32
  }
  func.func @transform_5(%arg0: i32) -> (i32, i32) {
    %c0_i32 = arith.constant 0 : i32
    %c0_i32_0 = arith.constant 0 : i32
    %c0_i32_1 = arith.constant 0 : i32
    return %c0_i32, %c0_i32_0 : i32, i32
  }
  func.func @transform_6(%arg0: i32) -> (i32, i32) {
    %c0_i32 = arith.constant 0 : i32
    %c0_i32_0 = arith.constant 0 : i32
    %c0_i32_1 = arith.constant 0 : i32
    return %c0_i32, %c0_i32_0 : i32, i32
  }
  func.func @transform_7(%arg0: i32) -> (i32, i32) {
    %c0_i32 = arith.constant 0 : i32
    %c0_i32_0 = arith.constant 0 : i32
    %c0_i32_1 = arith.constant 0 : i32
    return %c0_i32, %c0_i32_0 : i32, i32
  }
  func.func @transform_8(%arg0: i32) -> (i32, i32) {
    %c0_i32 = arith.constant 0 : i32
    %c0_i32_0 = arith.constant 0 : i32
    %c0_i32_1 = arith.constant 0 : i32
    return %c0_i32, %c0_i32_0 : i32, i32
  }
  func.func @transform_9(%arg0: i32) -> (i32, i32, i32) {
    %c0_i32 = arith.constant 0 : i32
    %c0_i32_0 = arith.constant 0 : i32
    %c0_i32_1 = arith.constant 0 : i32
    return %arg0, %c0_i32, %c0_i32_0 : i32, i32, i32
  }
}

</mosaic_0001>

<llo_original>
// kernel: tile.13
$region0: #{tile.13}
  #allocation0 [shape = 's32[1]{0}', space=sflag, size = 0x4, scoped, tag = 'scoped memory for tile.13']
  %s0 = inlined_call_operand.vmem [shape: f32[16], index: 0, kind: input, shape index: {}]
  %s1 = inlined_call_operand.vmem [shape: f32[16,16], index: 1, kind: output, shape index: {}]
  // Predicated region
  $region2: #{tile.13} parent=0 // pred_check
    _
  $region3: #{tile.13} parent=0 // pred_check_branch
    %3 = sbr.rel (0) target = $region5
  $region4: #{tile.13} parent=0 // pred_region
    _
  $region5: #{tile.13} parent=0 // pred_fallthru
    _
  %v4 = vld [vmem:[%s0] ss:$0 sm:$0xff]
  %5 = vst [vmem:[%s1] sm:$0xff] %v4
  %s6 = scalar_lea.vmem %s1, 8
  %7 = vst [vmem:[%s6] sm:$0xff] %v4

// kernel: tile.14
$region0: #{tile.14}
  %s0 = inlined_call_operand.vmem [shape: f32[16,16], index: 0, kind: input, shape index: {}]
  %s1 = inlined_call_operand.vmem [shape: f32[1,256], index: 1, kind: output, shape index: {}]
  $region1: #{tile.14} parent=0
    #allocation0 [shape = 'u8[8192]{0}', space=vmem, size = 0x2000, scoped, tag = 'scoped mem for output reshape']
    %s2 = smov 3
    %v3 = vld [vmem:[%s0] ss:$8 sm:%s2]
    %vm4 = vcmask 130048
    %5 = vst.msk [vmem:[#allocation0] ss:$8 sm:$0x3] %vm4, %v3
    %s6 = scalar_lea.vmem %s0, 7
    %s7 = smov 3
    %v8 = vld [vmem:[%s6] ss:$8 sm:%s7]
    %9 = vrot.lane.b32.xlu0 %v8, 112
    %v10 = vpop.permute.xlu0 %9
    %vm11 = vcmask 1048448
    %12 = vst.msk [vmem:[#allocation0] ss:$8 sm:$0x3] %vm11, %v10
    %s13 = scalar_lea.vmem %s0, 6
    %s14 = smov 3
    %v15 = vld [vmem:[%s13] ss:$8 sm:%s14]
    %16 = vrot.lane.b32.xlu0 %v15, 96
    %v17 = vpop.permute.xlu0 %16
    %vm18 = vcmask 917248
    %19 = vst.msk [vmem:[#allocation0] ss:$8 sm:$0x3] %vm18, %v17
    %s20 = scalar_lea.vmem %s0, 5
    %s21 = smov 3
    %v22 = vld [vmem:[%s20] ss:$8 sm:%s21]
    %23 = vrot.lane.b32.xlu0 %v22, 80
    %v24 = vpop.permute.xlu0 %23
    %vm25 = vcmask 786048
    %26 = vst.msk [vmem:[#allocation0] ss:$8 sm:$0x3] %vm25, %v24
    %s27 = scalar_lea.vmem %s0, 4
    %s28 = smov 3
    %v29 = vld [vmem:[%s27] ss:$8 sm:%s28]
    %30 = vrot.lane.b32.xlu0 %v29, 64
    %v31 = vpop.permute.xlu0 %30
    %vm32 = vcmask 654848
    %33 = vst.msk [vmem:[#allocation0] ss:$8 sm:$0x3] %vm32, %v31
    %s34 = scalar_lea.vmem %s0, 3
    %s35 = smov 3
    %v36 = vld [vmem:[%s34] ss:$8 sm:%s35]
    %37 = vrot.lane.b32.xlu0 %v36, 48
    %v38 = vpop.permute.xlu0 %37
    %vm39 = vcmask 523648
    %40 = vst.msk [vmem:[#allocation0] ss:$8 sm:$0x3] %vm39, %v38
    %s41 = scalar_lea.vmem %s0, 2
    %s42 = smov 3
    %v43 = vld [vmem:[%s41] ss:$8 sm:%s42]
    %44 = vrot.lane.b32.xlu0 %v43, 32
    %v45 = vpop.permute.xlu0 %44
    %vm46 = vcmask 392448
    %47 = vst.msk [vmem:[#allocation0] ss:$8 sm:$0x3] %vm46, %v45
    %s48 = scalar_lea.vmem %s0, 1
    %s49 = smov 3
    %v50 = vld [vmem:[%s48] ss:$8 sm:%s49]
    %51 = vrot.lane.b32.xlu0 %v50, 16
    %v52 = vpop.permute.xlu0 %51
    %vm53 = vcmask 261248
    %54 = vst.msk [vmem:[#allocation0] ss:$8 sm:$0x3] %vm53, %v52
    %s56 = sshll.u32 1, 1
    %s57 = ssub.s32 %s56, 1
    %v59 = vld [vmem:[#allocation0] sm:%s57]
    %s60 = sshll.u32 1, 1
    %s61 = ssub.s32 %s60, 1
    %62 = vst [vmem:[%s1] sm:%s61] %v59
    %s63 = scalar_lea.vmem [#allocation0], 8
    %v64 = vld [vmem:[%s63] sm:%s57]
    %s65 = sshll.u32 1, 1
    %s66 = ssub.s32 %s65, 1
    %s67 = scalar_lea.vmem %s1, 1
    %68 = vst [vmem:[%s67] sm:%s66] %v64

// kernel: rab_forward.1
$region0: #{rab_forward.1}
  #allocation0 [shape = 'u32[]', space=smem, size = 0x4, offset = 0x4, fixed_abs, tag = 'smem constant byte address 0x4 - core index']
  #allocation1 [shape = 'u32[144,128]{1,0:T(1,128)}', space=vmem, size = 0x12000, scoped, tag = 'internal scratch']
  %s0 = inlined_call_operand.vmem [shape: f32[2,16,256], index: 0, kind: input, shape index: {}]
  %s1 = inlined_call_operand.vmem [shape: f32[768,256], index: 1, kind: input, shape index: {}]
  %s2 = inlined_call_operand.vmem [shape: f32[1,256], index: 2, kind: input, shape index: {}]
  %s3 = inlined_call_operand.vmem [shape: f32[768,256], index: 3, kind: input, shape index: {}]
  %s4 = inlined_call_operand.vmem [shape: f32[1,256], index: 4, kind: input, shape index: {}]
  %s5 = inlined_call_operand.vmem [shape: f32[160,16], index: 5, kind: input, shape index: {}]
  %s6 = inlined_call_operand.vmem [shape: f32[256,16], index: 6, kind: input, shape index: {}]
  %s7 = inlined_call_operand.vmem [shape: f32[256,16], index: 7, kind: input, shape index: {}]
  %s8 = inlined_call_operand.vmem [shape: f32[16,256], index: 8, kind: input, shape index: {}]
  %s9 = inlined_call_operand.vmem [shape: f32[2,16,256], index: 9, kind: output, shape index: {}]
  %s10 = sld [smem:[#allocation0]]
  $region69: #{rab_forward.1} parent=0
    _
  %s12 = ssub.s32 1, %s10
  %s13 = scalar_select 0, %s12, %s10
  loop: start=0, step=1, limit=4
  $region2: #{rab_forward.1} parent=0 // loop_pre_header
    _
  $region3: #{rab_forward.1} parent=0 // loop_header
    %s15 = sphi 0, %s19
    %p16 = scmp.ge.s32.totalorder %s15, 4
    %s25 = sphi 0, %s27
    %s28 = sphi 0, %s25
    %s29 = sphi 0, %s28
    %s45 = sphi 0, %s29
    %s49 = sphi 0, %s49
    %s51 = sphi 0, %s49
    %s52 = sphi 0, %s51
    %s66 = sphi 0, %s52
    %s70 = sphi 0, %s70
    %s72 = sphi 0, %s70
    %s73 = sphi 0, %s72
    %s87 = sphi 0, %s73
    %s91 = sphi 0, %s91
    %s93 = sphi 0, %s91
    %s94 = sphi 0, %s93
    %s108 = sphi 0, %s94
    %s112 = sphi 0, %s112
    %s114 = sphi 0, %s112
    %s115 = sphi 0, %s114
    %s129 = sphi 0, %s115
    %s133 = sphi 0, %s133
    %s135 = sphi 0, %s133
    %s136 = sphi 0, %s135
    %s150 = sphi 0, %s136
    %s154 = sphi 0, %s154
    %s156 = sphi 0, %s154
    %s157 = sphi 0, %s156
    %s171 = sphi 0, %s157
    %s175 = sphi 0, %s175
    %s177 = sphi 0, %s175
    %s178 = sphi 0, %s177
    %s192 = sphi 0, %s178
    %s196 = sphi 0, %s196
    %s198 = sphi 0, %s196
    %s199 = sphi 0, %s198
    %s213 = sphi 0, %s199
    %s219 = sphi 0, %s221
    %s222 = sphi 0, %s219
    %s223 = sphi 0, %s222
    %s239 = sphi 0, %s223
  $region4: #{rab_forward.1} parent=0 // loop_header_branch
    %18 = sbr.rel (%p16) target = $region8
  $region5: #{rab_forward.1} parent=0 // loop_body
    %s20 = ssub.s32 %s15, 1
    %s21 = ssub.s32 %s15, 2
    %s22 = sadd.s32 %s15, 1
    %s23 = ssub.s32 %s15, %s22
    %p24 = scmp.eq.s32.totalorder %s23, 0
    %s26 = sadd.s32 %s25, 1
    %s27 = scalar_select %p24, %s25, %s26
    %p30 = pneg %p24
    %p31 = scmp.eq.s32.totalorder %s15, 1
    %p32 = por %p30, %p31
    %p33 = scmp.ne.s32.totalorder %s25, %s28
    %p34 = scmp.eq.s32.totalorder %s15, 0
    %p35 = por %p33, %p34
    %p36 = scmp.ne.s32.totalorder %s25, %s28
    %p37 = scmp.eq.s32.totalorder %s20, 1
    %p38 = por %p36, %p37
    %p39 = scmp.ne.s32.totalorder %s28, %s29
    %p40 = scmp.eq.s32.totalorder %s20, 0
    %p41 = por %p39, %p40
    %p42 = scmp.ne.s32.totalorder %s28, %s29
    %p43 = scmp.eq.s32.totalorder %s21, 1
    %p44 = por %p42, %p43
    %p46 = scmp.ne.s32.totalorder %s29, %s45
    %p47 = scmp.eq.s32.totalorder %s21, 0
    %p48 = por %p46, %p47
    %s50 = sadd.s32 %s49, 1
    %p53 = scmp.eq.s32.totalorder %s15, 1
    %p54 = scmp.ne.s32.totalorder %s49, %s51
    %p55 = scmp.eq.s32.totalorder %s15, 0
    %p56 = por %p54, %p55
    %p57 = scmp.ne.s32.totalorder %s49, %s51
    %p58 = scmp.eq.s32.totalorder %s20, 1
    %p59 = por %p57, %p58
    %p60 = scmp.ne.s32.totalorder %s51, %s52
    %p61 = scmp.eq.s32.totalorder %s20, 0
    %p62 = por %p60, %p61
    %p63 = scmp.ne.s32.totalorder %s51, %s52
    %p64 = scmp.eq.s32.totalorder %s21, 1
    %p65 = por %p63, %p64
    %p67 = scmp.ne.s32.totalorder %s52, %s66
    %p68 = scmp.eq.s32.totalorder %s21, 0
    %p69 = por %p67, %p68
    %s71 = sadd.s32 %s70, 1
    %p74 = scmp.eq.s32.totalorder %s15, 1
    %p75 = scmp.ne.s32.totalorder %s70, %s72
    %p76 = scmp.eq.s32.totalorder %s15, 0
    %p77 = por %p75, %p76
    %p78 = scmp.ne.s32.totalorder %s70, %s72
    %p79 = scmp.eq.s32.totalorder %s20, 1
    %p80 = por %p78, %p79
    %p81 = scmp.ne.s32.totalorder %s72, %s73
    %p82 = scmp.eq.s32.totalorder %s20, 0
    %p83 = por %p81, %p82
    %p84 = scmp.ne.s32.totalorder %s72, %s73
    %p85 = scmp.eq.s32.totalorder %s21, 1
    %p86 = por %p84, %p85
    %p88 = scmp.ne.s32.totalorder %s73, %s87
    %p89 = scmp.eq.s32.totalorder %s21, 0
    %p90 = por %p88, %p89
    %s92 = sadd.s32 %s91, 1
    %p95 = scmp.eq.s32.totalorder %s15, 1
    %p96 = scmp.ne.s32.totalorder %s91, %s93
    %p97 = scmp.eq.s32.totalorder %s15, 0
    %p98 = por %p96, %p97
    %p99 = scmp.ne.s32.totalorder %s91, %s93
    %p100 = scmp.eq.s32.totalorder %s20, 1
    %p101 = por %p99, %p100
    %p102 = scmp.ne.s32.totalorder %s93, %s94
    %p103 = scmp.eq.s32.totalorder %s20, 0
    %p104 = por %p102, %p103
    %p105 = scmp.ne.s32.totalorder %s93, %s94
    %p106 = scmp.eq.s32.totalorder %s21, 1
    %p107 = por %p105, %p106
    %p109 = scmp.ne.s32.totalorder %s94, %s108
    %p110 = scmp.eq.s32.totalorder %s21, 0
    %p111 = por %p109, %p110
    %s113 = sadd.s32 %s112, 1
    %p116 = scmp.eq.s32.totalorder %s15, 1
    %p117 = scmp.ne.s32.totalorder %s112, %s114
    %p118 = scmp.eq.s32.totalorder %s15, 0
    %p119 = por %p117, %p118
    %p120 = scmp.ne.s32.totalorder %s112, %s114
    %p121 = scmp.eq.s32.totalorder %s20, 1
    %p122 = por %p120, %p121
    %p123 = scmp.ne.s32.totalorder %s114, %s115
    %p124 = scmp.eq.s32.totalorder %s20, 0
    %p125 = por %p123, %p124
    %p126 = scmp.ne.s32.totalorder %s114, %s115
    %p127 = scmp.eq.s32.totalorder %s21, 1
    %p128 = por %p126, %p127
    %p130 = scmp.ne.s32.totalorder %s115, %s129
    %p131 = scmp.eq.s32.totalorder %s21, 0
    %p132 = por %p130, %p131
    %s134 = sadd.s32 %s133, 1
    %p137 = scmp.eq.s32.totalorder %s15, 1
    %p138 = scmp.ne.s32.totalorder %s133, %s135
    %p139 = scmp.eq.s32.totalorder %s15, 0
    %p140 = por %p138, %p139
    %p141 = scmp.ne.s32.totalorder %s133, %s135
    %p142 = scmp.eq.s32.totalorder %s20, 1
    %p143 = por %p141, %p142
    %p144 = scmp.ne.s32.totalorder %s135, %s136
    %p145 = scmp.eq.s32.totalorder %s20, 0
    %p146 = por %p144, %p145
    %p147 = scmp.ne.s32.totalorder %s135, %s136
    %p148 = scmp.eq.s32.totalorder %s21, 1
    %p149 = por %p147, %p148
    %p151 = scmp.ne.s32.totalorder %s136, %s150
    %p152 = scmp.eq.s32.totalorder %s21, 0
    %p153 = por %p151, %p152
    %s155 = sadd.s32 %s154, 1
    %p158 = scmp.eq.s32.totalorder %s15, 1
    %p159 = scmp.ne.s32.totalorder %s154, %s156
    %p160 = scmp.eq.s32.totalorder %s15, 0
    %p161 = por %p159, %p160
    %p162 = scmp.ne.s32.totalorder %s154, %s156
    %p163 = scmp.eq.s32.totalorder %s20, 1
    %p164 = por %p162, %p163
    %p165 = scmp.ne.s32.totalorder %s156, %s157
    %p166 = scmp.eq.s32.totalorder %s20, 0
    %p167 = por %p165, %p166
    %p168 = scmp.ne.s32.totalorder %s156, %s157
    %p169 = scmp.eq.s32.totalorder %s21, 1
    %p170 = por %p168, %p169
    %p172 = scmp.ne.s32.totalorder %s157, %s171
    %p173 = scmp.eq.s32.totalorder %s21, 0
    %p174 = por %p172, %p173
    %s176 = sadd.s32 %s175, 1
    %p179 = scmp.eq.s32.totalorder %s15, 1
    %p180 = scmp.ne.s32.totalorder %s175, %s177
    %p181 = scmp.eq.s32.totalorder %s15, 0
    %p182 = por %p180, %p181
    %p183 = scmp.ne.s32.totalorder %s175, %s177
    %p184 = scmp.eq.s32.totalorder %s20, 1
    %p185 = por %p183, %p184
    %p186 = scmp.ne.s32.totalorder %s177, %s178
    %p187 = scmp.eq.s32.totalorder %s20, 0
    %p188 = por %p186, %p187
    %p189 = scmp.ne.s32.totalorder %s177, %s178
    %p190 = scmp.eq.s32.totalorder %s21, 1
    %p191 = por %p189, %p190
    %p193 = scmp.ne.s32.totalorder %s178, %s192
    %p194 = scmp.eq.s32.totalorder %s21, 0
    %p195 = por %p193, %p194
    %s197 = sadd.s32 %s196, 1
    %p200 = scmp.eq.s32.totalorder %s15, 1
    %p201 = scmp.ne.s32.totalorder %s196, %s198
    %p202 = scmp.eq.s32.totalorder %s15, 0
    %p203 = por %p201, %p202
    %p204 = scmp.ne.s32.totalorder %s196, %s198
    %p205 = scmp.eq.s32.totalorder %s20, 1
    %p206 = por %p204, %p205
    %p207 = scmp.ne.s32.totalorder %s198, %s199
    %p208 = scmp.eq.s32.totalorder %s20, 0
    %p209 = por %p207, %p208
    %p210 = scmp.ne.s32.totalorder %s198, %s199
    %p211 = scmp.eq.s32.totalorder %s21, 1
    %p212 = por %p210, %p211
    %p214 = scmp.ne.s32.totalorder %s199, %s213
    %p215 = scmp.eq.s32.totalorder %s21, 0
    %p216 = por %p214, %p215
    %s217 = ssub.s32 %s15, %s22
    %p218 = scmp.eq.s32.totalorder %s217, 0
    %s220 = sadd.s32 %s219, 1
    %s221 = scalar_select %p218, %s219, %s220
    %p224 = pneg %p218
    %p225 = scmp.eq.s32.totalorder %s15, 1
    %p226 = por %p224, %p225
    %p227 = scmp.ne.s32.totalorder %s219, %s222
    %p228 = scmp.eq.s32.totalorder %s15, 0
    %p229 = por %p227, %p228
    %p230 = scmp.ne.s32.totalorder %s219, %s222
    %p231 = scmp.eq.s32.totalorder %s20, 1
    %p232 = por %p230, %p231
    %p233 = scmp.ne.s32.totalorder %s222, %s223
    %p234 = scmp.eq.s32.totalorder %s20, 0
    %p235 = por %p233, %p234
    %p236 = scmp.ne.s32.totalorder %s222, %s223
    %p237 = scmp.eq.s32.totalorder %s21, 1
    %p238 = por %p236, %p237
    %p240 = scmp.ne.s32.totalorder %s223, %s239
    %p241 = scmp.eq.s32.totalorder %s21, 0
    %p242 = por %p240, %p241
    %p243 = scmp.le.s32.totalorder 1, %s15
    %p244 = scmp.lt.s32.totalorder %s15, 3
    %p245 = pnand %p243, %p244
    %p246 = pneg %p245
    // Predicated region
    $region9: #{rab_forward.1} parent=5 // pred_check
      _
    $region10: #{rab_forward.1} parent=5 // pred_check_branch
      %248 = sbr.rel (%p245) target = $region12
    $region11: #{rab_forward.1} parent=5 // pred_region
      %s249 = ssub.s32 %s15, 1
      // Predicated region
      $region13: #{rab_forward.1} parent=11 // pred_check
        %p250 = pneg %p62
      $region14: #{rab_forward.1} parent=11 // pred_check_branch
        %252 = sbr.rel (%p250) target = $region16
      $region15: #{rab_forward.1} parent=11 // pred_region
        _
      $region16: #{rab_forward.1} parent=11 // pred_fallthru
        _
      // Predicated region
      $region17: #{rab_forward.1} parent=11 // pred_check
        %p253 = pneg %p83
      $region18: #{rab_forward.1} parent=11 // pred_check_branch
        %255 = sbr.rel (%p253) target = $region20
      $region19: #{rab_forward.1} parent=11 // pred_region
        _
      $region20: #{rab_forward.1} parent=11 // pred_fallthru
        _
      // Predicated region
      $region21: #{rab_forward.1} parent=11 // pred_check
        %p256 = pneg %p104
      $region22: #{rab_forward.1} parent=11 // pred_check_branch
        %258 = sbr.rel (%p256) target = $region24
      $region23: #{rab_forward.1} parent=11 // pred_region
        _
      $region24: #{rab_forward.1} parent=11 // pred_fallthru
        _
      // Predicated region
      $region25: #{rab_forward.1} parent=11 // pred_check
        %p259 = pneg %p125
      $region26: #{rab_forward.1} parent=11 // pred_check_branch
        %261 = sbr.rel (%p259) target = $region28
      $region27: #{rab_forward.1} parent=11 // pred_region
        _
      $region28: #{rab_forward.1} parent=11 // pred_fallthru
        _
      // Predicated region
      $region29: #{rab_forward.1} parent=11 // pred_check
        %p262 = pneg %p146
      $region30: #{rab_forward.1} parent=11 // pred_check_branch
        %264 = sbr.rel (%p262) target = $region32
      $region31: #{rab_forward.1} parent=11 // pred_region
        _
      $region32: #{rab_forward.1} parent=11 // pred_fallthru
        _
      // Predicated region
      $region33: #{rab_forward.1} parent=11 // pred_check
        %p265 = pneg %p167
      $region34: #{rab_forward.1} parent=11 // pred_check_branch
        %267 = sbr.rel (%p265) target = $region36
      $region35: #{rab_forward.1} parent=11 // pred_region
        _
      $region36: #{rab_forward.1} parent=11 // pred_fallthru
        _
      // Predicated region
      $region37: #{rab_forward.1} parent=11 // pred_check
        %p268 = pneg %p188
      $region38: #{rab_forward.1} parent=11 // pred_check_branch
        %270 = sbr.rel (%p268) target = $region40
      $region39: #{rab_forward.1} parent=11 // pred_region
        _
      $region40: #{rab_forward.1} parent=11 // pred_fallthru
        _
      // Predicated region
      $region41: #{rab_forward.1} parent=11 // pred_check
        %p271 = pneg %p209
      $region42: #{rab_forward.1} parent=11 // pred_check_branch
        %273 = sbr.rel (%p271) target = $region44
      $region43: #{rab_forward.1} parent=11 // pred_region
        _
      $region44: #{rab_forward.1} parent=11 // pred_fallthru
        _
    $region12: #{rab_forward.1} parent=5 // pred_fallthru
      _
    %p274 = scmp.lt.s32.totalorder %s15, 2
    // Predicated region
    $region45: #{rab_forward.1} parent=5 // pred_check
      %p275 = pneg %p274
    $region46: #{rab_forward.1} parent=5 // pred_check_branch
      %277 = sbr.rel (%p275) target = $region48
    $region47: #{rab_forward.1} parent=5 // pred_region
      // Predicated region
      $region49: #{rab_forward.1} parent=47 // pred_check
        %p278 = pneg %p35
      $region50: #{rab_forward.1} parent=47 // pred_check_branch
        %280 = sbr.rel (%p278) target = $region52
      $region51: #{rab_forward.1} parent=47 // pred_region
        %p281 = scmp.lt.s32.totalorder %s15, 1
        %s282 = scalar_select %p281, %s15, 1
        %s283 = smul.addr %s282, 4
        %s284 = smul.addr %s283, 8
        %s285 = scalar_lea.vmem %s0, %s284
      $region52: #{rab_forward.1} parent=47 // pred_fallthru
        _
    $region48: #{rab_forward.1} parent=5 // pred_fallthru
      _
    %p286 = scmp.le.s32.totalorder 1, %s15
    %p287 = scmp.lt.s32.totalorder %s15, 3
    %p288 = pnand %p286, %p287
    %p289 = pneg %p288
    // Predicated region
    $region53: #{rab_forward.1} parent=5 // pred_check
      _
    $region54: #{rab_forward.1} parent=5 // pred_check_branch
      %291 = sbr.rel (%p288) target = $region56
    $region55: #{rab_forward.1} parent=5 // pred_region
      %s292 = ssub.s32 %s15, 1
      %p293 = scmp.lt.s32.totalorder %s20, 1
      %s294 = scalar_select %p293, %s20, 1
      %s295 = smul.addr %s294, 4
      %s296 = smul.addr %s295, 8
      %s297 = scalar_lea.vmem %s0, %s296
      %p298 = pneg %p41
      %p299 = pneg %p38
      %p300 = pneg %p62
      %p301 = pneg %p59
      %p302 = pneg %p83
      %p303 = pneg %p80
      %p304 = pneg %p104
      %p305 = pneg %p101
      %p306 = pneg %p125
      %p307 = pneg %p122
      %p308 = pneg %p146
      %p309 = pneg %p143
      %p310 = pneg %p167
      %p311 = pneg %p164
      %p312 = pneg %p188
      %p313 = pneg %p185
      %p314 = pneg %p209
      %p315 = pneg %p206
      %p316 = pneg %p235
      %p317 = pneg %p232
      %p318 = scmp.lt.s32.totalorder %s20, 1
      %s319 = scalar_select %p318, %s20, 1
      %s320 = smul.addr %s319, 4
      %s321 = smul.addr %s320, 8
      %s322 = scalar_lea.vmem %s9, %s321
      %p323 = scmp.lt.s32.totalorder %s20, 1
      %s324 = scalar_select %p323, %s20, 1
      %s325 = smul.addr %s324, 4
      %s326 = smul.addr %s325, 8
      %s327 = scalar_lea.vmem %s0, %s326
      %p328 = scmp.lt.s32.totalorder %s20, 1
      %s329 = scalar_select %p328, %s20, 1
      %s330 = smul.addr %s329, 4
      %s331 = smul.addr %s330, 8
      %s332 = scalar_lea.vmem %s9, %s331
      %v333 = vld [vmem:[%s327] sm:$0xff]
      %v334 = vld [vmem:[%s327 + $0x8] sm:$0xff]
      %v335 = vld [vmem:[%s327 + $0x10] sm:$0xff]
      %v336 = vld [vmem:[%s327 + $0x18] sm:$0xff]
      %vm341 = vcmask 1040384
      %v342 = vrot.slane %v333, 7
      %v343 = vrot.slane %v334, 7
      %v344 = vrot.slane %v335, 7
      %v345 = vsel %vm341, %v342, %v344
      %v346 = vrot.slane %v336, 7
      %v347 = vsel %vm341, %v343, %v346
      %v352 = vsel %vm341, 0.0, %v342
      %v353 = vsel %vm341, 0.0, %v343
      %vm354 = vcmask 1046528
      %v355 = vrot.slane %v333, 1
      %v356 = vrot.slane %v335, 1
      %v357 = vsel %vm354, %v355, %v356
      %v358 = vrot.slane %v334, 1
      %v359 = vrot.slane %v336, 1
      %v360 = vsel %vm354, %v358, %v359
      %v365 = vsel %vm354, %v356, 0.0
      %v366 = vsel %vm354, %v359, 0.0
      %v367 = vld [vmem:[%s1] sm:$0xff]
      %v368 = vld [vmem:[%s1 + $0x8] sm:$0xff]
      %v369 = vld [vmem:[%s1 + $0x10] sm:$0xff]
      %v370 = vld [vmem:[%s1 + $0x18] sm:$0xff]
      %v371 = vld [vmem:[%s1 + $0x20] sm:$0xff]
      %v372 = vld [vmem:[%s1 + $0x28] sm:$0xff]
      %v373 = vld [vmem:[%s1 + $0x30] sm:$0xff]
      %v374 = vld [vmem:[%s1 + $0x38] sm:$0xff]
      %v375 = vld [vmem:[%s1 + $0x40] sm:$0xff]
      %v376 = vld [vmem:[%s1 + $0x48] sm:$0xff]
      %v377 = vld [vmem:[%s1 + $0x50] sm:$0xff]
      %v378 = vld [vmem:[%s1 + $0x58] sm:$0xff]
      %v379 = vld [vmem:[%s1 + $0x60] sm:$0xff]
      %v380 = vld [vmem:[%s1 + $0x68] sm:$0xff]
      %v381 = vld [vmem:[%s1 + $0x70] sm:$0xff]
      %v382 = vld [vmem:[%s1 + $0x78] sm:$0xff]
      %v383 = vld [vmem:[%s1 + $0x80] sm:$0xff]
      %v384 = vld [vmem:[%s1 + $0x88] sm:$0xff]
      %v385 = vld [vmem:[%s1 + $0x90] sm:$0xff]
      %v386 = vld [vmem:[%s1 + $0x98] sm:$0xff]
      %v387 = vld [vmem:[%s1 + $0xa0] sm:$0xff]
      %v388 = vld [vmem:[%s1 + $0xa8] sm:$0xff]
      %v389 = vld [vmem:[%s1 + $0xb0] sm:$0xff]
      %v390 = vld [vmem:[%s1 + $0xb8] sm:$0xff]
      %v391 = vld [vmem:[%s1 + $0xc0] sm:$0xff]
      %v392 = vld [vmem:[%s1 + $0xc8] sm:$0xff]
      %v393 = vld [vmem:[%s1 + $0xd0] sm:$0xff]
      %v394 = vld [vmem:[%s1 + $0xd8] sm:$0xff]
      %v395 = vld [vmem:[%s1 + $0xe0] sm:$0xff]
      %v396 = vld [vmem:[%s1 + $0xe8] sm:$0xff]
      %v397 = vld [vmem:[%s1 + $0xf0] sm:$0xff]
      %v398 = vld [vmem:[%s1 + $0xf8] sm:$0xff]
      %v399 = vld [vmem:[%s1 + $0x100] sm:$0xff]
      %v400 = vld [vmem:[%s1 + $0x108] sm:$0xff]
      %v401 = vld [vmem:[%s1 + $0x110] sm:$0xff]
      %v402 = vld [vmem:[%s1 + $0x118] sm:$0xff]
      %v403 = vld [vmem:[%s1 + $0x120] sm:$0xff]
      %v404 = vld [vmem:[%s1 + $0x128] sm:$0xff]
      %v405 = vld [vmem:[%s1 + $0x130] sm:$0xff]
      %v406 = vld [vmem:[%s1 + $0x138] sm:$0xff]
      %v407 = vld [vmem:[%s1 + $0x140] sm:$0xff]
      %v408 = vld [vmem:[%s1 + $0x148] sm:$0xff]
      %v409 = vld [vmem:[%s1 + $0x150] sm:$0xff]
      %v410 = vld [vmem:[%s1 + $0x158] sm:$0xff]
      %v411 = vld [vmem:[%s1 + $0x160] sm:$0xff]
      %v412 = vld [vmem:[%s1 + $0x168] sm:$0xff]
      %v413 = vld [vmem:[%s1 + $0x170] sm:$0xff]
      %v414 = vld [vmem:[%s1 + $0x178] sm:$0xff]
      %v415 = vld [vmem:[%s1 + $0x180] sm:$0xff]
      %v416 = vld [vmem:[%s1 + $0x188] sm:$0xff]
      %v417 = vld [vmem:[%s1 + $0x190] sm:$0xff]
      %v418 = vld [vmem:[%s1 + $0x198] sm:$0xff]
      %v419 = vld [vmem:[%s1 + $0x1a0] sm:$0xff]
      %v420 = vld [vmem:[%s1 + $0x1a8] sm:$0xff]
      %v421 = vld [vmem:[%s1 + $0x1b0] sm:$0xff]
      %v422 = vld [vmem:[%s1 + $0x1b8] sm:$0xff]
      %v423 = vld [vmem:[%s1 + $0x1c0] sm:$0xff]
      %v424 = vld [vmem:[%s1 + $0x1c8] sm:$0xff]
      %v425 = vld [vmem:[%s1 + $0x1d0] sm:$0xff]
      %v426 = vld [vmem:[%s1 + $0x1d8] sm:$0xff]
      %v427 = vld [vmem:[%s1 + $0x1e0] sm:$0xff]
      %v428 = vld [vmem:[%s1 + $0x1e8] sm:$0xff]
      %v429 = vld [vmem:[%s1 + $0x1f0] sm:$0xff]
      %v430 = vld [vmem:[%s1 + $0x1f8] sm:$0xff]
      %v431 = vld [vmem:[%s1 + $0x200] sm:$0xff]
      %v432 = vld [vmem:[%s1 + $0x208] sm:$0xff]
      %v433 = vld [vmem:[%s1 + $0x210] sm:$0xff]
      %v434 = vld [vmem:[%s1 + $0x218] sm:$0xff]
      %v435 = vld [vmem:[%s1 + $0x220] sm:$0xff]
      %v436 = vld [vmem:[%s1 + $0x228] sm:$0xff]
      %v437 = vld [vmem:[%s1 + $0x230] sm:$0xff]
      %v438 = vld [vmem:[%s1 + $0x238] sm:$0xff]
      %v439 = vld [vmem:[%s1 + $0x240] sm:$0xff]
      %v440 = vld [vmem:[%s1 + $0x248] sm:$0xff]
      %v441 = vld [vmem:[%s1 + $0x250] sm:$0xff]
      %v442 = vld [vmem:[%s1 + $0x258] sm:$0xff]
      %v443 = vld [vmem:[%s1 + $0x260] sm:$0xff]
      %v444 = vld [vmem:[%s1 + $0x268] sm:$0xff]
      %v445 = vld [vmem:[%s1 + $0x270] sm:$0xff]
      %v446 = vld [vmem:[%s1 + $0x278] sm:$0xff]
      %v447 = vld [vmem:[%s1 + $0x280] sm:$0xff]
      %v448 = vld [vmem:[%s1 + $0x288] sm:$0xff]
      %v449 = vld [vmem:[%s1 + $0x290] sm:$0xff]
      %v450 = vld [vmem:[%s1 + $0x298] sm:$0xff]
      %v451 = vld [vmem:[%s1 + $0x2a0] sm:$0xff]
      %v452 = vld [vmem:[%s1 + $0x2a8] sm:$0xff]
      %v453 = vld [vmem:[%s1 + $0x2b0] sm:$0xff]
      %v454 = vld [vmem:[%s1 + $0x2b8] sm:$0xff]
      %v455 = vld [vmem:[%s1 + $0x2c0] sm:$0xff]
      %v456 = vld [vmem:[%s1 + $0x2c8] sm:$0xff]
      %v457 = vld [vmem:[%s1 + $0x2d0] sm:$0xff]
      %v458 = vld [vmem:[%s1 + $0x2d8] sm:$0xff]
      %v459 = vld [vmem:[%s1 + $0x2e0] sm:$0xff]
      %v460 = vld [vmem:[%s1 + $0x2e8] sm:$0xff]
      %v461 = vld [vmem:[%s1 + $0x2f0] sm:$0xff]
      %v462 = vld [vmem:[%s1 + $0x2f8] sm:$0xff]
      %v463 = vld [vmem:[%s1 + $0x300] sm:$0xff]
      %v464 = vld [vmem:[%s1 + $0x308] sm:$0xff]
      %v465 = vld [vmem:[%s1 + $0x310] sm:$0xff]
      %v466 = vld [vmem:[%s1 + $0x318] sm:$0xff]
      %v467 = vld [vmem:[%s1 + $0x320] sm:$0xff]
      %v468 = vld [vmem:[%s1 + $0x328] sm:$0xff]
      %v469 = vld [vmem:[%s1 + $0x330] sm:$0xff]
      %v470 = vld [vmem:[%s1 + $0x338] sm:$0xff]
      %v471 = vld [vmem:[%s1 + $0x340] sm:$0xff]
      %v472 = vld [vmem:[%s1 + $0x348] sm:$0xff]
      %v473 = vld [vmem:[%s1 + $0x350] sm:$0xff]
      %v474 = vld [vmem:[%s1 + $0x358] sm:$0xff]
      %v475 = vld [vmem:[%s1 + $0x360] sm:$0xff]
      %v476 = vld [vmem:[%s1 + $0x368] sm:$0xff]
      %v477 = vld [vmem:[%s1 + $0x370] sm:$0xff]
      %v478 = vld [vmem:[%s1 + $0x378] sm:$0xff]
      %v479 = vld [vmem:[%s1 + $0x380] sm:$0xff]
      %v480 = vld [vmem:[%s1 + $0x388] sm:$0xff]
      %v481 = vld [vmem:[%s1 + $0x390] sm:$0xff]
      %v482 = vld [vmem:[%s1 + $0x398] sm:$0xff]
      %v483 = vld [vmem:[%s1 + $0x3a0] sm:$0xff]
      %v484 = vld [vmem:[%s1 + $0x3a8] sm:$0xff]
      %v485 = vld [vmem:[%s1 + $0x3b0] sm:$0xff]
      %v486 = vld [vmem:[%s1 + $0x3b8] sm:$0xff]
      %v487 = vld [vmem:[%s1 + $0x3c0] sm:$0xff]
      %v488 = vld [vmem:[%s1 + $0x3c8] sm:$0xff]
      %v489 = vld [vmem:[%s1 + $0x3d0] sm:$0xff]
      %v490 = vld [vmem:[%s1 + $0x3d8] sm:$0xff]
      %v491 = vld [vmem:[%s1 + $0x3e0] sm:$0xff]
      %v492 = vld [vmem:[%s1 + $0x3e8] sm:$0xff]
      %v493 = vld [vmem:[%s1 + $0x3f0] sm:$0xff]
      %v494 = vld [vmem:[%s1 + $0x3f8] sm:$0xff]
      %v495 = vld [vmem:[%s1 + $0x400] sm:$0xff]
      %v496 = vld [vmem:[%s1 + $0x408] sm:$0xff]
      %v497 = vld [vmem:[%s1 + $0x410] sm:$0xff]
      %v498 = vld [vmem:[%s1 + $0x418] sm:$0xff]
      %v499 = vld [vmem:[%s1 + $0x420] sm:$0xff]
      %v500 = vld [vmem:[%s1 + $0x428] sm:$0xff]
      %v501 = vld [vmem:[%s1 + $0x430] sm:$0xff]
      %v502 = vld [vmem:[%s1 + $0x438] sm:$0xff]
      %v503 = vld [vmem:[%s1 + $0x440] sm:$0xff]
      %v504 = vld [vmem:[%s1 + $0x448] sm:$0xff]
      %v505 = vld [vmem:[%s1 + $0x450] sm:$0xff]
      %v506 = vld [vmem:[%s1 + $0x458] sm:$0xff]
      %v507 = vld [vmem:[%s1 + $0x460] sm:$0xff]
      %v508 = vld [vmem:[%s1 + $0x468] sm:$0xff]
      %v509 = vld [vmem:[%s1 + $0x470] sm:$0xff]
      %v510 = vld [vmem:[%s1 + $0x478] sm:$0xff]
      %v511 = vld [vmem:[%s1 + $0x480] sm:$0xff]
      %v512 = vld [vmem:[%s1 + $0x488] sm:$0xff]
      %v513 = vld [vmem:[%s1 + $0x490] sm:$0xff]
      %v514 = vld [vmem:[%s1 + $0x498] sm:$0xff]
      %v515 = vld [vmem:[%s1 + $0x4a0] sm:$0xff]
      %v516 = vld [vmem:[%s1 + $0x4a8] sm:$0xff]
      %v517 = vld [vmem:[%s1 + $0x4b0] sm:$0xff]
      %v518 = vld [vmem:[%s1 + $0x4b8] sm:$0xff]
      %v519 = vld [vmem:[%s1 + $0x4c0] sm:$0xff]
      %v520 = vld [vmem:[%s1 + $0x4c8] sm:$0xff]
      %v521 = vld [vmem:[%s1 + $0x4d0] sm:$0xff]
      %v522 = vld [vmem:[%s1 + $0x4d8] sm:$0xff]
      %v523 = vld [vmem:[%s1 + $0x4e0] sm:$0xff]
      %v524 = vld [vmem:[%s1 + $0x4e8] sm:$0xff]
      %v525 = vld [vmem:[%s1 + $0x4f0] sm:$0xff]
      %v526 = vld [vmem:[%s1 + $0x4f8] sm:$0xff]
      %v527 = vld [vmem:[%s1 + $0x500] sm:$0xff]
      %v528 = vld [vmem:[%s1 + $0x508] sm:$0xff]
      %v529 = vld [vmem:[%s1 + $0x510] sm:$0xff]
      %v530 = vld [vmem:[%s1 + $0x518] sm:$0xff]
      %v531 = vld [vmem:[%s1 + $0x520] sm:$0xff]
      %v532 = vld [vmem:[%s1 + $0x528] sm:$0xff]
      %v533 = vld [vmem:[%s1 + $0x530] sm:$0xff]
      %v534 = vld [vmem:[%s1 + $0x538] sm:$0xff]
      %v535 = vld [vmem:[%s1 + $0x540] sm:$0xff]
      %v536 = vld [vmem:[%s1 + $0x548] sm:$0xff]
      %v537 = vld [vmem:[%s1 + $0x550] sm:$0xff]
      %v538 = vld [vmem:[%s1 + $0x558] sm:$0xff]
      %v539 = vld [vmem:[%s1 + $0x560] sm:$0xff]
      %v540 = vld [vmem:[%s1 + $0x568] sm:$0xff]
      %v541 = vld [vmem:[%s1 + $0x570] sm:$0xff]
      %v542 = vld [vmem:[%s1 + $0x578] sm:$0xff]
      %v543 = vld [vmem:[%s1 + $0x580] sm:$0xff]
      %v544 = vld [vmem:[%s1 + $0x588] sm:$0xff]
      %v545 = vld [vmem:[%s1 + $0x590] sm:$0xff]
      %v546 = vld [vmem:[%s1 + $0x598] sm:$0xff]
      %v547 = vld [vmem:[%s1 + $0x5a0] sm:$0xff]
      %v548 = vld [vmem:[%s1 + $0x5a8] sm:$0xff]
      %v549 = vld [vmem:[%s1 + $0x5b0] sm:$0xff]
      %v550 = vld [vmem:[%s1 + $0x5b8] sm:$0xff]
      %v551 = vld [vmem:[%s1 + $0x5c0] sm:$0xff]
      %v552 = vld [vmem:[%s1 + $0x5c8] sm:$0xff]
      %v553 = vld [vmem:[%s1 + $0x5d0] sm:$0xff]
      %v554 = vld [vmem:[%s1 + $0x5d8] sm:$0xff]
      %v555 = vld [vmem:[%s1 + $0x5e0] sm:$0xff]
      %v556 = vld [vmem:[%s1 + $0x5e8] sm:$0xff]
      %v557 = vld [vmem:[%s1 + $0x5f0] sm:$0xff]
      %v558 = vld [vmem:[%s1 + $0x5f8] sm:$0xff]
      %v559 = vld [vmem:[%s2] sm:$0x3]
      %v561 = vlaneseq
      %v562 = vshrl.u32 %v561, 7
      %v563 = vsub.s32 0, %v562
      %v564 = vrot.slane %v559, %v563
      %v565 = vlaneseq
      %v566 = vshrl.u32 %v565, 7
      %v567 = vsub.s32 1, %v566
      %v568 = vrot.slane %v559, %v567
      %571 = vmatprep.subr.mxu0 %v398
      %572 = vmatpush1.msra.mxu0 %v397
      %573 = vmatprep.subr.mxu0 %v396
      %574 = vmatpush1.msra.mxu0 %v395
      %575 = vmatprep.subr.mxu0 %v394
      %576 = vmatpush1.msra.mxu0 %v393
      %577 = vmatprep.subr.mxu0 %v392
      %578 = vmatpush1.msra.mxu0 %v391
      %579 = vmatprep.subr.mxu0 %v390
      %580 = vmatpush1.msra.mxu0 %v389
      %581 = vmatprep.subr.mxu0 %v388
      %582 = vmatpush1.msra.mxu0 %v387
      %583 = vmatprep.subr.mxu0 %v386
      %584 = vmatpush1.msra.mxu0 %v385
      %585 = vmatprep.subr.mxu0 %v384
      %586 = vmatpush1.msra.mxu0 %v383
      %587 = vmatprep.subr.mxu0 %v382
      %588 = vmatpush1.msra.mxu0 %v381
      %589 = vmatprep.subr.mxu0 %v380
      %590 = vmatpush1.msra.mxu0 %v379
      %591 = vmatprep.subr.mxu0 %v378
      %592 = vmatpush1.msra.mxu0 %v377
      %593 = vmatprep.subr.mxu0 %v376
      %594 = vmatpush1.msra.mxu0 %v375
      %595 = vmatprep.subr.mxu0 %v374
      %596 = vmatpush1.msra.mxu0 %v373
      %597 = vmatprep.subr.mxu0 %v372
      %598 = vmatpush1.msra.mxu0 %v371
      %599 = vmatprep.subr.mxu0 %v370
      %600 = vmatpush1.msra.mxu0 %v369
      %601 = vmatprep.subr.mxu0 %v368
      %602 = vmatpush1.msra.mxu0 %v367
      %603 = vmatprep.subr.mxu0 %v430
      %604 = vmatpush2.msra.mxu0 %v429
      %605 = vmatprep.subr.mxu0 %v428
      %606 = vmatpush2.msra.mxu0 %v427
      %607 = vmatprep.subr.mxu0 %v426
      %608 = vmatpush2.msra.mxu0 %v425
      %609 = vmatprep.subr.mxu0 %v424
      %610 = vmatpush2.msra.mxu0 %v423
      %611 = vmatprep.subr.mxu0 %v422
      %612 = vmatpush2.msra.mxu0 %v421
      %613 = vmatprep.subr.mxu0 %v420
      %614 = vmatpush2.msra.mxu0 %v419
      %615 = vmatprep.subr.mxu0 %v418
      %616 = vmatpush2.msra.mxu0 %v417
      %617 = vmatprep.subr.mxu0 %v416
      %618 = vmatpush2.msra.mxu0 %v415
      %619 = vmatprep.subr.mxu0 %v414
      %620 = vmatpush2.msra.mxu0 %v413
      %621 = vmatprep.subr.mxu0 %v412
      %622 = vmatpush2.msra.mxu0 %v411
      %623 = vmatprep.subr.mxu0 %v410
      %624 = vmatpush2.msra.mxu0 %v409
      %625 = vmatprep.subr.mxu0 %v408
      %626 = vmatpush2.msra.mxu0 %v407
      %627 = vmatprep.subr.mxu0 %v406
      %628 = vmatpush2.msra.mxu0 %v405
      %629 = vmatprep.subr.mxu0 %v404
      %630 = vmatpush2.msra.mxu0 %v403
      %631 = vmatprep.subr.mxu0 %v402
      %632 = vmatpush2.msra.mxu0 %v401
      %633 = vmatprep.subr.mxu0 %v400
      %634 = vmatpush2.msra.mxu0 %v399
      %635 = vmatprep.mubr.f32.mxu0 %v353
      %636 = vmatmul.mubr.f32.gmra.mxu0 %v352
      %v637 = vpop.f32.mrf.mxu0
      %v638 = vadd.f32 %v564, %v637
      %v639 = vpop.f32.mrf.mxu0
      %v640 = vadd.f32 %v568, %v639
      %641 = vmatprep.mubr.f32.mxu0 %v347
      %642 = vmatmul.mubr.f32.gmra.mxu0 %v345
      %v643 = vpop.f32.mrf.mxu0
      %v644 = vadd.f32 %v564, %v643
      %v645 = vpop.f32.mrf.mxu0
      %v646 = vadd.f32 %v568, %v645
      %647 = vdwg.mxu0
      %648 = vmatprep.subr.mxu0 %v462
      %649 = vmatpush1.msra.mxu0 %v461
      %650 = vmatprep.subr.mxu0 %v460
      %651 = vmatpush1.msra.mxu0 %v459
      %652 = vmatprep.subr.mxu0 %v458
      %653 = vmatpush1.msra.mxu0 %v457
      %654 = vmatprep.subr.mxu0 %v456
      %655 = vmatpush1.msra.mxu0 %v455
      %656 = vmatprep.subr.mxu0 %v454
      %657 = vmatpush1.msra.mxu0 %v453
      %658 = vmatprep.subr.mxu0 %v452
      %659 = vmatpush1.msra.mxu0 %v451
      %660 = vmatprep.subr.mxu0 %v450
      %661 = vmatpush1.msra.mxu0 %v449
      %662 = vmatprep.subr.mxu0 %v448
      %663 = vmatpush1.msra.mxu0 %v447
      %664 = vmatprep.subr.mxu0 %v446
      %665 = vmatpush1.msra.mxu0 %v445
      %666 = vmatprep.subr.mxu0 %v444
      %667 = vmatpush1.msra.mxu0 %v443
      %668 = vmatprep.subr.mxu0 %v442
      %669 = vmatpush1.msra.mxu0 %v441
      %670 = vmatprep.subr.mxu0 %v440
      %671 = vmatpush1.msra.mxu0 %v439
      %672 = vmatprep.subr.mxu0 %v438
      %673 = vmatpush1.msra.mxu0 %v437
      %674 = vmatprep.subr.mxu0 %v436
      %675 = vmatpush1.msra.mxu0 %v435
      %676 = vmatprep.subr.mxu0 %v434
      %677 = vmatpush1.msra.mxu0 %v433
      %678 = vmatprep.subr.mxu0 %v432
      %679 = vmatpush1.msra.mxu0 %v431
      %680 = vmatprep.subr.mxu0 %v494
      %681 = vmatpush2.msra.mxu0 %v493
      %682 = vmatprep.subr.mxu0 %v492
      %683 = vmatpush2.msra.mxu0 %v491
      %684 = vmatprep.subr.mxu0 %v490
      %685 = vmatpush2.msra.mxu0 %v489
      %686 = vmatprep.subr.mxu0 %v488
      %687 = vmatpush2.msra.mxu0 %v487
      %688 = vmatprep.subr.mxu0 %v486
      %689 = vmatpush2.msra.mxu0 %v485
      %690 = vmatprep.subr.mxu0 %v484
      %691 = vmatpush2.msra.mxu0 %v483
      %692 = vmatprep.subr.mxu0 %v482
      %693 = vmatpush2.msra.mxu0 %v481
      %694 = vmatprep.subr.mxu0 %v480
      %695 = vmatpush2.msra.mxu0 %v479
      %696 = vmatprep.subr.mxu0 %v478
      %697 = vmatpush2.msra.mxu0 %v477
      %698 = vmatprep.subr.mxu0 %v476
      %699 = vmatpush2.msra.mxu0 %v475
      %700 = vmatprep.subr.mxu0 %v474
      %701 = vmatpush2.msra.mxu0 %v473
      %702 = vmatprep.subr.mxu0 %v472
      %703 = vmatpush2.msra.mxu0 %v471
      %704 = vmatprep.subr.mxu0 %v470
      %705 = vmatpush2.msra.mxu0 %v469
      %706 = vmatprep.subr.mxu0 %v468
      %707 = vmatpush2.msra.mxu0 %v467
      %708 = vmatprep.subr.mxu0 %v466
      %709 = vmatpush2.msra.mxu0 %v465
      %710 = vmatprep.subr.mxu0 %v464
      %711 = vmatpush2.msra.mxu0 %v463
      %712 = vmatprep.mubr.f32.mxu0 %v334
      %713 = vmatmul.mubr.f32.gmra.mxu0 %v333
      %v714 = vpop.f32.mrf.mxu0
      %v715 = vadd.f32 %v638, %v714
      %v716 = vpop.f32.mrf.mxu0
      %v717 = vadd.f32 %v640, %v716
      %718 = vmatprep.mubr.f32.mxu0 %v336
      %719 = vmatmul.mubr.f32.gmra.mxu0 %v335
      %v720 = vpop.f32.mrf.mxu0
      %v721 = vadd.f32 %v644, %v720
      %v722 = vpop.f32.mrf.mxu0
      %v723 = vadd.f32 %v646, %v722
      %724 = vdwg.mxu0
      %725 = vmatprep.subr.mxu0 %v526
      %726 = vmatpush1.msra.mxu0 %v525
      %727 = vmatprep.subr.mxu0 %v524
      %728 = vmatpush1.msra.mxu0 %v523
      %729 = vmatprep.subr.mxu0 %v522
      %730 = vmatpush1.msra.mxu0 %v521
      %731 = vmatprep.subr.mxu0 %v520
      %732 = vmatpush1.msra.mxu0 %v519
      %733 = vmatprep.subr.mxu0 %v518
      %734 = vmatpush1.msra.mxu0 %v517
      %735 = vmatprep.subr.mxu0 %v516
      %736 = vmatpush1.msra.mxu0 %v515
      %737 = vmatprep.subr.mxu0 %v514
      %738 = vmatpush1.msra.mxu0 %v513
      %739 = vmatprep.subr.mxu0 %v512
      %740 = vmatpush1.msra.mxu0 %v511
      %741 = vmatprep.subr.mxu0 %v510
      %742 = vmatpush1.msra.mxu0 %v509
      %743 = vmatprep.subr.mxu0 %v508
      %744 = vmatpush1.msra.mxu0 %v507
      %745 = vmatprep.subr.mxu0 %v506
      %746 = vmatpush1.msra.mxu0 %v505
      %747 = vmatprep.subr.mxu0 %v504
      %748 = vmatpush1.msra.mxu0 %v503
      %749 = vmatprep.subr.mxu0 %v502
      %750 = vmatpush1.msra.mxu0 %v501
      %751 = vmatprep.subr.mxu0 %v500
      %752 = vmatpush1.msra.mxu0 %v499
      %753 = vmatprep.subr.mxu0 %v498
      %754 = vmatpush1.msra.mxu0 %v497
      %755 = vmatprep.subr.mxu0 %v496
      %756 = vmatpush1.msra.mxu0 %v495
      %757 = vmatprep.subr.mxu0 %v558
      %758 = vmatpush2.msra.mxu0 %v557
      %759 = vmatprep.subr.mxu0 %v556
      %760 = vmatpush2.msra.mxu0 %v555
      %761 = vmatprep.subr.mxu0 %v554
      %762 = vmatpush2.msra.mxu0 %v553
      %763 = vmatprep.subr.mxu0 %v552
      %764 = vmatpush2.msra.mxu0 %v551
      %765 = vmatprep.subr.mxu0 %v550
      %766 = vmatpush2.msra.mxu0 %v549
      %767 = vmatprep.subr.mxu0 %v548
      %768 = vmatpush2.msra.mxu0 %v547
      %769 = vmatprep.subr.mxu0 %v546
      %770 = vmatpush2.msra.mxu0 %v545
      %771 = vmatprep.subr.mxu0 %v544
      %772 = vmatpush2.msra.mxu0 %v543
      %773 = vmatprep.subr.mxu0 %v542
      %774 = vmatpush2.msra.mxu0 %v541
      %775 = vmatprep.subr.mxu0 %v540
      %776 = vmatpush2.msra.mxu0 %v539
      %777 = vmatprep.subr.mxu0 %v538
      %778 = vmatpush2.msra.mxu0 %v537
      %779 = vmatprep.subr.mxu0 %v536
      %780 = vmatpush2.msra.mxu0 %v535
      %781 = vmatprep.subr.mxu0 %v534
      %782 = vmatpush2.msra.mxu0 %v533
      %783 = vmatprep.subr.mxu0 %v532
      %784 = vmatpush2.msra.mxu0 %v531
      %785 = vmatprep.subr.mxu0 %v530
      %786 = vmatpush2.msra.mxu0 %v529
      %787 = vmatprep.subr.mxu0 %v528
      %788 = vmatpush2.msra.mxu0 %v527
      %789 = vmatprep.mubr.f32.mxu0 %v360
      %790 = vmatmul.mubr.f32.gmra.mxu0 %v357
      %v791 = vpop.f32.mrf.mxu0
      %v792 = vadd.f32 %v715, %v791
      %v793 = vpop.f32.mrf.mxu0
      %v794 = vadd.f32 %v717, %v793
      %795 = vmatprep.mubr.f32.mxu0 %v366
      %796 = vmatmul.mubr.f32.gmra.mxu0 %v365
      %v797 = vpop.f32.mrf.mxu0
      %v798 = vadd.f32 %v721, %v797
      %v799 = vpop.f32.mrf.mxu0
      %v800 = vadd.f32 %v723, %v799
      %801 = vdwg.mxu0
      %v802 = vmax.f32 %v792, 0.0
      %v803 = vmax.f32 %v794, 0.0
      %v804 = vmax.f32 %v798, 0.0
      %v805 = vmax.f32 %v800, 0.0
      %v810 = vrot.slane %v802, 7
      %v811 = vrot.slane %v803, 7
      %v812 = vrot.slane %v804, 7
      %v813 = vsel %vm341, %v810, %v812
      %v814 = vrot.slane %v805, 7
      %v815 = vsel %vm341, %v811, %v814
      %v820 = vsel %vm341, 0.0, %v810
      %v821 = vsel %vm341, 0.0, %v811
      %v822 = vrot.slane %v802, 1
      %v823 = vrot.slane %v804, 1
      %v824 = vsel %vm354, %v822, %v823
      %v825 = vrot.slane %v803, 1
      %v826 = vrot.slane %v805, 1
      %v827 = vsel %vm354, %v825, %v826
      %v832 = vsel %vm354, %v823, 0.0
      %v833 = vsel %vm354, %v826, 0.0
      %v834 = vld [vmem:[%s3] sm:$0xff]
      %v835 = vld [vmem:[%s3 + $0x8] sm:$0xff]
      %v836 = vld [vmem:[%s3 + $0x10] sm:$0xff]
      %v837 = vld [vmem:[%s3 + $0x18] sm:$0xff]
      %v838 = vld [vmem:[%s3 + $0x20] sm:$0xff]
      %v839 = vld [vmem:[%s3 + $0x28] sm:$0xff]
      %v840 = vld [vmem:[%s3 + $0x30] sm:$0xff]
      %v841 = vld [vmem:[%s3 + $0x38] sm:$0xff]
      %v842 = vld [vmem:[%s3 + $0x40] sm:$0xff]
      %v843 = vld [vmem:[%s3 + $0x48] sm:$0xff]
      %v844 = vld [vmem:[%s3 + $0x50] sm:$0xff]
      %v845 = vld [vmem:[%s3 + $0x58] sm:$0xff]
      %v846 = vld [vmem:[%s3 + $0x60] sm:$0xff]
      %v847 = vld [vmem:[%s3 + $0x68] sm:$0xff]
      %v848 = vld [vmem:[%s3 + $0x70] sm:$0xff]
      %v849 = vld [vmem:[%s3 + $0x78] sm:$0xff]
      %v850 = vld [vmem:[%s3 + $0x80] sm:$0xff]
      %v851 = vld [vmem:[%s3 + $0x88] sm:$0xff]
      %v852 = vld [vmem:[%s3 + $0x90] sm:$0xff]
      %v853 = vld [vmem:[%s3 + $0x98] sm:$0xff]
      %v854 = vld [vmem:[%s3 + $0xa0] sm:$0xff]
      %v855 = vld [vmem:[%s3 + $0xa8] sm:$0xff]
      %v856 = vld [vmem:[%s3 + $0xb0] sm:$0xff]
      %v857 = vld [vmem:[%s3 + $0xb8] sm:$0xff]
      %v858 = vld [vmem:[%s3 + $0xc0] sm:$0xff]
      %v859 = vld [vmem:[%s3 + $0xc8] sm:$0xff]
      %v860 = vld [vmem:[%s3 + $0xd0] sm:$0xff]
      %v861 = vld [vmem:[%s3 + $0xd8] sm:$0xff]
      %v862 = vld [vmem:[%s3 + $0xe0] sm:$0xff]
      %v863 = vld [vmem:[%s3 + $0xe8] sm:$0xff]
      %v864 = vld [vmem:[%s3 + $0xf0] sm:$0xff]
      %v865 = vld [vmem:[%s3 + $0xf8] sm:$0xff]
      %v866 = vld [vmem:[%s3 + $0x100] sm:$0xff]
      %v867 = vld [vmem:[%s3 + $0x108] sm:$0xff]
      %v868 = vld [vmem:[%s3 + $0x110] sm:$0xff]
      %v869 = vld [vmem:[%s3 + $0x118] sm:$0xff]
      %v870 = vld [vmem:[%s3 + $0x120] sm:$0xff]
      %v871 = vld [vmem:[%s3 + $0x128] sm:$0xff]
      %v872 = vld [vmem:[%s3 + $0x130] sm:$0xff]
      %v873 = vld [vmem:[%s3 + $0x138] sm:$0xff]
      %v874 = vld [vmem:[%s3 + $0x140] sm:$0xff]
      %v875 = vld [vmem:[%s3 + $0x148] sm:$0xff]
      %v876 = vld [vmem:[%s3 + $0x150] sm:$0xff]
      %v877 = vld [vmem:[%s3 + $0x158] sm:$0xff]
      %v878 = vld [vmem:[%s3 + $0x160] sm:$0xff]
      %v879 = vld [vmem:[%s3 + $0x168] sm:$0xff]
      %v880 = vld [vmem:[%s3 + $0x170] sm:$0xff]
      %v881 = vld [vmem:[%s3 + $0x178] sm:$0xff]
      %v882 = vld [vmem:[%s3 + $0x180] sm:$0xff]
      %v883 = vld [vmem:[%s3 + $0x188] sm:$0xff]
      %v884 = vld [vmem:[%s3 + $0x190] sm:$0xff]
      %v885 = vld [vmem:[%s3 + $0x198] sm:$0xff]
      %v886 = vld [vmem:[%s3 + $0x1a0] sm:$0xff]
      %v887 = vld [vmem:[%s3 + $0x1a8] sm:$0xff]
      %v888 = vld [vmem:[%s3 + $0x1b0] sm:$0xff]
      %v889 = vld [vmem:[%s3 + $0x1b8] sm:$0xff]
      %v890 = vld [vmem:[%s3 + $0x1c0] sm:$0xff]
      %v891 = vld [vmem:[%s3 + $0x1c8] sm:$0xff]
      %v892 = vld [vmem:[%s3 + $0x1d0] sm:$0xff]
      %v893 = vld [vmem:[%s3 + $0x1d8] sm:$0xff]
      %v894 = vld [vmem:[%s3 + $0x1e0] sm:$0xff]
      %v895 = vld [vmem:[%s3 + $0x1e8] sm:$0xff]
      %v896 = vld [vmem:[%s3 + $0x1f0] sm:$0xff]
      %v897 = vld [vmem:[%s3 + $0x1f8] sm:$0xff]
      %v898 = vld [vmem:[%s3 + $0x200] sm:$0xff]
      %v899 = vld [vmem:[%s3 + $0x208] sm:$0xff]
      %v900 = vld [vmem:[%s3 + $0x210] sm:$0xff]
      %v901 = vld [vmem:[%s3 + $0x218] sm:$0xff]
      %v902 = vld [vmem:[%s3 + $0x220] sm:$0xff]
      %v903 = vld [vmem:[%s3 + $0x228] sm:$0xff]
      %v904 = vld [vmem:[%s3 + $0x230] sm:$0xff]
      %v905 = vld [vmem:[%s3 + $0x238] sm:$0xff]
      %v906 = vld [vmem:[%s3 + $0x240] sm:$0xff]
      %v907 = vld [vmem:[%s3 + $0x248] sm:$0xff]
      %v908 = vld [vmem:[%s3 + $0x250] sm:$0xff]
      %v909 = vld [vmem:[%s3 + $0x258] sm:$0xff]
      %v910 = vld [vmem:[%s3 + $0x260] sm:$0xff]
      %v911 = vld [vmem:[%s3 + $0x268] sm:$0xff]
      %v912 = vld [vmem:[%s3 + $0x270] sm:$0xff]
      %v913 = vld [vmem:[%s3 + $0x278] sm:$0xff]
      %v914 = vld [vmem:[%s3 + $0x280] sm:$0xff]
      %v915 = vld [vmem:[%s3 + $0x288] sm:$0xff]
      %v916 = vld [vmem:[%s3 + $0x290] sm:$0xff]
      %v917 = vld [vmem:[%s3 + $0x298] sm:$0xff]
      %v918 = vld [vmem:[%s3 + $0x2a0] sm:$0xff]
      %v919 = vld [vmem:[%s3 + $0x2a8] sm:$0xff]
      %v920 = vld [vmem:[%s3 + $0x2b0] sm:$0xff]
      %v921 = vld [vmem:[%s3 + $0x2b8] sm:$0xff]
      %v922 = vld [vmem:[%s3 + $0x2c0] sm:$0xff]
      %v923 = vld [vmem:[%s3 + $0x2c8] sm:$0xff]
      %v924 = vld [vmem:[%s3 + $0x2d0] sm:$0xff]
      %v925 = vld [vmem:[%s3 + $0x2d8] sm:$0xff]
      %v926 = vld [vmem:[%s3 + $0x2e0] sm:$0xff]
      %v927 = vld [vmem:[%s3 + $0x2e8] sm:$0xff]
      %v928 = vld [vmem:[%s3 + $0x2f0] sm:$0xff]
      %v929 = vld [vmem:[%s3 + $0x2f8] sm:$0xff]
      %v930 = vld [vmem:[%s3 + $0x300] sm:$0xff]
      %v931 = vld [vmem:[%s3 + $0x308] sm:$0xff]
      %v932 = vld [vmem:[%s3 + $0x310] sm:$0xff]
      %v933 = vld [vmem:[%s3 + $0x318] sm:$0xff]
      %v934 = vld [vmem:[%s3 + $0x320] sm:$0xff]
      %v935 = vld [vmem:[%s3 + $0x328] sm:$0xff]
      %v936 = vld [vmem:[%s3 + $0x330] sm:$0xff]
      %v937 = vld [vmem:[%s3 + $0x338] sm:$0xff]
      %v938 = vld [vmem:[%s3 + $0x340] sm:$0xff]
      %v939 = vld [vmem:[%s3 + $0x348] sm:$0xff]
      %v940 = vld [vmem:[%s3 + $0x350] sm:$0xff]
      %v941 = vld [vmem:[%s3 + $0x358] sm:$0xff]
      %v942 = vld [vmem:[%s3 + $0x360] sm:$0xff]
      %v943 = vld [vmem:[%s3 + $0x368] sm:$0xff]
      %v944 = vld [vmem:[%s3 + $0x370] sm:$0xff]
      %v945 = vld [vmem:[%s3 + $0x378] sm:$0xff]
      %v946 = vld [vmem:[%s3 + $0x380] sm:$0xff]
      %v947 = vld [vmem:[%s3 + $0x388] sm:$0xff]
      %v948 = vld [vmem:[%s3 + $0x390] sm:$0xff]
      %v949 = vld [vmem:[%s3 + $0x398] sm:$0xff]
      %v950 = vld [vmem:[%s3 + $0x3a0] sm:$0xff]
      %v951 = vld [vmem:[%s3 + $0x3a8] sm:$0xff]
      %v952 = vld [vmem:[%s3 + $0x3b0] sm:$0xff]
      %v953 = vld [vmem:[%s3 + $0x3b8] sm:$0xff]
      %v954 = vld [vmem:[%s3 + $0x3c0] sm:$0xff]
      %v955 = vld [vmem:[%s3 + $0x3c8] sm:$0xff]
      %v956 = vld [vmem:[%s3 + $0x3d0] sm:$0xff]
      %v957 = vld [vmem:[%s3 + $0x3d8] sm:$0xff]
      %v958 = vld [vmem:[%s3 + $0x3e0] sm:$0xff]
      %v959 = vld [vmem:[%s3 + $0x3e8] sm:$0xff]
      %v960 = vld [vmem:[%s3 + $0x3f0] sm:$0xff]
      %v961 = vld [vmem:[%s3 + $0x3f8] sm:$0xff]
      %v962 = vld [vmem:[%s3 + $0x400] sm:$0xff]
      %v963 = vld [vmem:[%s3 + $0x408] sm:$0xff]
      %v964 = vld [vmem:[%s3 + $0x410] sm:$0xff]
      %v965 = vld [vmem:[%s3 + $0x418] sm:$0xff]
      %v966 = vld [vmem:[%s3 + $0x420] sm:$0xff]
      %v967 = vld [vmem:[%s3 + $0x428] sm:$0xff]
      %v968 = vld [vmem:[%s3 + $0x430] sm:$0xff]
      %v969 = vld [vmem:[%s3 + $0x438] sm:$0xff]
      %v970 = vld [vmem:[%s3 + $0x440] sm:$0xff]
      %v971 = vld [vmem:[%s3 + $0x448] sm:$0xff]
      %v972 = vld [vmem:[%s3 + $0x450] sm:$0xff]
      %v973 = vld [vmem:[%s3 + $0x458] sm:$0xff]
      %v974 = vld [vmem:[%s3 + $0x460] sm:$0xff]
      %v975 = vld [vmem:[%s3 + $0x468] sm:$0xff]
      %v976 = vld [vmem:[%s3 + $0x470] sm:$0xff]
      %v977 = vld [vmem:[%s3 + $0x478] sm:$0xff]
      %v978 = vld [vmem:[%s3 + $0x480] sm:$0xff]
      %v979 = vld [vmem:[%s3 + $0x488] sm:$0xff]
      %v980 = vld [vmem:[%s3 + $0x490] sm:$0xff]
      %v981 = vld [vmem:[%s3 + $0x498] sm:$0xff]
      %v982 = vld [vmem:[%s3 + $0x4a0] sm:$0xff]
      %v983 = vld [vmem:[%s3 + $0x4a8] sm:$0xff]
      %v984 = vld [vmem:[%s3 + $0x4b0] sm:$0xff]
      %v985 = vld [vmem:[%s3 + $0x4b8] sm:$0xff]
      %v986 = vld [vmem:[%s3 + $0x4c0] sm:$0xff]
      %v987 = vld [vmem:[%s3 + $0x4c8] sm:$0xff]
      %v988 = vld [vmem:[%s3 + $0x4d0] sm:$0xff]
      %v989 = vld [vmem:[%s3 + $0x4d8] sm:$0xff]
      %v990 = vld [vmem:[%s3 + $0x4e0] sm:$0xff]
      %v991 = vld [vmem:[%s3 + $0x4e8] sm:$0xff]
      %v992 = vld [vmem:[%s3 + $0x4f0] sm:$0xff]
      %v993 = vld [vmem:[%s3 + $0x4f8] sm:$0xff]
      %v994 = vld [vmem:[%s3 + $0x500] sm:$0xff]
      %v995 = vld [vmem:[%s3 + $0x508] sm:$0xff]
      %v996 = vld [vmem:[%s3 + $0x510] sm:$0xff]
      %v997 = vld [vmem:[%s3 + $0x518] sm:$0xff]
      %v998 = vld [vmem:[%s3 + $0x520] sm:$0xff]
      %v999 = vld [vmem:[%s3 + $0x528] sm:$0xff]
      %v1000 = vld [vmem:[%s3 + $0x530] sm:$0xff]
      %v1001 = vld [vmem:[%s3 + $0x538] sm:$0xff]
      %v1002 = vld [vmem:[%s3 + $0x540] sm:$0xff]
      %v1003 = vld [vmem:[%s3 + $0x548] sm:$0xff]
      %v1004 = vld [vmem:[%s3 + $0x550] sm:$0xff]
      %v1005 = vld [vmem:[%s3 + $0x558] sm:$0xff]
      %v1006 = vld [vmem:[%s3 + $0x560] sm:$0xff]
      %v1007 = vld [vmem:[%s3 + $0x568] sm:$0xff]
      %v1008 = vld [vmem:[%s3 + $0x570] sm:$0xff]
      %v1009 = vld [vmem:[%s3 + $0x578] sm:$0xff]
      %v1010 = vld [vmem:[%s3 + $0x580] sm:$0xff]
      %v1011 = vld [vmem:[%s3 + $0x588] sm:$0xff]
      %v1012 = vld [vmem:[%s3 + $0x590] sm:$0xff]
      %v1013 = vld [vmem:[%s3 + $0x598] sm:$0xff]
      %v1014 = vld [vmem:[%s3 + $0x5a0] sm:$0xff]
      %v1015 = vld [vmem:[%s3 + $0x5a8] sm:$0xff]
      %v1016 = vld [vmem:[%s3 + $0x5b0] sm:$0xff]
      %v1017 = vld [vmem:[%s3 + $0x5b8] sm:$0xff]
      %v1018 = vld [vmem:[%s3 + $0x5c0] sm:$0xff]
      %v1019 = vld [vmem:[%s3 + $0x5c8] sm:$0xff]
      %v1020 = vld [vmem:[%s3 + $0x5d0] sm:$0xff]
      %v1021 = vld [vmem:[%s3 + $0x5d8] sm:$0xff]
      %v1022 = vld [vmem:[%s3 + $0x5e0] sm:$0xff]
      %v1023 = vld [vmem:[%s3 + $0x5e8] sm:$0xff]
      %v1024 = vld [vmem:[%s3 + $0x5f0] sm:$0xff]
      %v1025 = vld [vmem:[%s3 + $0x5f8] sm:$0xff]
      %v1026 = vld [vmem:[%s4] sm:$0x3]
      %v1028 = vlaneseq
      %v1029 = vshrl.u32 %v1028, 7
      %v1030 = vsub.s32 0, %v1029
      %v1031 = vrot.slane %v1026, %v1030
      %v1032 = vlaneseq
      %v1033 = vshrl.u32 %v1032, 7
      %v1034 = vsub.s32 1, %v1033
      %v1035 = vrot.slane %v1026, %v1034
      %1038 = vmatprep.subr.mxu0 %v865
      %1039 = vmatpush1.msra.mxu0 %v864
      %1040 = vmatprep.subr.mxu0 %v863
      %1041 = vmatpush1.msra.mxu0 %v862
      %1042 = vmatprep.subr.mxu0 %v861
      %1043 = vmatpush1.msra.mxu0 %v860
      %1044 = vmatprep.subr.mxu0 %v859
      %1045 = vmatpush1.msra.mxu0 %v858
      %1046 = vmatprep.subr.mxu0 %v857
      %1047 = vmatpush1.msra.mxu0 %v856
      %1048 = vmatprep.subr.mxu0 %v855
      %1049 = vmatpush1.msra.mxu0 %v854
      %1050 = vmatprep.subr.mxu0 %v853
      %1051 = vmatpush1.msra.mxu0 %v852
      %1052 = vmatprep.subr.mxu0 %v851
      %1053 = vmatpush1.msra.mxu0 %v850
      %1054 = vmatprep.subr.mxu0 %v849
      %1055 = vmatpush1.msra.mxu0 %v848
      %1056 = vmatprep.subr.mxu0 %v847
      %1057 = vmatpush1.msra.mxu0 %v846
      %1058 = vmatprep.subr.mxu0 %v845
      %1059 = vmatpush1.msra.mxu0 %v844
      %1060 = vmatprep.subr.mxu0 %v843
      %1061 = vmatpush1.msra.mxu0 %v842
      %1062 = vmatprep.subr.mxu0 %v841
      %1063 = vmatpush1.msra.mxu0 %v840
      %1064 = vmatprep.subr.mxu0 %v839
      %1065 = vmatpush1.msra.mxu0 %v838
      %1066 = vmatprep.subr.mxu0 %v837
      %1067 = vmatpush1.msra.mxu0 %v836
      %1068 = vmatprep.subr.mxu0 %v835
      %1069 = vmatpush1.msra.mxu0 %v834
      %1070 = vmatprep.subr.mxu0 %v897
      %1071 = vmatpush2.msra.mxu0 %v896
      %1072 = vmatprep.subr.mxu0 %v895
      %1073 = vmatpush2.msra.mxu0 %v894
      %1074 = vmatprep.subr.mxu0 %v893
      %1075 = vmatpush2.msra.mxu0 %v892
      %1076 = vmatprep.subr.mxu0 %v891
      %1077 = vmatpush2.msra.mxu0 %v890
      %1078 = vmatprep.subr.mxu0 %v889
      %1079 = vmatpush2.msra.mxu0 %v888
      %1080 = vmatprep.subr.mxu0 %v887
      %1081 = vmatpush2.msra.mxu0 %v886
      %1082 = vmatprep.subr.mxu0 %v885
      %1083 = vmatpush2.msra.mxu0 %v884
      %1084 = vmatprep.subr.mxu0 %v883
      %1085 = vmatpush2.msra.mxu0 %v882
      %1086 = vmatprep.subr.mxu0 %v881
      %1087 = vmatpush2.msra.mxu0 %v880
      %1088 = vmatprep.subr.mxu0 %v879
      %1089 = vmatpush2.msra.mxu0 %v878
      %1090 = vmatprep.subr.mxu0 %v877
      %1091 = vmatpush2.msra.mxu0 %v876
      %1092 = vmatprep.subr.mxu0 %v875
      %1093 = vmatpush2.msra.mxu0 %v874
      %1094 = vmatprep.subr.mxu0 %v873
      %1095 = vmatpush2.msra.mxu0 %v872
      %1096 = vmatprep.subr.mxu0 %v871
      %1097 = vmatpush2.msra.mxu0 %v870
      %1098 = vmatprep.subr.mxu0 %v869
      %1099 = vmatpush2.msra.mxu0 %v868
      %1100 = vmatprep.subr.mxu0 %v867
      %1101 = vmatpush2.msra.mxu0 %v866
      %1102 = vmatprep.mubr.f32.mxu0 %v821
      %1103 = vmatmul.mubr.f32.gmra.mxu0 %v820
      %v1104 = vpop.f32.mrf.mxu0
      %v1105 = vadd.f32 %v1031, %v1104
      %v1106 = vpop.f32.mrf.mxu0
      %v1107 = vadd.f32 %v1035, %v1106
      %1108 = vmatprep.mubr.f32.mxu0 %v815
      %1109 = vmatmul.mubr.f32.gmra.mxu0 %v813
      %v1110 = vpop.f32.mrf.mxu0
      %v1111 = vadd.f32 %v1031, %v1110
      %v1112 = vpop.f32.mrf.mxu0
      %v1113 = vadd.f32 %v1035, %v1112
      %1114 = vdwg.mxu0
      %1115 = vmatprep.subr.mxu0 %v929
      %1116 = vmatpush1.msra.mxu0 %v928
      %1117 = vmatprep.subr.mxu0 %v927
      %1118 = vmatpush1.msra.mxu0 %v926
      %1119 = vmatprep.subr.mxu0 %v925
      %1120 = vmatpush1.msra.mxu0 %v924
      %1121 = vmatprep.subr.mxu0 %v923
      %1122 = vmatpush1.msra.mxu0 %v922
      %1123 = vmatprep.subr.mxu0 %v921
      %1124 = vmatpush1.msra.mxu0 %v920
      %1125 = vmatprep.subr.mxu0 %v919
      %1126 = vmatpush1.msra.mxu0 %v918
      %1127 = vmatprep.subr.mxu0 %v917
      %1128 = vmatpush1.msra.mxu0 %v916
      %1129 = vmatprep.subr.mxu0 %v915
      %1130 = vmatpush1.msra.mxu0 %v914
      %1131 = vmatprep.subr.mxu0 %v913
      %1132 = vmatpush1.msra.mxu0 %v912
      %1133 = vmatprep.subr.mxu0 %v911
      %1134 = vmatpush1.msra.mxu0 %v910
      %1135 = vmatprep.subr.mxu0 %v909
      %1136 = vmatpush1.msra.mxu0 %v908
      %1137 = vmatprep.subr.mxu0 %v907
      %1138 = vmatpush1.msra.mxu0 %v906
      %1139 = vmatprep.subr.mxu0 %v905
      %1140 = vmatpush1.msra.mxu0 %v904
      %1141 = vmatprep.subr.mxu0 %v903
      %1142 = vmatpush1.msra.mxu0 %v902
      %1143 = vmatprep.subr.mxu0 %v901
      %1144 = vmatpush1.msra.mxu0 %v900
      %1145 = vmatprep.subr.mxu0 %v899
      %1146 = vmatpush1.msra.mxu0 %v898
      %1147 = vmatprep.subr.mxu0 %v961
      %1148 = vmatpush2.msra.mxu0 %v960
      %1149 = vmatprep.subr.mxu0 %v959
      %1150 = vmatpush2.msra.mxu0 %v958
      %1151 = vmatprep.subr.mxu0 %v957
      %1152 = vmatpush2.msra.mxu0 %v956
      %1153 = vmatprep.subr.mxu0 %v955
      %1154 = vmatpush2.msra.mxu0 %v954
      %1155 = vmatprep.subr.mxu0 %v953
      %1156 = vmatpush2.msra.mxu0 %v952
      %1157 = vmatprep.subr.mxu0 %v951
      %1158 = vmatpush2.msra.mxu0 %v950
      %1159 = vmatprep.subr.mxu0 %v949
      %1160 = vmatpush2.msra.mxu0 %v948
      %1161 = vmatprep.subr.mxu0 %v947
      %1162 = vmatpush2.msra.mxu0 %v946
      %1163 = vmatprep.subr.mxu0 %v945
      %1164 = vmatpush2.msra.mxu0 %v944
      %1165 = vmatprep.subr.mxu0 %v943
      %1166 = vmatpush2.msra.mxu0 %v942
      %1167 = vmatprep.subr.mxu0 %v941
      %1168 = vmatpush2.msra.mxu0 %v940
      %1169 = vmatprep.subr.mxu0 %v939
      %1170 = vmatpush2.msra.mxu0 %v938
      %1171 = vmatprep.subr.mxu0 %v937
      %1172 = vmatpush2.msra.mxu0 %v936
      %1173 = vmatprep.subr.mxu0 %v935
      %1174 = vmatpush2.msra.mxu0 %v934
      %1175 = vmatprep.subr.mxu0 %v933
      %1176 = vmatpush2.msra.mxu0 %v932
      %1177 = vmatprep.subr.mxu0 %v931
      %1178 = vmatpush2.msra.mxu0 %v930
      %1179 = vmatprep.mubr.f32.mxu0 %v803
      %1180 = vmatmul.mubr.f32.gmra.mxu0 %v802
      %v1181 = vpop.f32.mrf.mxu0
      %v1182 = vadd.f32 %v1105, %v1181
      %v1183 = vpop.f32.mrf.mxu0
      %v1184 = vadd.f32 %v1107, %v1183
      %1185 = vmatprep.mubr.f32.mxu0 %v805
      %1186 = vmatmul.mubr.f32.gmra.mxu0 %v804
      %v1187 = vpop.f32.mrf.mxu0
      %v1188 = vadd.f32 %v1111, %v1187
      %v1189 = vpop.f32.mrf.mxu0
      %v1190 = vadd.f32 %v1113, %v1189
      %1191 = vdwg.mxu0
      %1192 = vmatprep.subr.mxu0 %v993
      %1193 = vmatpush1.msra.mxu0 %v992
      %1194 = vmatprep.subr.mxu0 %v991
      %1195 = vmatpush1.msra.mxu0 %v990
      %1196 = vmatprep.subr.mxu0 %v989
      %1197 = vmatpush1.msra.mxu0 %v988
      %1198 = vmatprep.subr.mxu0 %v987
      %1199 = vmatpush1.msra.mxu0 %v986
      %1200 = vmatprep.subr.mxu0 %v985
      %1201 = vmatpush1.msra.mxu0 %v984
      %1202 = vmatprep.subr.mxu0 %v983
      %1203 = vmatpush1.msra.mxu0 %v982
      %1204 = vmatprep.subr.mxu0 %v981
      %1205 = vmatpush1.msra.mxu0 %v980
      %1206 = vmatprep.subr.mxu0 %v979
      %1207 = vmatpush1.msra.mxu0 %v978
      %1208 = vmatprep.subr.mxu0 %v977
      %1209 = vmatpush1.msra.mxu0 %v976
      %1210 = vmatprep.subr.mxu0 %v975
      %1211 = vmatpush1.msra.mxu0 %v974
      %1212 = vmatprep.subr.mxu0 %v973
      %1213 = vmatpush1.msra.mxu0 %v972
      %1214 = vmatprep.subr.mxu0 %v971
      %1215 = vmatpush1.msra.mxu0 %v970
      %1216 = vmatprep.subr.mxu0 %v969
      %1217 = vmatpush1.msra.mxu0 %v968
      %1218 = vmatprep.subr.mxu0 %v967
      %1219 = vmatpush1.msra.mxu0 %v966
      %1220 = vmatprep.subr.mxu0 %v965
      %1221 = vmatpush1.msra.mxu0 %v964
      %1222 = vmatprep.subr.mxu0 %v963
      %1223 = vmatpush1.msra.mxu0 %v962
      %1224 = vmatprep.subr.mxu0 %v1025
      %1225 = vmatpush2.msra.mxu0 %v1024
      %1226 = vmatprep.subr.mxu0 %v1023
      %1227 = vmatpush2.msra.mxu0 %v1022
      %1228 = vmatprep.subr.mxu0 %v1021
      %1229 = vmatpush2.msra.mxu0 %v1020
      %1230 = vmatprep.subr.mxu0 %v1019
      %1231 = vmatpush2.msra.mxu0 %v1018
      %1232 = vmatprep.subr.mxu0 %v1017
      %1233 = vmatpush2.msra.mxu0 %v1016
      %1234 = vmatprep.subr.mxu0 %v1015
      %1235 = vmatpush2.msra.mxu0 %v1014
      %1236 = vmatprep.subr.mxu0 %v1013
      %1237 = vmatpush2.msra.mxu0 %v1012
      %1238 = vmatprep.subr.mxu0 %v1011
      %1239 = vmatpush2.msra.mxu0 %v1010
      %1240 = vmatprep.subr.mxu0 %v1009
      %1241 = vmatpush2.msra.mxu0 %v1008
      %1242 = vmatprep.subr.mxu0 %v1007
      %1243 = vmatpush2.msra.mxu0 %v1006
      %1244 = vmatprep.subr.mxu0 %v1005
      %1245 = vmatpush2.msra.mxu0 %v1004
      %1246 = vmatprep.subr.mxu0 %v1003
      %1247 = vmatpush2.msra.mxu0 %v1002
      %1248 = vmatprep.subr.mxu0 %v1001
      %1249 = vmatpush2.msra.mxu0 %v1000
      %1250 = vmatprep.subr.mxu0 %v999
      %1251 = vmatpush2.msra.mxu0 %v998
      %1252 = vmatprep.subr.mxu0 %v997
      %1253 = vmatpush2.msra.mxu0 %v996
      %1254 = vmatprep.subr.mxu0 %v995
      %1255 = vmatpush2.msra.mxu0 %v994
      %1256 = vmatprep.mubr.f32.mxu0 %v827
      %1257 = vmatmul.mubr.f32.gmra.mxu0 %v824
      %v1258 = vpop.f32.mrf.mxu0
      %v1259 = vadd.f32 %v1182, %v1258
      %v1260 = vpop.f32.mrf.mxu0
      %v1261 = vadd.f32 %v1184, %v1260
      %1262 = vmatprep.mubr.f32.mxu0 %v833
      %1263 = vmatmul.mubr.f32.gmra.mxu0 %v832
      %v1264 = vpop.f32.mrf.mxu0
      %v1265 = vadd.f32 %v1188, %v1264
      %v1266 = vpop.f32.mrf.mxu0
      %v1267 = vadd.f32 %v1190, %v1266
      %1268 = vdwg.mxu0
      %v1269 = vadd.f32 %v333, %v1259
      %v1270 = vadd.f32 %v334, %v1261
      %v1271 = vadd.f32 %v335, %v1265
      %v1272 = vadd.f32 %v336, %v1267
      %v1277 = vrot.slane %v1269, 7
      %v1278 = vrot.slane %v1270, 7
      %v1279 = vrot.slane %v1271, 7
      %v1280 = vsel %vm341, %v1277, %v1279
      %v1281 = vrot.slane %v1272, 7
      %v1282 = vsel %vm341, %v1278, %v1281
      %v1287 = vsel %vm341, 0.0, %v1277
      %v1288 = vsel %vm341, 0.0, %v1278
      %v1289 = vrot.slane %v1269, 1
      %v1290 = vrot.slane %v1271, 1
      %v1291 = vsel %vm354, %v1289, %v1290
      %v1292 = vrot.slane %v1270, 1
      %v1293 = vrot.slane %v1272, 1
      %v1294 = vsel %vm354, %v1292, %v1293
      %v1299 = vsel %vm354, %v1290, 0.0
      %v1300 = vsel %vm354, %v1293, 0.0
      %1301 = vmatprep.subr.mxu0 %v398
      %1302 = vmatpush1.msra.mxu0 %v397
      %1303 = vmatprep.subr.mxu0 %v396
      %1304 = vmatpush1.msra.mxu0 %v395
      %1305 = vmatprep.subr.mxu0 %v394
      %1306 = vmatpush1.msra.mxu0 %v393
      %1307 = vmatprep.subr.mxu0 %v392
      %1308 = vmatpush1.msra.mxu0 %v391
      %1309 = vmatprep.subr.mxu0 %v390
      %1310 = vmatpush1.msra.mxu0 %v389
      %1311 = vmatprep.subr.mxu0 %v388
      %1312 = vmatpush1.msra.mxu0 %v387
      %1313 = vmatprep.subr.mxu0 %v386
      %1314 = vmatpush1.msra.mxu0 %v385
      %1315 = vmatprep.subr.mxu0 %v384
      %1316 = vmatpush1.msra.mxu0 %v383
      %1317 = vmatprep.subr.mxu0 %v382
      %1318 = vmatpush1.msra.mxu0 %v381
      %1319 = vmatprep.subr.mxu0 %v380
      %1320 = vmatpush1.msra.mxu0 %v379
      %1321 = vmatprep.subr.mxu0 %v378
      %1322 = vmatpush1.msra.mxu0 %v377
      %1323 = vmatprep.subr.mxu0 %v376
      %1324 = vmatpush1.msra.mxu0 %v375
      %1325 = vmatprep.subr.mxu0 %v374
      %1326 = vmatpush1.msra.mxu0 %v373
      %1327 = vmatprep.subr.mxu0 %v372
      %1328 = vmatpush1.msra.mxu0 %v371
      %1329 = vmatprep.subr.mxu0 %v370
      %1330 = vmatpush1.msra.mxu0 %v369
      %1331 = vmatprep.subr.mxu0 %v368
      %1332 = vmatpush1.msra.mxu0 %v367
      %1333 = vmatprep.subr.mxu0 %v430
      %1334 = vmatpush2.msra.mxu0 %v429
      %1335 = vmatprep.subr.mxu0 %v428
      %1336 = vmatpush2.msra.mxu0 %v427
      %1337 = vmatprep.subr.mxu0 %v426
      %1338 = vmatpush2.msra.mxu0 %v425
      %1339 = vmatprep.subr.mxu0 %v424
      %1340 = vmatpush2.msra.mxu0 %v423
      %1341 = vmatprep.subr.mxu0 %v422
      %1342 = vmatpush2.msra.mxu0 %v421
      %1343 = vmatprep.subr.mxu0 %v420
      %1344 = vmatpush2.msra.mxu0 %v419
      %1345 = vmatprep.subr.mxu0 %v418
      %1346 = vmatpush2.msra.mxu0 %v417
      %1347 = vmatprep.subr.mxu0 %v416
      %1348 = vmatpush2.msra.mxu0 %v415
      %1349 = vmatprep.subr.mxu0 %v414
      %1350 = vmatpush2.msra.mxu0 %v413
      %1351 = vmatprep.subr.mxu0 %v412
      %1352 = vmatpush2.msra.mxu0 %v411
      %1353 = vmatprep.subr.mxu0 %v410
      %1354 = vmatpush2.msra.mxu0 %v409
      %1355 = vmatprep.subr.mxu0 %v408
      %1356 = vmatpush2.msra.mxu0 %v407
      %1357 = vmatprep.subr.mxu0 %v406
      %1358 = vmatpush2.msra.mxu0 %v405
      %1359 = vmatprep.subr.mxu0 %v404
      %1360 = vmatpush2.msra.mxu0 %v403
      %1361 = vmatprep.subr.mxu0 %v402
      %1362 = vmatpush2.msra.mxu0 %v401
      %1363 = vmatprep.subr.mxu0 %v400
      %1364 = vmatpush2.msra.mxu0 %v399
      %1365 = vmatprep.mubr.f32.mxu0 %v1288
      %1366 = vmatmul.mubr.f32.gmra.mxu0 %v1287
      %v1367 = vpop.f32.mrf.mxu0
      %v1368 = vadd.f32 %v564, %v1367
      %v1369 = vpop.f32.mrf.mxu0
      %v1370 = vadd.f32 %v568, %v1369
      %1371 = vmatprep.mubr.f32.mxu0 %v1282
      %1372 = vmatmul.mubr.f32.gmra.mxu0 %v1280
      %v1373 = vpop.f32.mrf.mxu0
      %v1374 = vadd.f32 %v564, %v1373
      %v1375 = vpop.f32.mrf.mxu0
      %v1376 = vadd.f32 %v568, %v1375
      %1377 = vdwg.mxu0
      %1378 = vmatprep.subr.mxu0 %v462
      %1379 = vmatpush1.msra.mxu0 %v461
      %1380 = vmatprep.subr.mxu0 %v460
      %1381 = vmatpush1.msra.mxu0 %v459
      %1382 = vmatprep.subr.mxu0 %v458
      %1383 = vmatpush1.msra.mxu0 %v457
      %1384 = vmatprep.subr.mxu0 %v456
      %1385 = vmatpush1.msra.mxu0 %v455
      %1386 = vmatprep.subr.mxu0 %v454
      %1387 = vmatpush1.msra.mxu0 %v453
      %1388 = vmatprep.subr.mxu0 %v452
      %1389 = vmatpush1.msra.mxu0 %v451
      %1390 = vmatprep.subr.mxu0 %v450
      %1391 = vmatpush1.msra.mxu0 %v449
      %1392 = vmatprep.subr.mxu0 %v448
      %1393 = vmatpush1.msra.mxu0 %v447
      %1394 = vmatprep.subr.mxu0 %v446
      %1395 = vmatpush1.msra.mxu0 %v445
      %1396 = vmatprep.subr.mxu0 %v444
      %1397 = vmatpush1.msra.mxu0 %v443
      %1398 = vmatprep.subr.mxu0 %v442
      %1399 = vmatpush1.msra.mxu0 %v441
      %1400 = vmatprep.subr.mxu0 %v440
      %1401 = vmatpush1.msra.mxu0 %v439
      %1402 = vmatprep.subr.mxu0 %v438
      %1403 = vmatpush1.msra.mxu0 %v437
      %1404 = vmatprep.subr.mxu0 %v436
      %1405 = vmatpush1.msra.mxu0 %v435
      %1406 = vmatprep.subr.mxu0 %v434
      %1407 = vmatpush1.msra.mxu0 %v433
      %1408 = vmatprep.subr.mxu0 %v432
      %1409 = vmatpush1.msra.mxu0 %v431
      %1410 = vmatprep.subr.mxu0 %v494
      %1411 = vmatpush2.msra.mxu0 %v493
      %1412 = vmatprep.subr.mxu0 %v492
      %1413 = vmatpush2.msra.mxu0 %v491
      %1414 = vmatprep.subr.mxu0 %v490
      %1415 = vmatpush2.msra.mxu0 %v489
      %1416 = vmatprep.subr.mxu0 %v488
      %1417 = vmatpush2.msra.mxu0 %v487
      %1418 = vmatprep.subr.mxu0 %v486
      %1419 = vmatpush2.msra.mxu0 %v485
      %1420 = vmatprep.subr.mxu0 %v484
      %1421 = vmatpush2.msra.mxu0 %v483
      %1422 = vmatprep.subr.mxu0 %v482
      %1423 = vmatpush2.msra.mxu0 %v481
      %1424 = vmatprep.subr.mxu0 %v480
      %1425 = vmatpush2.msra.mxu0 %v479
      %1426 = vmatprep.subr.mxu0 %v478
      %1427 = vmatpush2.msra.mxu0 %v477
      %1428 = vmatprep.subr.mxu0 %v476
      %1429 = vmatpush2.msra.mxu0 %v475
      %1430 = vmatprep.subr.mxu0 %v474
      %1431 = vmatpush2.msra.mxu0 %v473
      %1432 = vmatprep.subr.mxu0 %v472
      %1433 = vmatpush2.msra.mxu0 %v471
      %1434 = vmatprep.subr.mxu0 %v470
      %1435 = vmatpush2.msra.mxu0 %v469
      %1436 = vmatprep.subr.mxu0 %v468
      %1437 = vmatpush2.msra.mxu0 %v467
      %1438 = vmatprep.subr.mxu0 %v466
      %1439 = vmatpush2.msra.mxu0 %v465
      %1440 = vmatprep.subr.mxu0 %v464
      %1441 = vmatpush2.msra.mxu0 %v463
      %1442 = vmatprep.mubr.f32.mxu0 %v1270
      %1443 = vmatmul.mubr.f32.gmra.mxu0 %v1269
      %v1444 = vpop.f32.mrf.mxu0
      %v1445 = vadd.f32 %v1368, %v1444
      %v1446 = vpop.f32.mrf.mxu0
      %v1447 = vadd.f32 %v1370, %v1446
      %1448 = vmatprep.mubr.f32.mxu0 %v1272
      %1449 = vmatmul.mubr.f32.gmra.mxu0 %v1271
      %v1450 = vpop.f32.mrf.mxu0
      %v1451 = vadd.f32 %v1374, %v1450
      %v1452 = vpop.f32.mrf.mxu0
      %v1453 = vadd.f32 %v1376, %v1452
      %1454 = vdwg.mxu0
      %1455 = vmatprep.subr.mxu0 %v526
      %1456 = vmatpush1.msra.mxu0 %v525
      %1457 = vmatprep.subr.mxu0 %v524
      %1458 = vmatpush1.msra.mxu0 %v523
      %1459 = vmatprep.subr.mxu0 %v522
      %1460 = vmatpush1.msra.mxu0 %v521
      %1461 = vmatprep.subr.mxu0 %v520
      %1462 = vmatpush1.msra.mxu0 %v519
      %1463 = vmatprep.subr.mxu0 %v518
      %1464 = vmatpush1.msra.mxu0 %v517
      %1465 = vmatprep.subr.mxu0 %v516
      %1466 = vmatpush1.msra.mxu0 %v515
      %1467 = vmatprep.subr.mxu0 %v514
      %1468 = vmatpush1.msra.mxu0 %v513
      %1469 = vmatprep.subr.mxu0 %v512
      %1470 = vmatpush1.msra.mxu0 %v511
      %1471 = vmatprep.subr.mxu0 %v510
      %1472 = vmatpush1.msra.mxu0 %v509
      %1473 = vmatprep.subr.mxu0 %v508
      %1474 = vmatpush1.msra.mxu0 %v507
      %1475 = vmatprep.subr.mxu0 %v506
      %1476 = vmatpush1.msra.mxu0 %v505
      %1477 = vmatprep.subr.mxu0 %v504
      %1478 = vmatpush1.msra.mxu0 %v503
      %1479 = vmatprep.subr.mxu0 %v502
      %1480 = vmatpush1.msra.mxu0 %v501
      %1481 = vmatprep.subr.mxu0 %v500
      %1482 = vmatpush1.msra.mxu0 %v499
      %1483 = vmatprep.subr.mxu0 %v498
      %1484 = vmatpush1.msra.mxu0 %v497
      %1485 = vmatprep.subr.mxu0 %v496
      %1486 = vmatpush1.msra.mxu0 %v495
      %1487 = vmatprep.subr.mxu0 %v558
      %1488 = vmatpush2.msra.mxu0 %v557
      %1489 = vmatprep.subr.mxu0 %v556
      %1490 = vmatpush2.msra.mxu0 %v555
      %1491 = vmatprep.subr.mxu0 %v554
      %1492 = vmatpush2.msra.mxu0 %v553
      %1493 = vmatprep.subr.mxu0 %v552
      %1494 = vmatpush2.msra.mxu0 %v551
      %1495 = vmatprep.subr.mxu0 %v550
      %1496 = vmatpush2.msra.mxu0 %v549
      %1497 = vmatprep.subr.mxu0 %v548
      %1498 = vmatpush2.msra.mxu0 %v547
      %1499 = vmatprep.subr.mxu0 %v546
      %1500 = vmatpush2.msra.mxu0 %v545
      %1501 = vmatprep.subr.mxu0 %v544
      %1502 = vmatpush2.msra.mxu0 %v543
      %1503 = vmatprep.subr.mxu0 %v542
      %1504 = vmatpush2.msra.mxu0 %v541
      %1505 = vmatprep.subr.mxu0 %v540
      %1506 = vmatpush2.msra.mxu0 %v539
      %1507 = vmatprep.subr.mxu0 %v538
      %1508 = vmatpush2.msra.mxu0 %v537
      %1509 = vmatprep.subr.mxu0 %v536
      %1510 = vmatpush2.msra.mxu0 %v535
      %1511 = vmatprep.subr.mxu0 %v534
      %1512 = vmatpush2.msra.mxu0 %v533
      %1513 = vmatprep.subr.mxu0 %v532
      %1514 = vmatpush2.msra.mxu0 %v531
      %1515 = vmatprep.subr.mxu0 %v530
      %1516 = vmatpush2.msra.mxu0 %v529
      %1517 = vmatprep.subr.mxu0 %v528
      %1518 = vmatpush2.msra.mxu0 %v527
      %1519 = vmatprep.mubr.f32.mxu0 %v1294
      %1520 = vmatmul.mubr.f32.gmra.mxu0 %v1291
      %v1521 = vpop.f32.mrf.mxu0
      %v1522 = vadd.f32 %v1445, %v1521
      %v1523 = vpop.f32.mrf.mxu0
      %v1524 = vadd.f32 %v1447, %v1523
      %1525 = vmatprep.mubr.f32.mxu0 %v1300
      %1526 = vmatmul.mubr.f32.gmra.mxu0 %v1299
      %v1527 = vpop.f32.mrf.mxu0
      %v1528 = vadd.f32 %v1451, %v1527
      %v1529 = vpop.f32.mrf.mxu0
      %v1530 = vadd.f32 %v1453, %v1529
      %1531 = vdwg.mxu0
      %v1532 = vmax.f32 %v1522, 0.0
      %v1533 = vmax.f32 %v1524, 0.0
      %v1534 = vmax.f32 %v1528, 0.0
      %v1535 = vmax.f32 %v1530, 0.0
      %v1540 = vrot.slane %v1532, 7
      %v1541 = vrot.slane %v1533, 7
      %v1542 = vrot.slane %v1534, 7
      %v1543 = vsel %vm341, %v1540, %v1542
      %v1544 = vrot.slane %v1535, 7
      %v1545 = vsel %vm341, %v1541, %v1544
      %v1550 = vsel %vm341, 0.0, %v1540
      %v1551 = vsel %vm341, 0.0, %v1541
      %v1552 = vrot.slane %v1532, 1
      %v1553 = vrot.slane %v1534, 1
      %v1554 = vsel %vm354, %v1552, %v1553
      %v1555 = vrot.slane %v1533, 1
      %v1556 = vrot.slane %v1535, 1
      %v1557 = vsel %vm354, %v1555, %v1556
      %v1562 = vsel %vm354, %v1553, 0.0
      %v1563 = vsel %vm354, %v1556, 0.0
      %1564 = vmatprep.subr.mxu0 %v865
      %1565 = vmatpush1.msra.mxu0 %v864
      %1566 = vmatprep.subr.mxu0 %v863
      %1567 = vmatpush1.msra.mxu0 %v862
      %1568 = vmatprep.subr.mxu0 %v861
      %1569 = vmatpush1.msra.mxu0 %v860
      %1570 = vmatprep.subr.mxu0 %v859
      %1571 = vmatpush1.msra.mxu0 %v858
      %1572 = vmatprep.subr.mxu0 %v857
      %1573 = vmatpush1.msra.mxu0 %v856
      %1574 = vmatprep.subr.mxu0 %v855
      %1575 = vmatpush1.msra.mxu0 %v854
      %1576 = vmatprep.subr.mxu0 %v853
      %1577 = vmatpush1.msra.mxu0 %v852
      %1578 = vmatprep.subr.mxu0 %v851
      %1579 = vmatpush1.msra.mxu0 %v850
      %1580 = vmatprep.subr.mxu0 %v849
      %1581 = vmatpush1.msra.mxu0 %v848
      %1582 = vmatprep.subr.mxu0 %v847
      %1583 = vmatpush1.msra.mxu0 %v846
      %1584 = vmatprep.subr.mxu0 %v845
      %1585 = vmatpush1.msra.mxu0 %v844
      %1586 = vmatprep.subr.mxu0 %v843
      %1587 = vmatpush1.msra.mxu0 %v842
      %1588 = vmatprep.subr.mxu0 %v841
      %1589 = vmatpush1.msra.mxu0 %v840
      %1590 = vmatprep.subr.mxu0 %v839
      %1591 = vmatpush1.msra.mxu0 %v838
      %1592 = vmatprep.subr.mxu0 %v837
      %1593 = vmatpush1.msra.mxu0 %v836
      %1594 = vmatprep.subr.mxu0 %v835
      %1595 = vmatpush1.msra.mxu0 %v834
      %1596 = vmatprep.subr.mxu0 %v897
      %1597 = vmatpush2.msra.mxu0 %v896
      %1598 = vmatprep.subr.mxu0 %v895
      %1599 = vmatpush2.msra.mxu0 %v894
      %1600 = vmatprep.subr.mxu0 %v893
      %1601 = vmatpush2.msra.mxu0 %v892
      %1602 = vmatprep.subr.mxu0 %v891
      %1603 = vmatpush2.msra.mxu0 %v890
      %1604 = vmatprep.subr.mxu0 %v889
      %1605 = vmatpush2.msra.mxu0 %v888
      %1606 = vmatprep.subr.mxu0 %v887
      %1607 = vmatpush2.msra.mxu0 %v886
      %1608 = vmatprep.subr.mxu0 %v885
      %1609 = vmatpush2.msra.mxu0 %v884
      %1610 = vmatprep.subr.mxu0 %v883
      %1611 = vmatpush2.msra.mxu0 %v882
      %1612 = vmatprep.subr.mxu0 %v881
      %1613 = vmatpush2.msra.mxu0 %v880
      %1614 = vmatprep.subr.mxu0 %v879
      %1615 = vmatpush2.msra.mxu0 %v878
      %1616 = vmatprep.subr.mxu0 %v877
      %1617 = vmatpush2.msra.mxu0 %v876
      %1618 = vmatprep.subr.mxu0 %v875
      %1619 = vmatpush2.msra.mxu0 %v874
      %1620 = vmatprep.subr.mxu0 %v873
      %1621 = vmatpush2.msra.mxu0 %v872
      %1622 = vmatprep.subr.mxu0 %v871
      %1623 = vmatpush2.msra.mxu0 %v870
      %1624 = vmatprep.subr.mxu0 %v869
      %1625 = vmatpush2.msra.mxu0 %v868
      %1626 = vmatprep.subr.mxu0 %v867
      %1627 = vmatpush2.msra.mxu0 %v866
      %1628 = vmatprep.mubr.f32.mxu0 %v1551
      %1629 = vmatmul.mubr.f32.gmra.mxu0 %v1550
      %v1630 = vpop.f32.mrf.mxu0
      %v1631 = vadd.f32 %v1031, %v1630
      %v1632 = vpop.f32.mrf.mxu0
      %v1633 = vadd.f32 %v1035, %v1632
      %1634 = vmatprep.mubr.f32.mxu0 %v1545
      %1635 = vmatmul.mubr.f32.gmra.mxu0 %v1543
      %v1636 = vpop.f32.mrf.mxu0
      %v1637 = vadd.f32 %v1031, %v1636
      %v1638 = vpop.f32.mrf.mxu0
      %v1639 = vadd.f32 %v1035, %v1638
      %1640 = vdwg.mxu0
      %1641 = vmatprep.subr.mxu0 %v929
      %1642 = vmatpush1.msra.mxu0 %v928
      %1643 = vmatprep.subr.mxu0 %v927
      %1644 = vmatpush1.msra.mxu0 %v926
      %1645 = vmatprep.subr.mxu0 %v925
      %1646 = vmatpush1.msra.mxu0 %v924
      %1647 = vmatprep.subr.mxu0 %v923
      %1648 = vmatpush1.msra.mxu0 %v922
      %1649 = vmatprep.subr.mxu0 %v921
      %1650 = vmatpush1.msra.mxu0 %v920
      %1651 = vmatprep.subr.mxu0 %v919
      %1652 = vmatpush1.msra.mxu0 %v918
      %1653 = vmatprep.subr.mxu0 %v917
      %1654 = vmatpush1.msra.mxu0 %v916
      %1655 = vmatprep.subr.mxu0 %v915
      %1656 = vmatpush1.msra.mxu0 %v914
      %1657 = vmatprep.subr.mxu0 %v913
      %1658 = vmatpush1.msra.mxu0 %v912
      %1659 = vmatprep.subr.mxu0 %v911
      %1660 = vmatpush1.msra.mxu0 %v910
      %1661 = vmatprep.subr.mxu0 %v909
      %1662 = vmatpush1.msra.mxu0 %v908
      %1663 = vmatprep.subr.mxu0 %v907
      %1664 = vmatpush1.msra.mxu0 %v906
      %1665 = vmatprep.subr.mxu0 %v905
      %1666 = vmatpush1.msra.mxu0 %v904
      %1667 = vmatprep.subr.mxu0 %v903
      %1668 = vmatpush1.msra.mxu0 %v902
      %1669 = vmatprep.subr.mxu0 %v901
      %1670 = vmatpush1.msra.mxu0 %v900
      %1671 = vmatprep.subr.mxu0 %v899
      %1672 = vmatpush1.msra.mxu0 %v898
      %1673 = vmatprep.subr.mxu0 %v961
      %1674 = vmatpush2.msra.mxu0 %v960
      %1675 = vmatprep.subr.mxu0 %v959
      %1676 = vmatpush2.msra.mxu0 %v958
      %1677 = vmatprep.subr.mxu0 %v957
      %1678 = vmatpush2.msra.mxu0 %v956
      %1679 = vmatprep.subr.mxu0 %v955
      %1680 = vmatpush2.msra.mxu0 %v954
      %1681 = vmatprep.subr.mxu0 %v953
      %1682 = vmatpush2.msra.mxu0 %v952
      %1683 = vmatprep.subr.mxu0 %v951
      %1684 = vmatpush2.msra.mxu0 %v950
      %1685 = vmatprep.subr.mxu0 %v949
      %1686 = vmatpush2.msra.mxu0 %v948
      %1687 = vmatprep.subr.mxu0 %v947
      %1688 = vmatpush2.msra.mxu0 %v946
      %1689 = vmatprep.subr.mxu0 %v945
      %1690 = vmatpush2.msra.mxu0 %v944
      %1691 = vmatprep.subr.mxu0 %v943
      %1692 = vmatpush2.msra.mxu0 %v942
      %1693 = vmatprep.subr.mxu0 %v941
      %1694 = vmatpush2.msra.mxu0 %v940
      %1695 = vmatprep.subr.mxu0 %v939
      %1696 = vmatpush2.msra.mxu0 %v938
      %1697 = vmatprep.subr.mxu0 %v937
      %1698 = vmatpush2.msra.mxu0 %v936
      %1699 = vmatprep.subr.mxu0 %v935
      %1700 = vmatpush2.msra.mxu0 %v934
      %1701 = vmatprep.subr.mxu0 %v933
      %1702 = vmatpush2.msra.mxu0 %v932
      %1703 = vmatprep.subr.mxu0 %v931
      %1704 = vmatpush2.msra.mxu0 %v930
      %1705 = vmatprep.mubr.f32.mxu0 %v1533
      %1706 = vmatmul.mubr.f32.gmra.mxu0 %v1532
      %v1707 = vpop.f32.mrf.mxu0
      %v1708 = vadd.f32 %v1631, %v1707
      %v1709 = vpop.f32.mrf.mxu0
      %v1710 = vadd.f32 %v1633, %v1709
      %1711 = vmatprep.mubr.f32.mxu0 %v1535
      %1712 = vmatmul.mubr.f32.gmra.mxu0 %v1534
      %v1713 = vpop.f32.mrf.mxu0
      %v1714 = vadd.f32 %v1637, %v1713
      %v1715 = vpop.f32.mrf.mxu0
      %v1716 = vadd.f32 %v1639, %v1715
      %1717 = vdwg.mxu0
      %1718 = vmatprep.subr.mxu0 %v993
      %1719 = vmatpush1.msra.mxu0 %v992
      %1720 = vmatprep.subr.mxu0 %v991
      %1721 = vmatpush1.msra.mxu0 %v990
      %1722 = vmatprep.subr.mxu0 %v989
      %1723 = vmatpush1.msra.mxu0 %v988
      %1724 = vmatprep.subr.mxu0 %v987
      %1725 = vmatpush1.msra.mxu0 %v986
      %1726 = vmatprep.subr.mxu0 %v985
      %1727 = vmatpush1.msra.mxu0 %v984
      %1728 = vmatprep.subr.mxu0 %v983
      %1729 = vmatpush1.msra.mxu0 %v982
      %1730 = vmatprep.subr.mxu0 %v981
      %1731 = vmatpush1.msra.mxu0 %v980
      %1732 = vmatprep.subr.mxu0 %v979
      %1733 = vmatpush1.msra.mxu0 %v978
      %1734 = vmatprep.subr.mxu0 %v977
      %1735 = vmatpush1.msra.mxu0 %v976
      %1736 = vmatprep.subr.mxu0 %v975
      %1737 = vmatpush1.msra.mxu0 %v974
      %1738 = vmatprep.subr.mxu0 %v973
      %1739 = vmatpush1.msra.mxu0 %v972
      %1740 = vmatprep.subr.mxu0 %v971
      %1741 = vmatpush1.msra.mxu0 %v970
      %1742 = vmatprep.subr.mxu0 %v969
      %1743 = vmatpush1.msra.mxu0 %v968
      %1744 = vmatprep.subr.mxu0 %v967
      %1745 = vmatpush1.msra.mxu0 %v966
      %1746 = vmatprep.subr.mxu0 %v965
      %1747 = vmatpush1.msra.mxu0 %v964
      %1748 = vmatprep.subr.mxu0 %v963
      %1749 = vmatpush1.msra.mxu0 %v962
      %1750 = vmatprep.subr.mxu0 %v1025
      %1751 = vmatpush2.msra.mxu0 %v1024
      %1752 = vmatprep.subr.mxu0 %v1023
      %1753 = vmatpush2.msra.mxu0 %v1022
      %1754 = vmatprep.subr.mxu0 %v1021
      %1755 = vmatpush2.msra.mxu0 %v1020
      %1756 = vmatprep.subr.mxu0 %v1019
      %1757 = vmatpush2.msra.mxu0 %v1018
      %1758 = vmatprep.subr.mxu0 %v1017
      %1759 = vmatpush2.msra.mxu0 %v1016
      %1760 = vmatprep.subr.mxu0 %v1015
      %1761 = vmatpush2.msra.mxu0 %v1014
      %1762 = vmatprep.subr.mxu0 %v1013
      %1763 = vmatpush2.msra.mxu0 %v1012
      %1764 = vmatprep.subr.mxu0 %v1011
      %1765 = vmatpush2.msra.mxu0 %v1010
      %1766 = vmatprep.subr.mxu0 %v1009
      %1767 = vmatpush2.msra.mxu0 %v1008
      %1768 = vmatprep.subr.mxu0 %v1007
      %1769 = vmatpush2.msra.mxu0 %v1006
      %1770 = vmatprep.subr.mxu0 %v1005
      %1771 = vmatpush2.msra.mxu0 %v1004
      %1772 = vmatprep.subr.mxu0 %v1003
      %1773 = vmatpush2.msra.mxu0 %v1002
      %1774 = vmatprep.subr.mxu0 %v1001
      %1775 = vmatpush2.msra.mxu0 %v1000
      %1776 = vmatprep.subr.mxu0 %v999
      %1777 = vmatpush2.msra.mxu0 %v998
      %1778 = vmatprep.subr.mxu0 %v997
      %1779 = vmatpush2.msra.mxu0 %v996
      %1780 = vmatprep.subr.mxu0 %v995
      %1781 = vmatpush2.msra.mxu0 %v994
      %1782 = vmatprep.mubr.f32.mxu0 %v1557
      %1783 = vmatmul.mubr.f32.gmra.mxu0 %v1554
      %v1784 = vpop.f32.mrf.mxu0
      %v1785 = vadd.f32 %v1708, %v1784
      %v1786 = vpop.f32.mrf.mxu0
      %v1787 = vadd.f32 %v1710, %v1786
      %1788 = vmatprep.mubr.f32.mxu0 %v1563
      %1789 = vmatmul.mubr.f32.gmra.mxu0 %v1562
      %v1790 = vpop.f32.mrf.mxu0
      %v1791 = vadd.f32 %v1714, %v1790
      %v1792 = vpop.f32.mrf.mxu0
      %v1793 = vadd.f32 %v1716, %v1792
      %1794 = vdwg.mxu0
      %v1795 = vadd.f32 %v1269, %v1785
      %v1796 = vadd.f32 %v1270, %v1787
      %v1797 = vadd.f32 %v1271, %v1791
      %v1798 = vadd.f32 %v1272, %v1793
      %v1803 = vrot.slane %v1795, 7
      %v1804 = vrot.slane %v1796, 7
      %v1805 = vrot.slane %v1797, 7
      %v1806 = vsel %vm341, %v1803, %v1805
      %v1807 = vrot.slane %v1798, 7
      %v1808 = vsel %vm341, %v1804, %v1807
      %v1813 = vsel %vm341, 0.0, %v1803
      %v1814 = vsel %vm341, 0.0, %v1804
      %v1815 = vrot.slane %v1795, 1
      %v1816 = vrot.slane %v1797, 1
      %v1817 = vsel %vm354, %v1815, %v1816
      %v1818 = vrot.slane %v1796, 1
      %v1819 = vrot.slane %v1798, 1
      %v1820 = vsel %vm354, %v1818, %v1819
      %v1825 = vsel %vm354, %v1816, 0.0
      %v1826 = vsel %vm354, %v1819, 0.0
      %1827 = vmatprep.subr.mxu0 %v398
      %1828 = vmatpush1.msra.mxu0 %v397
      %1829 = vmatprep.subr.mxu0 %v396
      %1830 = vmatpush1.msra.mxu0 %v395
      %1831 = vmatprep.subr.mxu0 %v394
      %1832 = vmatpush1.msra.mxu0 %v393
      %1833 = vmatprep.subr.mxu0 %v392
      %1834 = vmatpush1.msra.mxu0 %v391
      %1835 = vmatprep.subr.mxu0 %v390
      %1836 = vmatpush1.msra.mxu0 %v389
      %1837 = vmatprep.subr.mxu0 %v388
      %1838 = vmatpush1.msra.mxu0 %v387
      %1839 = vmatprep.subr.mxu0 %v386
      %1840 = vmatpush1.msra.mxu0 %v385
      %1841 = vmatprep.subr.mxu0 %v384
      %1842 = vmatpush1.msra.mxu0 %v383
      %1843 = vmatprep.subr.mxu0 %v382
      %1844 = vmatpush1.msra.mxu0 %v381
      %1845 = vmatprep.subr.mxu0 %v380
      %1846 = vmatpush1.msra.mxu0 %v379
      %1847 = vmatprep.subr.mxu0 %v378
      %1848 = vmatpush1.msra.mxu0 %v377
      %1849 = vmatprep.subr.mxu0 %v376
      %1850 = vmatpush1.msra.mxu0 %v375
      %1851 = vmatprep.subr.mxu0 %v374
      %1852 = vmatpush1.msra.mxu0 %v373
      %1853 = vmatprep.subr.mxu0 %v372
      %1854 = vmatpush1.msra.mxu0 %v371
      %1855 = vmatprep.subr.mxu0 %v370
      %1856 = vmatpush1.msra.mxu0 %v369
      %1857 = vmatprep.subr.mxu0 %v368
      %1858 = vmatpush1.msra.mxu0 %v367
      %1859 = vmatprep.subr.mxu0 %v430
      %1860 = vmatpush2.msra.mxu0 %v429
      %1861 = vmatprep.subr.mxu0 %v428
      %1862 = vmatpush2.msra.mxu0 %v427
      %1863 = vmatprep.subr.mxu0 %v426
      %1864 = vmatpush2.msra.mxu0 %v425
      %1865 = vmatprep.subr.mxu0 %v424
      %1866 = vmatpush2.msra.mxu0 %v423
      %1867 = vmatprep.subr.mxu0 %v422
      %1868 = vmatpush2.msra.mxu0 %v421
      %1869 = vmatprep.subr.mxu0 %v420
      %1870 = vmatpush2.msra.mxu0 %v419
      %1871 = vmatprep.subr.mxu0 %v418
      %1872 = vmatpush2.msra.mxu0 %v417
      %1873 = vmatprep.subr.mxu0 %v416
      %1874 = vmatpush2.msra.mxu0 %v415
      %1875 = vmatprep.subr.mxu0 %v414
      %1876 = vmatpush2.msra.mxu0 %v413
      %1877 = vmatprep.subr.mxu0 %v412
      %1878 = vmatpush2.msra.mxu0 %v411
      %1879 = vmatprep.subr.mxu0 %v410
      %1880 = vmatpush2.msra.mxu0 %v409
      %1881 = vmatprep.subr.mxu0 %v408
      %1882 = vmatpush2.msra.mxu0 %v407
      %1883 = vmatprep.subr.mxu0 %v406
      %1884 = vmatpush2.msra.mxu0 %v405
      %1885 = vmatprep.subr.mxu0 %v404
      %1886 = vmatpush2.msra.mxu0 %v403
      %1887 = vmatprep.subr.mxu0 %v402
      %1888 = vmatpush2.msra.mxu0 %v401
      %1889 = vmatprep.subr.mxu0 %v400
      %1890 = vmatpush2.msra.mxu0 %v399
      %1891 = vmatprep.mubr.f32.mxu0 %v1814
      %1892 = vmatmul.mubr.f32.gmra.mxu0 %v1813
      %v1893 = vpop.f32.mrf.mxu0
      %v1894 = vadd.f32 %v564, %v1893
      %v1895 = vpop.f32.mrf.mxu0
      %v1896 = vadd.f32 %v568, %v1895
      %1897 = vmatprep.mubr.f32.mxu0 %v1808
      %1898 = vmatmul.mubr.f32.gmra.mxu0 %v1806
      %v1899 = vpop.f32.mrf.mxu0
      %v1900 = vadd.f32 %v564, %v1899
      %v1901 = vpop.f32.mrf.mxu0
      %v1902 = vadd.f32 %v568, %v1901
      %1903 = vdwg.mxu0
      %1904 = vmatprep.subr.mxu0 %v462
      %1905 = vmatpush1.msra.mxu0 %v461
      %1906 = vmatprep.subr.mxu0 %v460
      %1907 = vmatpush1.msra.mxu0 %v459
      %1908 = vmatprep.subr.mxu0 %v458
      %1909 = vmatpush1.msra.mxu0 %v457
      %1910 = vmatprep.subr.mxu0 %v456
      %1911 = vmatpush1.msra.mxu0 %v455
      %1912 = vmatprep.subr.mxu0 %v454
      %1913 = vmatpush1.msra.mxu0 %v453
      %1914 = vmatprep.subr.mxu0 %v452
      %1915 = vmatpush1.msra.mxu0 %v451
      %1916 = vmatprep.subr.mxu0 %v450
      %1917 = vmatpush1.msra.mxu0 %v449
      %1918 = vmatprep.subr.mxu0 %v448
      %1919 = vmatpush1.msra.mxu0 %v447
      %1920 = vmatprep.subr.mxu0 %v446
      %1921 = vmatpush1.msra.mxu0 %v445
      %1922 = vmatprep.subr.mxu0 %v444
      %1923 = vmatpush1.msra.mxu0 %v443
      %1924 = vmatprep.subr.mxu0 %v442
      %1925 = vmatpush1.msra.mxu0 %v441
      %1926 = vmatprep.subr.mxu0 %v440
      %1927 = vmatpush1.msra.mxu0 %v439
      %1928 = vmatprep.subr.mxu0 %v438
      %1929 = vmatpush1.msra.mxu0 %v437
      %1930 = vmatprep.subr.mxu0 %v436
      %1931 = vmatpush1.msra.mxu0 %v435
      %1932 = vmatprep.subr.mxu0 %v434
      %1933 = vmatpush1.msra.mxu0 %v433
      %1934 = vmatprep.subr.mxu0 %v432
      %1935 = vmatpush1.msra.mxu0 %v431
      %1936 = vmatprep.subr.mxu0 %v494
      %1937 = vmatpush2.msra.mxu0 %v493
      %1938 = vmatprep.subr.mxu0 %v492
      %1939 = vmatpush2.msra.mxu0 %v491
      %1940 = vmatprep.subr.mxu0 %v490
      %1941 = vmatpush2.msra.mxu0 %v489
      %1942 = vmatprep.subr.mxu0 %v488
      %1943 = vmatpush2.msra.mxu0 %v487
      %1944 = vmatprep.subr.mxu0 %v486
      %1945 = vmatpush2.msra.mxu0 %v485
      %1946 = vmatprep.subr.mxu0 %v484
      %1947 = vmatpush2.msra.mxu0 %v483
      %1948 = vmatprep.subr.mxu0 %v482
      %1949 = vmatpush2.msra.mxu0 %v481
      %1950 = vmatprep.subr.mxu0 %v480
      %1951 = vmatpush2.msra.mxu0 %v479
      %1952 = vmatprep.subr.mxu0 %v478
      %1953 = vmatpush2.msra.mxu0 %v477
      %1954 = vmatprep.subr.mxu0 %v476
      %1955 = vmatpush2.msra.mxu0 %v475
      %1956 = vmatprep.subr.mxu0 %v474
      %1957 = vmatpush2.msra.mxu0 %v473
      %1958 = vmatprep.subr.mxu0 %v472
      %1959 = vmatpush2.msra.mxu0 %v471
      %1960 = vmatprep.subr.mxu0 %v470
      %1961 = vmatpush2.msra.mxu0 %v469
      %1962 = vmatprep.subr.mxu0 %v468
      %1963 = vmatpush2.msra.mxu0 %v467
      %1964 = vmatprep.subr.mxu0 %v466
      %1965 = vmatpush2.msra.mxu0 %v465
      %1966 = vmatprep.subr.mxu0 %v464
      %1967 = vmatpush2.msra.mxu0 %v463
      %1968 = vmatprep.mubr.f32.mxu0 %v1796
      %1969 = vmatmul.mubr.f32.gmra.mxu0 %v1795
      %v1970 = vpop.f32.mrf.mxu0
      %v1971 = vadd.f32 %v1894, %v1970
      %v1972 = vpop.f32.mrf.mxu0
      %v1973 = vadd.f32 %v1896, %v1972
      %1974 = vmatprep.mubr.f32.mxu0 %v1798
      %1975 = vmatmul.mubr.f32.gmra.mxu0 %v1797
      %v1976 = vpop.f32.mrf.mxu0
      %v1977 = vadd.f32 %v1900, %v1976
      %v1978 = vpop.f32.mrf.mxu0
      %v1979 = vadd.f32 %v1902, %v1978
      %1980 = vdwg.mxu0
      %1981 = vmatprep.subr.mxu0 %v526
      %1982 = vmatpush1.msra.mxu0 %v525
      %1983 = vmatprep.subr.mxu0 %v524
      %1984 = vmatpush1.msra.mxu0 %v523
      %1985 = vmatprep.subr.mxu0 %v522
      %1986 = vmatpush1.msra.mxu0 %v521
      %1987 = vmatprep.subr.mxu0 %v520
      %1988 = vmatpush1.msra.mxu0 %v519
      %1989 = vmatprep.subr.mxu0 %v518
      %1990 = vmatpush1.msra.mxu0 %v517
      %1991 = vmatprep.subr.mxu0 %v516
      %1992 = vmatpush1.msra.mxu0 %v515
      %1993 = vmatprep.subr.mxu0 %v514
      %1994 = vmatpush1.msra.mxu0 %v513
      %1995 = vmatprep.subr.mxu0 %v512
      %1996 = vmatpush1.msra.mxu0 %v511
      %1997 = vmatprep.subr.mxu0 %v510
      %1998 = vmatpush1.msra.mxu0 %v509
      %1999 = vmatprep.subr.mxu0 %v508
      %2000 = vmatpush1.msra.mxu0 %v507
      %2001 = vmatprep.subr.mxu0 %v506
      %2002 = vmatpush1.msra.mxu0 %v505
      %2003 = vmatprep.subr.mxu0 %v504
      %2004 = vmatpush1.msra.mxu0 %v503
      %2005 = vmatprep.subr.mxu0 %v502
      %2006 = vmatpush1.msra.mxu0 %v501
      %2007 = vmatprep.subr.mxu0 %v500
      %2008 = vmatpush1.msra.mxu0 %v499
      %2009 = vmatprep.subr.mxu0 %v498
      %2010 = vmatpush1.msra.mxu0 %v497
      %2011 = vmatprep.subr.mxu0 %v496
      %2012 = vmatpush1.msra.mxu0 %v495
      %2013 = vmatprep.subr.mxu0 %v558
      %2014 = vmatpush2.msra.mxu0 %v557
      %2015 = vmatprep.subr.mxu0 %v556
      %2016 = vmatpush2.msra.mxu0 %v555
      %2017 = vmatprep.subr.mxu0 %v554
      %2018 = vmatpush2.msra.mxu0 %v553
      %2019 = vmatprep.subr.mxu0 %v552
      %2020 = vmatpush2.msra.mxu0 %v551
      %2021 = vmatprep.subr.mxu0 %v550
      %2022 = vmatpush2.msra.mxu0 %v549
      %2023 = vmatprep.subr.mxu0 %v548
      %2024 = vmatpush2.msra.mxu0 %v547
      %2025 = vmatprep.subr.mxu0 %v546
      %2026 = vmatpush2.msra.mxu0 %v545
      %2027 = vmatprep.subr.mxu0 %v544
      %2028 = vmatpush2.msra.mxu0 %v543
      %2029 = vmatprep.subr.mxu0 %v542
      %2030 = vmatpush2.msra.mxu0 %v541
      %2031 = vmatprep.subr.mxu0 %v540
      %2032 = vmatpush2.msra.mxu0 %v539
      %2033 = vmatprep.subr.mxu0 %v538
      %2034 = vmatpush2.msra.mxu0 %v537
      %2035 = vmatprep.subr.mxu0 %v536
      %2036 = vmatpush2.msra.mxu0 %v535
      %2037 = vmatprep.subr.mxu0 %v534
      %2038 = vmatpush2.msra.mxu0 %v533
      %2039 = vmatprep.subr.mxu0 %v532
      %2040 = vmatpush2.msra.mxu0 %v531
      %2041 = vmatprep.subr.mxu0 %v530
      %2042 = vmatpush2.msra.mxu0 %v529
      %2043 = vmatprep.subr.mxu0 %v528
      %2044 = vmatpush2.msra.mxu0 %v527
      %2045 = vmatprep.mubr.f32.mxu0 %v1820
      %2046 = vmatmul.mubr.f32.gmra.mxu0 %v1817
      %v2047 = vpop.f32.mrf.mxu0
      %v2048 = vadd.f32 %v1971, %v2047
      %v2049 = vpop.f32.mrf.mxu0
      %v2050 = vadd.f32 %v1973, %v2049
      %2051 = vmatprep.mubr.f32.mxu0 %v1826
      %2052 = vmatmul.mubr.f32.gmra.mxu0 %v1825
      %v2053 = vpop.f32.mrf.mxu0
      %v2054 = vadd.f32 %v1977, %v2053
      %v2055 = vpop.f32.mrf.mxu0
      %v2056 = vadd.f32 %v1979, %v2055
      %2057 = vdwg.mxu0
      %v2058 = vmax.f32 %v2048, 0.0
      %v2059 = vmax.f32 %v2050, 0.0
      %v2060 = vmax.f32 %v2054, 0.0
      %v2061 = vmax.f32 %v2056, 0.0
      %v2066 = vrot.slane %v2058, 7
      %v2067 = vrot.slane %v2059, 7
      %v2068 = vrot.slane %v2060, 7
      %v2069 = vsel %vm341, %v2066, %v2068
      %v2070 = vrot.slane %v2061, 7
      %v2071 = vsel %vm341, %v2067, %v2070
      %v2076 = vsel %vm341, 0.0, %v2066
      %v2077 = vsel %vm341, 0.0, %v2067
      %v2078 = vrot.slane %v2058, 1
      %v2079 = vrot.slane %v2060, 1
      %v2080 = vsel %vm354, %v2078, %v2079
      %v2081 = vrot.slane %v2059, 1
      %v2082 = vrot.slane %v2061, 1
      %v2083 = vsel %vm354, %v2081, %v2082
      %v2088 = vsel %vm354, %v2079, 0.0
      %v2089 = vsel %vm354, %v2082, 0.0
      %2090 = vmatprep.subr.mxu0 %v865
      %2091 = vmatpush1.msra.mxu0 %v864
      %2092 = vmatprep.subr.mxu0 %v863
      %2093 = vmatpush1.msra.mxu0 %v862
      %2094 = vmatprep.subr.mxu0 %v861
      %2095 = vmatpush1.msra.mxu0 %v860
      %2096 = vmatprep.subr.mxu0 %v859
      %2097 = vmatpush1.msra.mxu0 %v858
      %2098 = vmatprep.subr.mxu0 %v857
      %2099 = vmatpush1.msra.mxu0 %v856
      %2100 = vmatprep.subr.mxu0 %v855
      %2101 = vmatpush1.msra.mxu0 %v854
      %2102 = vmatprep.subr.mxu0 %v853
      %2103 = vmatpush1.msra.mxu0 %v852
      %2104 = vmatprep.subr.mxu0 %v851
      %2105 = vmatpush1.msra.mxu0 %v850
      %2106 = vmatprep.subr.mxu0 %v849
      %2107 = vmatpush1.msra.mxu0 %v848
      %2108 = vmatprep.subr.mxu0 %v847
      %2109 = vmatpush1.msra.mxu0 %v846
      %2110 = vmatprep.subr.mxu0 %v845
      %2111 = vmatpush1.msra.mxu0 %v844
      %2112 = vmatprep.subr.mxu0 %v843
      %2113 = vmatpush1.msra.mxu0 %v842
      %2114 = vmatprep.subr.mxu0 %v841
      %2115 = vmatpush1.msra.mxu0 %v840
      %2116 = vmatprep.subr.mxu0 %v839
      %2117 = vmatpush1.msra.mxu0 %v838
      %2118 = vmatprep.subr.mxu0 %v837
      %2119 = vmatpush1.msra.mxu0 %v836
      %2120 = vmatprep.subr.mxu0 %v835
      %2121 = vmatpush1.msra.mxu0 %v834
      %2122 = vmatprep.subr.mxu0 %v897
      %2123 = vmatpush2.msra.mxu0 %v896
      %2124 = vmatprep.subr.mxu0 %v895
      %2125 = vmatpush2.msra.mxu0 %v894
      %2126 = vmatprep.subr.mxu0 %v893
      %2127 = vmatpush2.msra.mxu0 %v892
      %2128 = vmatprep.subr.mxu0 %v891
      %2129 = vmatpush2.msra.mxu0 %v890
      %2130 = vmatprep.subr.mxu0 %v889
      %2131 = vmatpush2.msra.mxu0 %v888
      %2132 = vmatprep.subr.mxu0 %v887
      %2133 = vmatpush2.msra.mxu0 %v886
      %2134 = vmatprep.subr.mxu0 %v885
      %2135 = vmatpush2.msra.mxu0 %v884
      %2136 = vmatprep.subr.mxu0 %v883
      %2137 = vmatpush2.msra.mxu0 %v882
      %2138 = vmatprep.subr.mxu0 %v881
      %2139 = vmatpush2.msra.mxu0 %v880
      %2140 = vmatprep.subr.mxu0 %v879
      %2141 = vmatpush2.msra.mxu0 %v878
      %2142 = vmatprep.subr.mxu0 %v877
      %2143 = vmatpush2.msra.mxu0 %v876
      %2144 = vmatprep.subr.mxu0 %v875
      %2145 = vmatpush2.msra.mxu0 %v874
      %2146 = vmatprep.subr.mxu0 %v873
      %2147 = vmatpush2.msra.mxu0 %v872
      %2148 = vmatprep.subr.mxu0 %v871
      %2149 = vmatpush2.msra.mxu0 %v870
      %2150 = vmatprep.subr.mxu0 %v869
      %2151 = vmatpush2.msra.mxu0 %v868
      %2152 = vmatprep.subr.mxu0 %v867
      %2153 = vmatpush2.msra.mxu0 %v866
      %2154 = vmatprep.mubr.f32.mxu0 %v2077
      %2155 = vmatmul.mubr.f32.gmra.mxu0 %v2076
      %v2156 = vpop.f32.mrf.mxu0
      %v2157 = vadd.f32 %v1031, %v2156
      %v2158 = vpop.f32.mrf.mxu0
      %v2159 = vadd.f32 %v1035, %v2158
      %2160 = vmatprep.mubr.f32.mxu0 %v2071
      %2161 = vmatmul.mubr.f32.gmra.mxu0 %v2069
      %v2162 = vpop.f32.mrf.mxu0
      %v2163 = vadd.f32 %v1031, %v2162
      %v2164 = vpop.f32.mrf.mxu0
      %v2165 = vadd.f32 %v1035, %v2164
      %2166 = vdwg.mxu0
      %2167 = vmatprep.subr.mxu0 %v929
      %2168 = vmatpush1.msra.mxu0 %v928
      %2169 = vmatprep.subr.mxu0 %v927
      %2170 = vmatpush1.msra.mxu0 %v926
      %2171 = vmatprep.subr.mxu0 %v925
      %2172 = vmatpush1.msra.mxu0 %v924
      %2173 = vmatprep.subr.mxu0 %v923
      %2174 = vmatpush1.msra.mxu0 %v922
      %2175 = vmatprep.subr.mxu0 %v921
      %2176 = vmatpush1.msra.mxu0 %v920
      %2177 = vmatprep.subr.mxu0 %v919
      %2178 = vmatpush1.msra.mxu0 %v918
      %2179 = vmatprep.subr.mxu0 %v917
      %2180 = vmatpush1.msra.mxu0 %v916
      %2181 = vmatprep.subr.mxu0 %v915
      %2182 = vmatpush1.msra.mxu0 %v914
      %2183 = vmatprep.subr.mxu0 %v913
      %2184 = vmatpush1.msra.mxu0 %v912
      %2185 = vmatprep.subr.mxu0 %v911
      %2186 = vmatpush1.msra.mxu0 %v910
      %2187 = vmatprep.subr.mxu0 %v909
      %2188 = vmatpush1.msra.mxu0 %v908
      %2189 = vmatprep.subr.mxu0 %v907
      %2190 = vmatpush1.msra.mxu0 %v906
      %2191 = vmatprep.subr.mxu0 %v905
      %2192 = vmatpush1.msra.mxu0 %v904
      %2193 = vmatprep.subr.mxu0 %v903
      %2194 = vmatpush1.msra.mxu0 %v902
      %2195 = vmatprep.subr.mxu0 %v901
      %2196 = vmatpush1.msra.mxu0 %v900
      %2197 = vmatprep.subr.mxu0 %v899
      %2198 = vmatpush1.msra.mxu0 %v898
      %2199 = vmatprep.subr.mxu0 %v961
      %2200 = vmatpush2.msra.mxu0 %v960
      %2201 = vmatprep.subr.mxu0 %v959
      %2202 = vmatpush2.msra.mxu0 %v958
      %2203 = vmatprep.subr.mxu0 %v957
      %2204 = vmatpush2.msra.mxu0 %v956
      %2205 = vmatprep.subr.mxu0 %v955
      %2206 = vmatpush2.msra.mxu0 %v954
      %2207 = vmatprep.subr.mxu0 %v953
      %2208 = vmatpush2.msra.mxu0 %v952
      %2209 = vmatprep.subr.mxu0 %v951
      %2210 = vmatpush2.msra.mxu0 %v950
      %2211 = vmatprep.subr.mxu0 %v949
      %2212 = vmatpush2.msra.mxu0 %v948
      %2213 = vmatprep.subr.mxu0 %v947
      %2214 = vmatpush2.msra.mxu0 %v946
      %2215 = vmatprep.subr.mxu0 %v945
      %2216 = vmatpush2.msra.mxu0 %v944
      %2217 = vmatprep.subr.mxu0 %v943
      %2218 = vmatpush2.msra.mxu0 %v942
      %2219 = vmatprep.subr.mxu0 %v941
      %2220 = vmatpush2.msra.mxu0 %v940
      %2221 = vmatprep.subr.mxu0 %v939
      %2222 = vmatpush2.msra.mxu0 %v938
      %2223 = vmatprep.subr.mxu0 %v937
      %2224 = vmatpush2.msra.mxu0 %v936
      %2225 = vmatprep.subr.mxu0 %v935
      %2226 = vmatpush2.msra.mxu0 %v934
      %2227 = vmatprep.subr.mxu0 %v933
      %2228 = vmatpush2.msra.mxu0 %v932
      %2229 = vmatprep.subr.mxu0 %v931
      %2230 = vmatpush2.msra.mxu0 %v930
      %2231 = vmatprep.mubr.f32.mxu0 %v2059
      %2232 = vmatmul.mubr.f32.gmra.mxu0 %v2058
      %v2233 = vpop.f32.mrf.mxu0
      %v2234 = vadd.f32 %v2157, %v2233
      %v2235 = vpop.f32.mrf.mxu0
      %v2236 = vadd.f32 %v2159, %v2235
      %2237 = vmatprep.mubr.f32.mxu0 %v2061
      %2238 = vmatmul.mubr.f32.gmra.mxu0 %v2060
      %v2239 = vpop.f32.mrf.mxu0
      %v2240 = vadd.f32 %v2163, %v2239
      %v2241 = vpop.f32.mrf.mxu0
      %v2242 = vadd.f32 %v2165, %v2241
      %2243 = vdwg.mxu0
      %2244 = vmatprep.subr.mxu0 %v993
      %2245 = vmatpush1.msra.mxu0 %v992
      %2246 = vmatprep.subr.mxu0 %v991
      %2247 = vmatpush1.msra.mxu0 %v990
      %2248 = vmatprep.subr.mxu0 %v989
      %2249 = vmatpush1.msra.mxu0 %v988
      %2250 = vmatprep.subr.mxu0 %v987
      %2251 = vmatpush1.msra.mxu0 %v986
      %2252 = vmatprep.subr.mxu0 %v985
      %2253 = vmatpush1.msra.mxu0 %v984
      %2254 = vmatprep.subr.mxu0 %v983
      %2255 = vmatpush1.msra.mxu0 %v982
      %2256 = vmatprep.subr.mxu0 %v981
      %2257 = vmatpush1.msra.mxu0 %v980
      %2258 = vmatprep.subr.mxu0 %v979
      %2259 = vmatpush1.msra.mxu0 %v978
      %2260 = vmatprep.subr.mxu0 %v977
      %2261 = vmatpush1.msra.mxu0 %v976
      %2262 = vmatprep.subr.mxu0 %v975
      %2263 = vmatpush1.msra.mxu0 %v974
      %2264 = vmatprep.subr.mxu0 %v973
      %2265 = vmatpush1.msra.mxu0 %v972
      %2266 = vmatprep.subr.mxu0 %v971
      %2267 = vmatpush1.msra.mxu0 %v970
      %2268 = vmatprep.subr.mxu0 %v969
      %2269 = vmatpush1.msra.mxu0 %v968
      %2270 = vmatprep.subr.mxu0 %v967
      %2271 = vmatpush1.msra.mxu0 %v966
      %2272 = vmatprep.subr.mxu0 %v965
      %2273 = vmatpush1.msra.mxu0 %v964
      %2274 = vmatprep.subr.mxu0 %v963
      %2275 = vmatpush1.msra.mxu0 %v962
      %2276 = vmatprep.subr.mxu0 %v1025
      %2277 = vmatpush2.msra.mxu0 %v1024
      %2278 = vmatprep.subr.mxu0 %v1023
      %2279 = vmatpush2.msra.mxu0 %v1022
      %2280 = vmatprep.subr.mxu0 %v1021
      %2281 = vmatpush2.msra.mxu0 %v1020
      %2282 = vmatprep.subr.mxu0 %v1019
      %2283 = vmatpush2.msra.mxu0 %v1018
      %2284 = vmatprep.subr.mxu0 %v1017
      %2285 = vmatpush2.msra.mxu0 %v1016
      %2286 = vmatprep.subr.mxu0 %v1015
      %2287 = vmatpush2.msra.mxu0 %v1014
      %2288 = vmatprep.subr.mxu0 %v1013
      %2289 = vmatpush2.msra.mxu0 %v1012
      %2290 = vmatprep.subr.mxu0 %v1011
      %2291 = vmatpush2.msra.mxu0 %v1010
      %2292 = vmatprep.subr.mxu0 %v1009
      %2293 = vmatpush2.msra.mxu0 %v1008
      %2294 = vmatprep.subr.mxu0 %v1007
      %2295 = vmatpush2.msra.mxu0 %v1006
      %2296 = vmatprep.subr.mxu0 %v1005
      %2297 = vmatpush2.msra.mxu0 %v1004
      %2298 = vmatprep.subr.mxu0 %v1003
      %2299 = vmatpush2.msra.mxu0 %v1002
      %2300 = vmatprep.subr.mxu0 %v1001
      %2301 = vmatpush2.msra.mxu0 %v1000
      %2302 = vmatprep.subr.mxu0 %v999
      %2303 = vmatpush2.msra.mxu0 %v998
      %2304 = vmatprep.subr.mxu0 %v997
      %2305 = vmatpush2.msra.mxu0 %v996
      %2306 = vmatprep.subr.mxu0 %v995
      %2307 = vmatpush2.msra.mxu0 %v994
      %2308 = vmatprep.mubr.f32.mxu0 %v2083
      %2309 = vmatmul.mubr.f32.gmra.mxu0 %v2080
      %v2310 = vpop.f32.mrf.mxu0
      %v2311 = vadd.f32 %v2234, %v2310
      %v2312 = vpop.f32.mrf.mxu0
      %v2313 = vadd.f32 %v2236, %v2312
      %2314 = vmatprep.mubr.f32.mxu0 %v2089
      %2315 = vmatmul.mubr.f32.gmra.mxu0 %v2088
      %v2316 = vpop.f32.mrf.mxu0
      %v2317 = vadd.f32 %v2240, %v2316
      %v2318 = vpop.f32.mrf.mxu0
      %v2319 = vadd.f32 %v2242, %v2318
      %2320 = vdwg.mxu0
      %v2321 = vadd.f32 %v1795, %v2311
      %v2322 = vadd.f32 %v1796, %v2313
      %v2323 = vadd.f32 %v1797, %v2317
      %v2324 = vadd.f32 %v1798, %v2319
      %v2325 = vadd.f32 %v1269, %v2321
      %v2326 = vadd.f32 %v1270, %v2322
      %v2327 = vadd.f32 %v1271, %v2323
      %v2328 = vadd.f32 %v1272, %v2324
      %v2333 = vrot.slane %v2325, 7
      %v2334 = vrot.slane %v2326, 7
      %v2335 = vrot.slane %v2327, 7
      %v2336 = vsel %vm341, %v2333, %v2335
      %v2337 = vrot.slane %v2328, 7
      %v2338 = vsel %vm341, %v2334, %v2337
      %v2343 = vsel %vm341, 0.0, %v2333
      %v2344 = vsel %vm341, 0.0, %v2334
      %v2345 = vrot.slane %v2325, 1
      %v2346 = vrot.slane %v2327, 1
      %v2347 = vsel %vm354, %v2345, %v2346
      %v2348 = vrot.slane %v2326, 1
      %v2349 = vrot.slane %v2328, 1
      %v2350 = vsel %vm354, %v2348, %v2349
      %v2355 = vsel %vm354, %v2346, 0.0
      %v2356 = vsel %vm354, %v2349, 0.0
      %2357 = vmatprep.subr.mxu0 %v398
      %2358 = vmatpush1.msra.mxu0 %v397
      %2359 = vmatprep.subr.mxu0 %v396
      %2360 = vmatpush1.msra.mxu0 %v395
      %2361 = vmatprep.subr.mxu0 %v394
      %2362 = vmatpush1.msra.mxu0 %v393
      %2363 = vmatprep.subr.mxu0 %v392
      %2364 = vmatpush1.msra.mxu0 %v391
      %2365 = vmatprep.subr.mxu0 %v390
      %2366 = vmatpush1.msra.mxu0 %v389
      %2367 = vmatprep.subr.mxu0 %v388
      %2368 = vmatpush1.msra.mxu0 %v387
      %2369 = vmatprep.subr.mxu0 %v386
      %2370 = vmatpush1.msra.mxu0 %v385
      %2371 = vmatprep.subr.mxu0 %v384
      %2372 = vmatpush1.msra.mxu0 %v383
      %2373 = vmatprep.subr.mxu0 %v382
      %2374 = vmatpush1.msra.mxu0 %v381
      %2375 = vmatprep.subr.mxu0 %v380
      %2376 = vmatpush1.msra.mxu0 %v379
      %2377 = vmatprep.subr.mxu0 %v378
      %2378 = vmatpush1.msra.mxu0 %v377
      %2379 = vmatprep.subr.mxu0 %v376
      %2380 = vmatpush1.msra.mxu0 %v375
      %2381 = vmatprep.subr.mxu0 %v374
      %2382 = vmatpush1.msra.mxu0 %v373
      %2383 = vmatprep.subr.mxu0 %v372
      %2384 = vmatpush1.msra.mxu0 %v371
      %2385 = vmatprep.subr.mxu0 %v370
      %2386 = vmatpush1.msra.mxu0 %v369
      %2387 = vmatprep.subr.mxu0 %v368
      %2388 = vmatpush1.msra.mxu0 %v367
      %2389 = vmatprep.subr.mxu0 %v430
      %2390 = vmatpush2.msra.mxu0 %v429
      %2391 = vmatprep.subr.mxu0 %v428
      %2392 = vmatpush2.msra.mxu0 %v427
      %2393 = vmatprep.subr.mxu0 %v426
      %2394 = vmatpush2.msra.mxu0 %v425
      %2395 = vmatprep.subr.mxu0 %v424
      %2396 = vmatpush2.msra.mxu0 %v423
      %2397 = vmatprep.subr.mxu0 %v422
      %2398 = vmatpush2.msra.mxu0 %v421
      %2399 = vmatprep.subr.mxu0 %v420
      %2400 = vmatpush2.msra.mxu0 %v419
      %2401 = vmatprep.subr.mxu0 %v418
      %2402 = vmatpush2.msra.mxu0 %v417
      %2403 = vmatprep.subr.mxu0 %v416
      %2404 = vmatpush2.msra.mxu0 %v415
      %2405 = vmatprep.subr.mxu0 %v414
      %2406 = vmatpush2.msra.mxu0 %v413
      %2407 = vmatprep.subr.mxu0 %v412
      %2408 = vmatpush2.msra.mxu0 %v411
      %2409 = vmatprep.subr.mxu0 %v410
      %2410 = vmatpush2.msra.mxu0 %v409
      %2411 = vmatprep.subr.mxu0 %v408
      %2412 = vmatpush2.msra.mxu0 %v407
      %2413 = vmatprep.subr.mxu0 %v406
      %2414 = vmatpush2.msra.mxu0 %v405
      %2415 = vmatprep.subr.mxu0 %v404
      %2416 = vmatpush2.msra.mxu0 %v403
      %2417 = vmatprep.subr.mxu0 %v402
      %2418 = vmatpush2.msra.mxu0 %v401
      %2419 = vmatprep.subr.mxu0 %v400
      %2420 = vmatpush2.msra.mxu0 %v399
      %2421 = vmatprep.mubr.f32.mxu0 %v2344
      %2422 = vmatmul.mubr.f32.gmra.mxu0 %v2343
      %v2423 = vpop.f32.mrf.mxu0
      %v2424 = vadd.f32 %v564, %v2423
      %v2425 = vpop.f32.mrf.mxu0
      %v2426 = vadd.f32 %v568, %v2425
      %2427 = vmatprep.mubr.f32.mxu0 %v2338
      %2428 = vmatmul.mubr.f32.gmra.mxu0 %v2336
      %v2429 = vpop.f32.mrf.mxu0
      %v2430 = vadd.f32 %v564, %v2429
      %v2431 = vpop.f32.mrf.mxu0
      %v2432 = vadd.f32 %v568, %v2431
      %2433 = vdwg.mxu0
      %2434 = vmatprep.subr.mxu0 %v462
      %2435 = vmatpush1.msra.mxu0 %v461
      %2436 = vmatprep.subr.mxu0 %v460
      %2437 = vmatpush1.msra.mxu0 %v459
      %2438 = vmatprep.subr.mxu0 %v458
      %2439 = vmatpush1.msra.mxu0 %v457
      %2440 = vmatprep.subr.mxu0 %v456
      %2441 = vmatpush1.msra.mxu0 %v455
      %2442 = vmatprep.subr.mxu0 %v454
      %2443 = vmatpush1.msra.mxu0 %v453
      %2444 = vmatprep.subr.mxu0 %v452
      %2445 = vmatpush1.msra.mxu0 %v451
      %2446 = vmatprep.subr.mxu0 %v450
      %2447 = vmatpush1.msra.mxu0 %v449
      %2448 = vmatprep.subr.mxu0 %v448
      %2449 = vmatpush1.msra.mxu0 %v447
      %2450 = vmatprep.subr.mxu0 %v446
      %2451 = vmatpush1.msra.mxu0 %v445
      %2452 = vmatprep.subr.mxu0 %v444
      %2453 = vmatpush1.msra.mxu0 %v443
      %2454 = vmatprep.subr.mxu0 %v442
      %2455 = vmatpush1.msra.mxu0 %v441
      %2456 = vmatprep.subr.mxu0 %v440
      %2457 = vmatpush1.msra.mxu0 %v439
      %2458 = vmatprep.subr.mxu0 %v438
      %2459 = vmatpush1.msra.mxu0 %v437
      %2460 = vmatprep.subr.mxu0 %v436
      %2461 = vmatpush1.msra.mxu0 %v435
      %2462 = vmatprep.subr.mxu0 %v434
      %2463 = vmatpush1.msra.mxu0 %v433
      %2464 = vmatprep.subr.mxu0 %v432
      %2465 = vmatpush1.msra.mxu0 %v431
      %2466 = vmatprep.subr.mxu0 %v494
      %2467 = vmatpush2.msra.mxu0 %v493
      %2468 = vmatprep.subr.mxu0 %v492
      %2469 = vmatpush2.msra.mxu0 %v491
      %2470 = vmatprep.subr.mxu0 %v490
      %2471 = vmatpush2.msra.mxu0 %v489
      %2472 = vmatprep.subr.mxu0 %v488
      %2473 = vmatpush2.msra.mxu0 %v487
      %2474 = vmatprep.subr.mxu0 %v486
      %2475 = vmatpush2.msra.mxu0 %v485
      %2476 = vmatprep.subr.mxu0 %v484
      %2477 = vmatpush2.msra.mxu0 %v483
      %2478 = vmatprep.subr.mxu0 %v482
      %2479 = vmatpush2.msra.mxu0 %v481
      %2480 = vmatprep.subr.mxu0 %v480
      %2481 = vmatpush2.msra.mxu0 %v479
      %2482 = vmatprep.subr.mxu0 %v478
      %2483 = vmatpush2.msra.mxu0 %v477
      %2484 = vmatprep.subr.mxu0 %v476
      %2485 = vmatpush2.msra.mxu0 %v475
      %2486 = vmatprep.subr.mxu0 %v474
      %2487 = vmatpush2.msra.mxu0 %v473
      %2488 = vmatprep.subr.mxu0 %v472
      %2489 = vmatpush2.msra.mxu0 %v471
      %2490 = vmatprep.subr.mxu0 %v470
      %2491 = vmatpush2.msra.mxu0 %v469
      %2492 = vmatprep.subr.mxu0 %v468
      %2493 = vmatpush2.msra.mxu0 %v467
      %2494 = vmatprep.subr.mxu0 %v466
      %2495 = vmatpush2.msra.mxu0 %v465
      %2496 = vmatprep.subr.mxu0 %v464
      %2497 = vmatpush2.msra.mxu0 %v463
      %2498 = vmatprep.mubr.f32.mxu0 %v2326
      %2499 = vmatmul.mubr.f32.gmra.mxu0 %v2325
      %v2500 = vpop.f32.mrf.mxu0
      %v2501 = vadd.f32 %v2424, %v2500
      %v2502 = vpop.f32.mrf.mxu0
      %v2503 = vadd.f32 %v2426, %v2502
      %2504 = vmatprep.mubr.f32.mxu0 %v2328
      %2505 = vmatmul.mubr.f32.gmra.mxu0 %v2327
      %v2506 = vpop.f32.mrf.mxu0
      %v2507 = vadd.f32 %v2430, %v2506
      %v2508 = vpop.f32.mrf.mxu0
      %v2509 = vadd.f32 %v2432, %v2508
      %2510 = vdwg.mxu0
      %2511 = vmatprep.subr.mxu0 %v526
      %2512 = vmatpush1.msra.mxu0 %v525
      %2513 = vmatprep.subr.mxu0 %v524
      %2514 = vmatpush1.msra.mxu0 %v523
      %2515 = vmatprep.subr.mxu0 %v522
      %2516 = vmatpush1.msra.mxu0 %v521
      %2517 = vmatprep.subr.mxu0 %v520
      %2518 = vmatpush1.msra.mxu0 %v519
      %2519 = vmatprep.subr.mxu0 %v518
      %2520 = vmatpush1.msra.mxu0 %v517
      %2521 = vmatprep.subr.mxu0 %v516
      %2522 = vmatpush1.msra.mxu0 %v515
      %2523 = vmatprep.subr.mxu0 %v514
      %2524 = vmatpush1.msra.mxu0 %v513
      %2525 = vmatprep.subr.mxu0 %v512
      %2526 = vmatpush1.msra.mxu0 %v511
      %2527 = vmatprep.subr.mxu0 %v510
      %2528 = vmatpush1.msra.mxu0 %v509
      %2529 = vmatprep.subr.mxu0 %v508
      %2530 = vmatpush1.msra.mxu0 %v507
      %2531 = vmatprep.subr.mxu0 %v506
      %2532 = vmatpush1.msra.mxu0 %v505
      %2533 = vmatprep.subr.mxu0 %v504
      %2534 = vmatpush1.msra.mxu0 %v503
      %2535 = vmatprep.subr.mxu0 %v502
      %2536 = vmatpush1.msra.mxu0 %v501
      %2537 = vmatprep.subr.mxu0 %v500
      %2538 = vmatpush1.msra.mxu0 %v499
      %2539 = vmatprep.subr.mxu0 %v498
      %2540 = vmatpush1.msra.mxu0 %v497
      %2541 = vmatprep.subr.mxu0 %v496
      %2542 = vmatpush1.msra.mxu0 %v495
      %2543 = vmatprep.subr.mxu0 %v558
      %2544 = vmatpush2.msra.mxu0 %v557
      %2545 = vmatprep.subr.mxu0 %v556
      %2546 = vmatpush2.msra.mxu0 %v555
      %2547 = vmatprep.subr.mxu0 %v554
      %2548 = vmatpush2.msra.mxu0 %v553
      %2549 = vmatprep.subr.mxu0 %v552
      %2550 = vmatpush2.msra.mxu0 %v551
      %2551 = vmatprep.subr.mxu0 %v550
      %2552 = vmatpush2.msra.mxu0 %v549
      %2553 = vmatprep.subr.mxu0 %v548
      %2554 = vmatpush2.msra.mxu0 %v547
      %2555 = vmatprep.subr.mxu0 %v546
      %2556 = vmatpush2.msra.mxu0 %v545
      %2557 = vmatprep.subr.mxu0 %v544
      %2558 = vmatpush2.msra.mxu0 %v543
      %2559 = vmatprep.subr.mxu0 %v542
      %2560 = vmatpush2.msra.mxu0 %v541
      %2561 = vmatprep.subr.mxu0 %v540
      %2562 = vmatpush2.msra.mxu0 %v539
      %2563 = vmatprep.subr.mxu0 %v538
      %2564 = vmatpush2.msra.mxu0 %v537
      %2565 = vmatprep.subr.mxu0 %v536
      %2566 = vmatpush2.msra.mxu0 %v535
      %2567 = vmatprep.subr.mxu0 %v534
      %2568 = vmatpush2.msra.mxu0 %v533
      %2569 = vmatprep.subr.mxu0 %v532
      %2570 = vmatpush2.msra.mxu0 %v531
      %2571 = vmatprep.subr.mxu0 %v530
      %2572 = vmatpush2.msra.mxu0 %v529
      %2573 = vmatprep.subr.mxu0 %v528
      %2574 = vmatpush2.msra.mxu0 %v527
      %2575 = vmatprep.mubr.f32.mxu0 %v2350
      %2576 = vmatmul.mubr.f32.gmra.mxu0 %v2347
      %v2577 = vpop.f32.mrf.mxu0
      %v2578 = vadd.f32 %v2501, %v2577
      %v2579 = vpop.f32.mrf.mxu0
      %v2580 = vadd.f32 %v2503, %v2579
      %2581 = vmatprep.mubr.f32.mxu0 %v2356
      %2582 = vmatmul.mubr.f32.gmra.mxu0 %v2355
      %v2583 = vpop.f32.mrf.mxu0
      %v2584 = vadd.f32 %v2507, %v2583
      %v2585 = vpop.f32.mrf.mxu0
      %v2586 = vadd.f32 %v2509, %v2585
      %2587 = vdwg.mxu0
      %v2588 = vmax.f32 %v2578, 0.0
      %v2589 = vmax.f32 %v2580, 0.0
      %v2590 = vmax.f32 %v2584, 0.0
      %v2591 = vmax.f32 %v2586, 0.0
      %v2596 = vrot.slane %v2588, 7
      %v2597 = vrot.slane %v2589, 7
      %v2598 = vrot.slane %v2590, 7
      %v2599 = vsel %vm341, %v2596, %v2598
      %v2600 = vrot.slane %v2591, 7
      %v2601 = vsel %vm341, %v2597, %v2600
      %v2606 = vsel %vm341, 0.0, %v2596
      %v2607 = vsel %vm341, 0.0, %v2597
      %v2608 = vrot.slane %v2588, 1
      %v2609 = vrot.slane %v2590, 1
      %v2610 = vsel %vm354, %v2608, %v2609
      %v2611 = vrot.slane %v2589, 1
      %v2612 = vrot.slane %v2591, 1
      %v2613 = vsel %vm354, %v2611, %v2612
      %v2618 = vsel %vm354, %v2609, 0.0
      %v2619 = vsel %vm354, %v2612, 0.0
      %2620 = vmatprep.subr.mxu0 %v865
      %2621 = vmatpush1.msra.mxu0 %v864
      %2622 = vmatprep.subr.mxu0 %v863
      %2623 = vmatpush1.msra.mxu0 %v862
      %2624 = vmatprep.subr.mxu0 %v861
      %2625 = vmatpush1.msra.mxu0 %v860
      %2626 = vmatprep.subr.mxu0 %v859
      %2627 = vmatpush1.msra.mxu0 %v858
      %2628 = vmatprep.subr.mxu0 %v857
      %2629 = vmatpush1.msra.mxu0 %v856
      %2630 = vmatprep.subr.mxu0 %v855
      %2631 = vmatpush1.msra.mxu0 %v854
      %2632 = vmatprep.subr.mxu0 %v853
      %2633 = vmatpush1.msra.mxu0 %v852
      %2634 = vmatprep.subr.mxu0 %v851
      %2635 = vmatpush1.msra.mxu0 %v850
      %2636 = vmatprep.subr.mxu0 %v849
      %2637 = vmatpush1.msra.mxu0 %v848
      %2638 = vmatprep.subr.mxu0 %v847
      %2639 = vmatpush1.msra.mxu0 %v846
      %2640 = vmatprep.subr.mxu0 %v845
      %2641 = vmatpush1.msra.mxu0 %v844
      %2642 = vmatprep.subr.mxu0 %v843
      %2643 = vmatpush1.msra.mxu0 %v842
      %2644 = vmatprep.subr.mxu0 %v841
      %2645 = vmatpush1.msra.mxu0 %v840
      %2646 = vmatprep.subr.mxu0 %v839
      %2647 = vmatpush1.msra.mxu0 %v838
      %2648 = vmatprep.subr.mxu0 %v837
      %2649 = vmatpush1.msra.mxu0 %v836
      %2650 = vmatprep.subr.mxu0 %v835
      %2651 = vmatpush1.msra.mxu0 %v834
      %2652 = vmatprep.subr.mxu0 %v897
      %2653 = vmatpush2.msra.mxu0 %v896
      %2654 = vmatprep.subr.mxu0 %v895
      %2655 = vmatpush2.msra.mxu0 %v894
      %2656 = vmatprep.subr.mxu0 %v893
      %2657 = vmatpush2.msra.mxu0 %v892
      %2658 = vmatprep.subr.mxu0 %v891
      %2659 = vmatpush2.msra.mxu0 %v890
      %2660 = vmatprep.subr.mxu0 %v889
      %2661 = vmatpush2.msra.mxu0 %v888
      %2662 = vmatprep.subr.mxu0 %v887
      %2663 = vmatpush2.msra.mxu0 %v886
      %2664 = vmatprep.subr.mxu0 %v885
      %2665 = vmatpush2.msra.mxu0 %v884
      %2666 = vmatprep.subr.mxu0 %v883
      %2667 = vmatpush2.msra.mxu0 %v882
      %2668 = vmatprep.subr.mxu0 %v881
      %2669 = vmatpush2.msra.mxu0 %v880
      %2670 = vmatprep.subr.mxu0 %v879
      %2671 = vmatpush2.msra.mxu0 %v878
      %2672 = vmatprep.subr.mxu0 %v877
      %2673 = vmatpush2.msra.mxu0 %v876
      %2674 = vmatprep.subr.mxu0 %v875
      %2675 = vmatpush2.msra.mxu0 %v874
      %2676 = vmatprep.subr.mxu0 %v873
      %2677 = vmatpush2.msra.mxu0 %v872
      %2678 = vmatprep.subr.mxu0 %v871
      %2679 = vmatpush2.msra.mxu0 %v870
      %2680 = vmatprep.subr.mxu0 %v869
      %2681 = vmatpush2.msra.mxu0 %v868
      %2682 = vmatprep.subr.mxu0 %v867
      %2683 = vmatpush2.msra.mxu0 %v866
      %2684 = vmatprep.mubr.f32.mxu0 %v2607
      %2685 = vmatmul.mubr.f32.gmra.mxu0 %v2606
      %v2686 = vpop.f32.mrf.mxu0
      %v2687 = vadd.f32 %v1031, %v2686
      %v2688 = vpop.f32.mrf.mxu0
      %v2689 = vadd.f32 %v1035, %v2688
      %2690 = vmatprep.mubr.f32.mxu0 %v2601
      %2691 = vmatmul.mubr.f32.gmra.mxu0 %v2599
      %v2692 = vpop.f32.mrf.mxu0
      %v2693 = vadd.f32 %v1031, %v2692
      %v2694 = vpop.f32.mrf.mxu0
      %v2695 = vadd.f32 %v1035, %v2694
      %2696 = vdwg.mxu0
      %2697 = vmatprep.subr.mxu0 %v929
      %2698 = vmatpush1.msra.mxu0 %v928
      %2699 = vmatprep.subr.mxu0 %v927
      %2700 = vmatpush1.msra.mxu0 %v926
      %2701 = vmatprep.subr.mxu0 %v925
      %2702 = vmatpush1.msra.mxu0 %v924
      %2703 = vmatprep.subr.mxu0 %v923
      %2704 = vmatpush1.msra.mxu0 %v922
      %2705 = vmatprep.subr.mxu0 %v921
      %2706 = vmatpush1.msra.mxu0 %v920
      %2707 = vmatprep.subr.mxu0 %v919
      %2708 = vmatpush1.msra.mxu0 %v918
      %2709 = vmatprep.subr.mxu0 %v917
      %2710 = vmatpush1.msra.mxu0 %v916
      %2711 = vmatprep.subr.mxu0 %v915
      %2712 = vmatpush1.msra.mxu0 %v914
      %2713 = vmatprep.subr.mxu0 %v913
      %2714 = vmatpush1.msra.mxu0 %v912
      %2715 = vmatprep.subr.mxu0 %v911
      %2716 = vmatpush1.msra.mxu0 %v910
      %2717 = vmatprep.subr.mxu0 %v909
      %2718 = vmatpush1.msra.mxu0 %v908
      %2719 = vmatprep.subr.mxu0 %v907
      %2720 = vmatpush1.msra.mxu0 %v906
      %2721 = vmatprep.subr.mxu0 %v905
      %2722 = vmatpush1.msra.mxu0 %v904
      %2723 = vmatprep.subr.mxu0 %v903
      %2724 = vmatpush1.msra.mxu0 %v902
      %2725 = vmatprep.subr.mxu0 %v901
      %2726 = vmatpush1.msra.mxu0 %v900
      %2727 = vmatprep.subr.mxu0 %v899
      %2728 = vmatpush1.msra.mxu0 %v898
      %2729 = vmatprep.subr.mxu0 %v961
      %2730 = vmatpush2.msra.mxu0 %v960
      %2731 = vmatprep.subr.mxu0 %v959
      %2732 = vmatpush2.msra.mxu0 %v958
      %2733 = vmatprep.subr.mxu0 %v957
      %2734 = vmatpush2.msra.mxu0 %v956
      %2735 = vmatprep.subr.mxu0 %v955
      %2736 = vmatpush2.msra.mxu0 %v954
      %2737 = vmatprep.subr.mxu0 %v953
      %2738 = vmatpush2.msra.mxu0 %v952
      %2739 = vmatprep.subr.mxu0 %v951
      %2740 = vmatpush2.msra.mxu0 %v950
      %2741 = vmatprep.subr.mxu0 %v949
      %2742 = vmatpush2.msra.mxu0 %v948
      %2743 = vmatprep.subr.mxu0 %v947
      %2744 = vmatpush2.msra.mxu0 %v946
      %2745 = vmatprep.subr.mxu0 %v945
      %2746 = vmatpush2.msra.mxu0 %v944
      %2747 = vmatprep.subr.mxu0 %v943
      %2748 = vmatpush2.msra.mxu0 %v942
      %2749 = vmatprep.subr.mxu0 %v941
      %2750 = vmatpush2.msra.mxu0 %v940
      %2751 = vmatprep.subr.mxu0 %v939
      %2752 = vmatpush2.msra.mxu0 %v938
      %2753 = vmatprep.subr.mxu0 %v937
      %2754 = vmatpush2.msra.mxu0 %v936
      %2755 = vmatprep.subr.mxu0 %v935
      %2756 = vmatpush2.msra.mxu0 %v934
      %2757 = vmatprep.subr.mxu0 %v933
      %2758 = vmatpush2.msra.mxu0 %v932
      %2759 = vmatprep.subr.mxu0 %v931
      %2760 = vmatpush2.msra.mxu0 %v930
      %2761 = vmatprep.mubr.f32.mxu0 %v2589
      %2762 = vmatmul.mubr.f32.gmra.mxu0 %v2588
      %v2763 = vpop.f32.mrf.mxu0
      %v2764 = vadd.f32 %v2687, %v2763
      %v2765 = vpop.f32.mrf.mxu0
      %v2766 = vadd.f32 %v2689, %v2765
      %2767 = vmatprep.mubr.f32.mxu0 %v2591
      %2768 = vmatmul.mubr.f32.gmra.mxu0 %v2590
      %v2769 = vpop.f32.mrf.mxu0
      %v2770 = vadd.f32 %v2693, %v2769
      %v2771 = vpop.f32.mrf.mxu0
      %v2772 = vadd.f32 %v2695, %v2771
      %2773 = vdwg.mxu0
      %2774 = vmatprep.subr.mxu0 %v993
      %2775 = vmatpush1.msra.mxu0 %v992
      %2776 = vmatprep.subr.mxu0 %v991
      %2777 = vmatpush1.msra.mxu0 %v990
      %2778 = vmatprep.subr.mxu0 %v989
      %2779 = vmatpush1.msra.mxu0 %v988
      %2780 = vmatprep.subr.mxu0 %v987
      %2781 = vmatpush1.msra.mxu0 %v986
      %2782 = vmatprep.subr.mxu0 %v985
      %2783 = vmatpush1.msra.mxu0 %v984
      %2784 = vmatprep.subr.mxu0 %v983
      %2785 = vmatpush1.msra.mxu0 %v982
      %2786 = vmatprep.subr.mxu0 %v981
      %2787 = vmatpush1.msra.mxu0 %v980
      %2788 = vmatprep.subr.mxu0 %v979
      %2789 = vmatpush1.msra.mxu0 %v978
      %2790 = vmatprep.subr.mxu0 %v977
      %2791 = vmatpush1.msra.mxu0 %v976
      %2792 = vmatprep.subr.mxu0 %v975
      %2793 = vmatpush1.msra.mxu0 %v974
      %2794 = vmatprep.subr.mxu0 %v973
      %2795 = vmatpush1.msra.mxu0 %v972
      %2796 = vmatprep.subr.mxu0 %v971
      %2797 = vmatpush1.msra.mxu0 %v970
      %2798 = vmatprep.subr.mxu0 %v969
      %2799 = vmatpush1.msra.mxu0 %v968
      %2800 = vmatprep.subr.mxu0 %v967
      %2801 = vmatpush1.msra.mxu0 %v966
      %2802 = vmatprep.subr.mxu0 %v965
      %2803 = vmatpush1.msra.mxu0 %v964
      %2804 = vmatprep.subr.mxu0 %v963
      %2805 = vmatpush1.msra.mxu0 %v962
      %2806 = vmatprep.subr.mxu0 %v1025
      %2807 = vmatpush2.msra.mxu0 %v1024
      %2808 = vmatprep.subr.mxu0 %v1023
      %2809 = vmatpush2.msra.mxu0 %v1022
      %2810 = vmatprep.subr.mxu0 %v1021
      %2811 = vmatpush2.msra.mxu0 %v1020
      %2812 = vmatprep.subr.mxu0 %v1019
      %2813 = vmatpush2.msra.mxu0 %v1018
      %2814 = vmatprep.subr.mxu0 %v1017
      %2815 = vmatpush2.msra.mxu0 %v1016
      %2816 = vmatprep.subr.mxu0 %v1015
      %2817 = vmatpush2.msra.mxu0 %v1014
      %2818 = vmatprep.subr.mxu0 %v1013
      %2819 = vmatpush2.msra.mxu0 %v1012
      %2820 = vmatprep.subr.mxu0 %v1011
      %2821 = vmatpush2.msra.mxu0 %v1010
      %2822 = vmatprep.subr.mxu0 %v1009
      %2823 = vmatpush2.msra.mxu0 %v1008
      %2824 = vmatprep.subr.mxu0 %v1007
      %2825 = vmatpush2.msra.mxu0 %v1006
      %2826 = vmatprep.subr.mxu0 %v1005
      %2827 = vmatpush2.msra.mxu0 %v1004
      %2828 = vmatprep.subr.mxu0 %v1003
      %2829 = vmatpush2.msra.mxu0 %v1002
      %2830 = vmatprep.subr.mxu0 %v1001
      %2831 = vmatpush2.msra.mxu0 %v1000
      %2832 = vmatprep.subr.mxu0 %v999
      %2833 = vmatpush2.msra.mxu0 %v998
      %2834 = vmatprep.subr.mxu0 %v997
      %2835 = vmatpush2.msra.mxu0 %v996
      %2836 = vmatprep.subr.mxu0 %v995
      %2837 = vmatpush2.msra.mxu0 %v994
      %2838 = vmatprep.mubr.f32.mxu0 %v2613
      %2839 = vmatmul.mubr.f32.gmra.mxu0 %v2610
      %v2840 = vpop.f32.mrf.mxu0
      %v2841 = vadd.f32 %v2764, %v2840
      %v2842 = vpop.f32.mrf.mxu0
      %v2843 = vadd.f32 %v2766, %v2842
      %2844 = vmatprep.mubr.f32.mxu0 %v2619
      %2845 = vmatmul.mubr.f32.gmra.mxu0 %v2618
      %v2846 = vpop.f32.mrf.mxu0
      %v2847 = vadd.f32 %v2770, %v2846
      %v2848 = vpop.f32.mrf.mxu0
      %v2849 = vadd.f32 %v2772, %v2848
      %2850 = vdwg.mxu0
      %v2851 = vadd.f32 %v2325, %v2841
      %v2852 = vadd.f32 %v2326, %v2843
      %v2853 = vadd.f32 %v2327, %v2847
      %v2854 = vadd.f32 %v2328, %v2849
      %v2855 = vadd.f32 %v333, %v2851
      %v2856 = vadd.f32 %v334, %v2852
      %v2857 = vadd.f32 %v335, %v2853
      %v2858 = vadd.f32 %v336, %v2854
      %2863 = vrot.lane.b32.xlu0 %v2855, 120
      %v2864 = vpop.permute.xlu0 %2863
      %2865 = vrot.lane.b32.xlu0 %v2856, 120
      %v2866 = vpop.permute.xlu0 %2865
      %2867 = vrot.lane.b32.xlu0 %v2857, 120
      %v2868 = vpop.permute.xlu0 %2867
      %2869 = vrot.lane.b32.xlu0 %v2858, 120
      %v2870 = vpop.permute.xlu0 %2869
      %vm2871 = vcmask 982016
      %v2872 = vsel %vm2871, %v2864, %v2866
      %v2873 = vsel %vm2871, %v2868, %v2870
      %v2880 = vsel %vm2871, %v2866, %v2864
      %v2881 = vsel %vm2871, %v2870, %v2868
      %v2882 = vmax.f32 %v2855, %v2872
      %v2883 = vmax.f32 %v2856, %v2880
      %v2884 = vmax.f32 %v2857, %v2873
      %v2885 = vmax.f32 %v2858, %v2881
      %2890 = vrot.lane.b32.xlu0 %v2882, 124
      %v2891 = vpop.permute.xlu0 %2890
      %2892 = vrot.lane.b32.xlu0 %v2883, 124
      %v2893 = vpop.permute.xlu0 %2892
      %2894 = vrot.lane.b32.xlu0 %v2884, 124
      %v2895 = vpop.permute.xlu0 %2894
      %2896 = vrot.lane.b32.xlu0 %v2885, 124
      %v2897 = vpop.permute.xlu0 %2896
      %vm2898 = vcmask 1014784
      %v2899 = vsel %vm2898, %v2891, %v2893
      %v2900 = vsel %vm2898, %v2895, %v2897
      %v2907 = vsel %vm2898, %v2893, %v2891
      %v2908 = vsel %vm2898, %v2897, %v2895
      %v2909 = vmax.f32 %v2882, %v2899
      %v2910 = vmax.f32 %v2883, %v2907
      %v2911 = vmax.f32 %v2884, %v2900
      %v2912 = vmax.f32 %v2885, %v2908
      %2917 = vrot.lane.b32.xlu0 %v2909, 126
      %v2918 = vpop.permute.xlu0 %2917
      %2919 = vrot.lane.b32.xlu0 %v2910, 126
      %v2920 = vpop.permute.xlu0 %2919
      %2921 = vrot.lane.b32.xlu0 %v2911, 126
      %v2922 = vpop.permute.xlu0 %2921
      %2923 = vrot.lane.b32.xlu0 %v2912, 126
      %v2924 = vpop.permute.xlu0 %2923
      %vm2925 = vcmask 1031168
      %v2926 = vsel %vm2925, %v2918, %v2920
      %v2927 = vsel %vm2925, %v2922, %v2924
      %v2934 = vsel %vm2925, %v2920, %v2918
      %v2935 = vsel %vm2925, %v2924, %v2922
      %v2936 = vmax.f32 %v2909, %v2926
      %v2937 = vmax.f32 %v2910, %v2934
      %v2938 = vmax.f32 %v2911, %v2927
      %v2939 = vmax.f32 %v2912, %v2935
      %2944 = vrot.lane.b32.xlu0 %v2936, 127
      %v2945 = vpop.permute.xlu0 %2944
      %2946 = vrot.lane.b32.xlu0 %v2937, 127
      %v2947 = vpop.permute.xlu0 %2946
      %2948 = vrot.lane.b32.xlu0 %v2938, 127
      %v2949 = vpop.permute.xlu0 %2948
      %2950 = vrot.lane.b32.xlu0 %v2939, 127
      %v2951 = vpop.permute.xlu0 %2950
      %vm2952 = vcmask 1039360
      %v2953 = vsel %vm2952, %v2945, %v2947
      %v2954 = vsel %vm2952, %v2949, %v2951
      %v2961 = vsel %vm2952, %v2947, %v2945
      %v2962 = vsel %vm2952, %v2951, %v2949
      %v2963 = vmax.f32 %v2936, %v2953
      %v2964 = vmax.f32 %v2937, %v2961
      %v2965 = vmax.f32 %v2938, %v2954
      %v2966 = vmax.f32 %v2939, %v2962
      %v2967 = vld [vmem:[%s6] sm:$0xff]
      %v2968 = vld [vmem:[%s6 + $0x8] sm:$0xff]
      %v2969 = vld [vmem:[%s6 + $0x10] sm:$0xff]
      %v2970 = vld [vmem:[%s6 + $0x18] sm:$0xff]
      %v2971 = vld [vmem:[%s6 + $0x20] sm:$0xff]
      %v2972 = vld [vmem:[%s6 + $0x28] sm:$0xff]
      %v2973 = vld [vmem:[%s6 + $0x30] sm:$0xff]
      %v2974 = vld [vmem:[%s6 + $0x38] sm:$0xff]
      %v2975 = vld [vmem:[%s6 + $0x40] sm:$0xff]
      %v2976 = vld [vmem:[%s6 + $0x48] sm:$0xff]
      %v2977 = vld [vmem:[%s6 + $0x50] sm:$0xff]
      %v2978 = vld [vmem:[%s6 + $0x58] sm:$0xff]
      %v2979 = vld [vmem:[%s6 + $0x60] sm:$0xff]
      %v2980 = vld [vmem:[%s6 + $0x68] sm:$0xff]
      %v2981 = vld [vmem:[%s6 + $0x70] sm:$0xff]
      %v2982 = vld [vmem:[%s6 + $0x78] sm:$0xff]
      %v2983 = vld [vmem:[%s6 + $0x80] sm:$0xff]
      %v2984 = vld [vmem:[%s6 + $0x88] sm:$0xff]
      %v2985 = vld [vmem:[%s6 + $0x90] sm:$0xff]
      %v2986 = vld [vmem:[%s6 + $0x98] sm:$0xff]
      %v2987 = vld [vmem:[%s6 + $0xa0] sm:$0xff]
      %v2988 = vld [vmem:[%s6 + $0xa8] sm:$0xff]
      %v2989 = vld [vmem:[%s6 + $0xb0] sm:$0xff]
      %v2990 = vld [vmem:[%s6 + $0xb8] sm:$0xff]
      %v2991 = vld [vmem:[%s6 + $0xc0] sm:$0xff]
      %v2992 = vld [vmem:[%s6 + $0xc8] sm:$0xff]
      %v2993 = vld [vmem:[%s6 + $0xd0] sm:$0xff]
      %v2994 = vld [vmem:[%s6 + $0xd8] sm:$0xff]
      %v2995 = vld [vmem:[%s6 + $0xe0] sm:$0xff]
      %v2996 = vld [vmem:[%s6 + $0xe8] sm:$0xff]
      %v2997 = vld [vmem:[%s6 + $0xf0] sm:$0xff]
      %v2998 = vld [vmem:[%s6 + $0xf8] sm:$0xff]
      %2999 = vmatprep.subr.mxu0 0.0
      %3000 = vmatpush1.msra.mxu0 %v2982
      %3001 = vmatprep.subr.mxu0 0.0
      %3002 = vmatpush1.msra.mxu0 %v2981
      %3003 = vmatprep.subr.mxu0 0.0
      %3004 = vmatpush1.msra.mxu0 %v2980
      %3005 = vmatprep.subr.mxu0 0.0
      %3006 = vmatpush1.msra.mxu0 %v2979
      %3007 = vmatprep.subr.mxu0 0.0
      %3008 = vmatpush1.msra.mxu0 %v2978
      %3009 = vmatprep.subr.mxu0 0.0
      %3010 = vmatpush1.msra.mxu0 %v2977
      %3011 = vmatprep.subr.mxu0 0.0
      %3012 = vmatpush1.msra.mxu0 %v2976
      %3013 = vmatprep.subr.mxu0 0.0
      %3014 = vmatpush1.msra.mxu0 %v2975
      %3015 = vmatprep.subr.mxu0 0.0
      %3016 = vmatpush1.msra.mxu0 %v2974
      %3017 = vmatprep.subr.mxu0 0.0
      %3018 = vmatpush1.msra.mxu0 %v2973
      %3019 = vmatprep.subr.mxu0 0.0
      %3020 = vmatpush1.msra.mxu0 %v2972
      %3021 = vmatprep.subr.mxu0 0.0
      %3022 = vmatpush1.msra.mxu0 %v2971
      %3023 = vmatprep.subr.mxu0 0.0
      %3024 = vmatpush1.msra.mxu0 %v2970
      %3025 = vmatprep.subr.mxu0 0.0
      %3026 = vmatpush1.msra.mxu0 %v2969
      %3027 = vmatprep.subr.mxu0 0.0
      %3028 = vmatpush1.msra.mxu0 %v2968
      %3029 = vmatprep.subr.mxu0 0.0
      %3030 = vmatpush1.msra.mxu0 %v2967
      %3031 = vmatprep.subr.mxu0 0.0
      %3032 = vmatpush2.msra.mxu0 %v2998
      %3033 = vmatprep.subr.mxu0 0.0
      %3034 = vmatpush2.msra.mxu0 %v2997
      %3035 = vmatprep.subr.mxu0 0.0
      %3036 = vmatpush2.msra.mxu0 %v2996
      %3037 = vmatprep.subr.mxu0 0.0
      %3038 = vmatpush2.msra.mxu0 %v2995
      %3039 = vmatprep.subr.mxu0 0.0
      %3040 = vmatpush2.msra.mxu0 %v2994
      %3041 = vmatprep.subr.mxu0 0.0
      %3042 = vmatpush2.msra.mxu0 %v2993
      %3043 = vmatprep.subr.mxu0 0.0
      %3044 = vmatpush2.msra.mxu0 %v2992
      %3045 = vmatprep.subr.mxu0 0.0
      %3046 = vmatpush2.msra.mxu0 %v2991
      %3047 = vmatprep.subr.mxu0 0.0
      %3048 = vmatpush2.msra.mxu0 %v2990
      %3049 = vmatprep.subr.mxu0 0.0
      %3050 = vmatpush2.msra.mxu0 %v2989
      %3051 = vmatprep.subr.mxu0 0.0
      %3052 = vmatpush2.msra.mxu0 %v2988
      %3053 = vmatprep.subr.mxu0 0.0
      %3054 = vmatpush2.msra.mxu0 %v2987
      %3055 = vmatprep.subr.mxu0 0.0
      %3056 = vmatpush2.msra.mxu0 %v2986
      %3057 = vmatprep.subr.mxu0 0.0
      %3058 = vmatpush2.msra.mxu0 %v2985
      %3059 = vmatprep.subr.mxu0 0.0
      %3060 = vmatpush2.msra.mxu0 %v2984
      %3061 = vmatprep.subr.mxu0 0.0
      %3062 = vmatpush2.msra.mxu0 %v2983
      %3063 = vmatprep.mubr.f32.mxu0 %v2964
      %3064 = vmatmul.mubr.f32.gmra.mxu0 %v2963
      %v3065 = vpop.f32.mrf.mxu0
      %v3066 = vadd.f32 0.0, %v3065
      %v3067 = vpop.f32.mrf.mxu0
      %3068 = vmatprep.mubr.f32.mxu0 %v2966
      %3069 = vmatmul.mubr.f32.gmra.mxu0 %v2965
      %v3070 = vpop.f32.mrf.mxu0
      %v3071 = vadd.f32 0.0, %v3070
      %v3072 = vpop.f32.mrf.mxu0
      %3073 = vdwg.mxu0
      %v3074 = vld [vmem:[%s7] sm:$0xff]
      %v3075 = vld [vmem:[%s7 + $0x8] sm:$0xff]
      %v3076 = vld [vmem:[%s7 + $0x10] sm:$0xff]
      %v3077 = vld [vmem:[%s7 + $0x18] sm:$0xff]
      %v3078 = vld [vmem:[%s7 + $0x20] sm:$0xff]
      %v3079 = vld [vmem:[%s7 + $0x28] sm:$0xff]
      %v3080 = vld [vmem:[%s7 + $0x30] sm:$0xff]
      %v3081 = vld [vmem:[%s7 + $0x38] sm:$0xff]
      %v3082 = vld [vmem:[%s7 + $0x40] sm:$0xff]
      %v3083 = vld [vmem:[%s7 + $0x48] sm:$0xff]
      %v3084 = vld [vmem:[%s7 + $0x50] sm:$0xff]
      %v3085 = vld [vmem:[%s7 + $0x58] sm:$0xff]
      %v3086 = vld [vmem:[%s7 + $0x60] sm:$0xff]
      %v3087 = vld [vmem:[%s7 + $0x68] sm:$0xff]
      %v3088 = vld [vmem:[%s7 + $0x70] sm:$0xff]
      %v3089 = vld [vmem:[%s7 + $0x78] sm:$0xff]
      %v3090 = vld [vmem:[%s7 + $0x80] sm:$0xff]
      %v3091 = vld [vmem:[%s7 + $0x88] sm:$0xff]
      %v3092 = vld [vmem:[%s7 + $0x90] sm:$0xff]
      %v3093 = vld [vmem:[%s7 + $0x98] sm:$0xff]
      %v3094 = vld [vmem:[%s7 + $0xa0] sm:$0xff]
      %v3095 = vld [vmem:[%s7 + $0xa8] sm:$0xff]
      %v3096 = vld [vmem:[%s7 + $0xb0] sm:$0xff]
      %v3097 = vld [vmem:[%s7 + $0xb8] sm:$0xff]
      %v3098 = vld [vmem:[%s7 + $0xc0] sm:$0xff]
      %v3099 = vld [vmem:[%s7 + $0xc8] sm:$0xff]
      %v3100 = vld [vmem:[%s7 + $0xd0] sm:$0xff]
      %v3101 = vld [vmem:[%s7 + $0xd8] sm:$0xff]
      %v3102 = vld [vmem:[%s7 + $0xe0] sm:$0xff]
      %v3103 = vld [vmem:[%s7 + $0xe8] sm:$0xff]
      %v3104 = vld [vmem:[%s7 + $0xf0] sm:$0xff]
      %v3105 = vld [vmem:[%s7 + $0xf8] sm:$0xff]
      %3106 = vmatprep.subr.mxu0 0.0
      %3107 = vmatpush1.msra.mxu0 %v3089
      %3108 = vmatprep.subr.mxu0 0.0
      %3109 = vmatpush1.msra.mxu0 %v3088
      %3110 = vmatprep.subr.mxu0 0.0
      %3111 = vmatpush1.msra.mxu0 %v3087
      %3112 = vmatprep.subr.mxu0 0.0
      %3113 = vmatpush1.msra.mxu0 %v3086
      %3114 = vmatprep.subr.mxu0 0.0
      %3115 = vmatpush1.msra.mxu0 %v3085
      %3116 = vmatprep.subr.mxu0 0.0
      %3117 = vmatpush1.msra.mxu0 %v3084
      %3118 = vmatprep.subr.mxu0 0.0
      %3119 = vmatpush1.msra.mxu0 %v3083
      %3120 = vmatprep.subr.mxu0 0.0
      %3121 = vmatpush1.msra.mxu0 %v3082
      %3122 = vmatprep.subr.mxu0 0.0
      %3123 = vmatpush1.msra.mxu0 %v3081
      %3124 = vmatprep.subr.mxu0 0.0
      %3125 = vmatpush1.msra.mxu0 %v3080
      %3126 = vmatprep.subr.mxu0 0.0
      %3127 = vmatpush1.msra.mxu0 %v3079
      %3128 = vmatprep.subr.mxu0 0.0
      %3129 = vmatpush1.msra.mxu0 %v3078
      %3130 = vmatprep.subr.mxu0 0.0
      %3131 = vmatpush1.msra.mxu0 %v3077
      %3132 = vmatprep.subr.mxu0 0.0
      %3133 = vmatpush1.msra.mxu0 %v3076
      %3134 = vmatprep.subr.mxu0 0.0
      %3135 = vmatpush1.msra.mxu0 %v3075
      %3136 = vmatprep.subr.mxu0 0.0
      %3137 = vmatpush1.msra.mxu0 %v3074
      %3138 = vmatprep.subr.mxu0 0.0
      %3139 = vmatpush2.msra.mxu0 %v3105
      %3140 = vmatprep.subr.mxu0 0.0
      %3141 = vmatpush2.msra.mxu0 %v3104
      %3142 = vmatprep.subr.mxu0 0.0
      %3143 = vmatpush2.msra.mxu0 %v3103
      %3144 = vmatprep.subr.mxu0 0.0
      %3145 = vmatpush2.msra.mxu0 %v3102
      %3146 = vmatprep.subr.mxu0 0.0
      %3147 = vmatpush2.msra.mxu0 %v3101
      %3148 = vmatprep.subr.mxu0 0.0
      %3149 = vmatpush2.msra.mxu0 %v3100
      %3150 = vmatprep.subr.mxu0 0.0
      %3151 = vmatpush2.msra.mxu0 %v3099
      %3152 = vmatprep.subr.mxu0 0.0
      %3153 = vmatpush2.msra.mxu0 %v3098
      %3154 = vmatprep.subr.mxu0 0.0
      %3155 = vmatpush2.msra.mxu0 %v3097
      %3156 = vmatprep.subr.mxu0 0.0
      %3157 = vmatpush2.msra.mxu0 %v3096
      %3158 = vmatprep.subr.mxu0 0.0
      %3159 = vmatpush2.msra.mxu0 %v3095
      %3160 = vmatprep.subr.mxu0 0.0
      %3161 = vmatpush2.msra.mxu0 %v3094
      %3162 = vmatprep.subr.mxu0 0.0
      %3163 = vmatpush2.msra.mxu0 %v3093
      %3164 = vmatprep.subr.mxu0 0.0
      %3165 = vmatpush2.msra.mxu0 %v3092
      %3166 = vmatprep.subr.mxu0 0.0
      %3167 = vmatpush2.msra.mxu0 %v3091
      %3168 = vmatprep.subr.mxu0 0.0
      %3169 = vmatpush2.msra.mxu0 %v3090
      %3170 = vmatprep.mubr.f32.mxu0 %v2856
      %3171 = vmatmul.mubr.f32.gmra.mxu0 %v2855
      %v3172 = vpop.f32.mrf.mxu0
      %v3173 = vadd.f32 0.0, %v3172
      %v3174 = vpop.f32.mrf.mxu0
      %3175 = vmatprep.mubr.f32.mxu0 %v2858
      %3176 = vmatmul.mubr.f32.gmra.mxu0 %v2857
      %v3177 = vpop.f32.mrf.mxu0
      %v3178 = vadd.f32 0.0, %v3177
      %v3179 = vpop.f32.mrf.mxu0
      %3180 = vdwg.mxu0
      %vm3183 = vcmask 1041408
      %v3184 = vrot.slane %v3066, 6
      %v3185 = vrot.slane %v3071, 6
      %v3186 = vsel %vm3183, %v3184, %v3185
      %v3189 = vsel %vm3183, 0.0, %v3184
      %v3190 = vrot.slane %v3066, 7
      %v3191 = vrot.slane %v3071, 7
      %v3192 = vsel %vm341, %v3190, %v3191
      %v3194 = vsel %vm341, 0.0, %v3190
      %v3195 = vrot.slane %v3066, 1
      %v3196 = vrot.slane %v3071, 1
      %v3197 = vsel %vm354, %v3195, %v3196
      %v3199 = vsel %vm354, %v3196, 0.0
      %vm3200 = vcmask 1045504
      %v3201 = vrot.slane %v3066, 2
      %v3202 = vrot.slane %v3071, 2
      %v3203 = vsel %vm3200, %v3201, %v3202
      %v3205 = vsel %vm3200, %v3202, 0.0
      %v3208 = vrot.slane %v3173, 6
      %v3209 = vrot.slane %v3178, 6
      %v3210 = vsel %vm3183, %v3208, %v3209
      %v3212 = vsel %vm3183, 0.0, %v3208
      %v3213 = vrot.slane %v3173, 7
      %v3214 = vrot.slane %v3178, 7
      %v3215 = vsel %vm341, %v3213, %v3214
      %v3217 = vsel %vm341, 0.0, %v3213
      %v3218 = vrot.slane %v3173, 1
      %v3219 = vrot.slane %v3178, 1
      %v3220 = vsel %vm354, %v3218, %v3219
      %v3223 = vsel %vm354, %v3219, 0.0
      %v3224 = vrot.slane %v3173, 2
      %v3225 = vrot.slane %v3178, 2
      %v3226 = vsel %vm3200, %v3224, %v3225
      %v3228 = vsel %vm3200, %v3225, 0.0
      %3230 = vrot.lane.b32.xlu0 %v3194, 16
      %v3231 = vpop.permute.xlu0 %3230
      %3232 = vrot.lane.b32.xlu0 %v3192, 16
      %v3233 = vpop.permute.xlu0 %3232
      %3236 = vrot.lane.b32.xlu0 %v3066, 32
      %v3237 = vpop.permute.xlu0 %3236
      %3238 = vrot.lane.b32.xlu0 %v3071, 32
      %v3239 = vpop.permute.xlu0 %3238
      %3243 = vrot.lane.b32.xlu0 %v3197, 48
      %v3244 = vpop.permute.xlu0 %3243
      %3245 = vrot.lane.b32.xlu0 %v3199, 48
      %v3246 = vpop.permute.xlu0 %3245
      %3250 = vrot.lane.b32.xlu0 %v3203, 64
      %v3251 = vpop.permute.xlu0 %3250
      %3252 = vrot.lane.b32.xlu0 %v3205, 64
      %v3253 = vpop.permute.xlu0 %3252
      %3257 = vrot.lane.b32.xlu0 %v3212, 80
      %v3258 = vpop.permute.xlu0 %3257
      %3259 = vrot.lane.b32.xlu0 %v3210, 80
      %v3260 = vpop.permute.xlu0 %3259
      %3264 = vrot.lane.b32.xlu0 %v3217, 96
      %v3265 = vpop.permute.xlu0 %3264
      %3266 = vrot.lane.b32.xlu0 %v3215, 96
      %v3267 = vpop.permute.xlu0 %3266
      %3270 = vrot.lane.b32.xlu0 %v3173, 112
      %v3271 = vpop.permute.xlu0 %3270
      %3272 = vrot.lane.b32.xlu0 %v3178, 112
      %v3273 = vpop.permute.xlu0 %3272
      %3277 = vrot.lane.b32.xlu0 %v3226, 16
      %v3278 = vpop.permute.xlu0 %3277
      %3279 = vrot.lane.b32.xlu0 %v3228, 16
      %v3280 = vpop.permute.xlu0 %3279
      %vm3283 = vcmask 130048
      %v3284 = vsel %vm3283, %v3189, %v3231
      %v3285 = vsel %vm3283, %v3186, %v3233
      %vm3286 = vcmask 261120
      %v3287 = vsel %vm3286, %v3284, %v3237
      %v3288 = vsel %vm3286, %v3285, %v3239
      %vm3289 = vcmask 392192
      %v3290 = vsel %vm3289, %v3287, %v3244
      %v3291 = vsel %vm3289, %v3288, %v3246
      %vm3292 = vcmask 523264
      %v3293 = vsel %vm3292, %v3290, %v3251
      %v3294 = vsel %vm3292, %v3291, %v3253
      %vm3295 = vcmask 654336
      %v3296 = vsel %vm3295, %v3293, %v3258
      %v3297 = vsel %vm3295, %v3294, %v3260
      %vm3298 = vcmask 785408
      %v3299 = vsel %vm3298, %v3296, %v3265
      %v3300 = vsel %vm3298, %v3297, %v3267
      %vm3301 = vcmask 916480
      %v3302 = vsel %vm3301, %v3299, %v3271
      %v3303 = vsel %vm3301, %v3300, %v3273
      %v3304 = vsel %vm3283, %v3220, %v3278
      %v3305 = vsel %vm3283, %v3223, %v3280
      %v3306 = vld [vmem:[%s5] sm:$0xff]
      %v3307 = vld [vmem:[%s5 + $0x8] sm:$0xff]
      %v3308 = vld [vmem:[%s5 + $0x10] sm:$0xff]
      %v3309 = vld [vmem:[%s5 + $0x18] sm:$0xff]
      %v3310 = vld [vmem:[%s5 + $0x20] sm:$0xff]
      %v3311 = vld [vmem:[%s5 + $0x28] sm:$0xff]
      %v3312 = vld [vmem:[%s5 + $0x30] sm:$0xff]
      %v3313 = vld [vmem:[%s5 + $0x38] sm:$0xff]
      %v3314 = vld [vmem:[%s5 + $0x40] sm:$0xff]
      %v3315 = vld [vmem:[%s5 + $0x48] sm:$0xff]
      %v3316 = vld [vmem:[%s5 + $0x50] sm:$0xff]
      %v3317 = vld [vmem:[%s5 + $0x58] sm:$0xff]
      %v3318 = vld [vmem:[%s5 + $0x60] sm:$0xff]
      %v3319 = vld [vmem:[%s5 + $0x68] sm:$0xff]
      %v3320 = vld [vmem:[%s5 + $0x70] sm:$0xff]
      %v3321 = vld [vmem:[%s5 + $0x78] sm:$0xff]
      %v3322 = vld [vmem:[%s5 + $0x80] sm:$0xff]
      %v3323 = vld [vmem:[%s5 + $0x88] sm:$0xff]
      %v3324 = vld [vmem:[%s5 + $0x90] sm:$0xff]
      %v3325 = vld [vmem:[%s5 + $0x98] sm:$0xff]
      %v3327 = vsel %vm3286, %v3304, 0
      %v3330 = vsel %vm3286, %v3305, 0
      %3332 = vmatprep.subr.mxu0 0.0
      %3333 = vmatpush1.msra.mxu0 %v3321
      %3334 = vmatprep.subr.mxu0 0.0
      %3335 = vmatpush1.msra.mxu0 %v3320
      %3336 = vmatprep.subr.mxu0 0.0
      %3337 = vmatpush1.msra.mxu0 %v3319
      %3338 = vmatprep.subr.mxu0 0.0
      %3339 = vmatpush1.msra.mxu0 %v3318
      %3340 = vmatprep.subr.mxu0 0.0
      %3341 = vmatpush1.msra.mxu0 %v3317
      %3342 = vmatprep.subr.mxu0 0.0
      %3343 = vmatpush1.msra.mxu0 %v3316
      %3344 = vmatprep.subr.mxu0 0.0
      %3345 = vmatpush1.msra.mxu0 %v3315
      %3346 = vmatprep.subr.mxu0 0.0
      %3347 = vmatpush1.msra.mxu0 %v3314
      %3348 = vmatprep.subr.mxu0 0.0
      %3349 = vmatpush1.msra.mxu0 %v3313
      %3350 = vmatprep.subr.mxu0 0.0
      %3351 = vmatpush1.msra.mxu0 %v3312
      %3352 = vmatprep.subr.mxu0 0.0
      %3353 = vmatpush1.msra.mxu0 %v3311
      %3354 = vmatprep.subr.mxu0 0.0
      %3355 = vmatpush1.msra.mxu0 %v3310
      %3356 = vmatprep.subr.mxu0 0.0
      %3357 = vmatpush1.msra.mxu0 %v3309
      %3358 = vmatprep.subr.mxu0 0.0
      %3359 = vmatpush1.msra.mxu0 %v3308
      %3360 = vmatprep.subr.mxu0 0.0
      %3361 = vmatpush1.msra.mxu0 %v3307
      %3362 = vmatprep.subr.mxu0 0.0
      %3363 = vmatpush1.msra.mxu0 %v3306
      %3364 = vmatprep.subr.mxu0 0.0
      %3365 = vmatpush2.msra.mxu0 0.0
      %3366 = vmatprep.subr.mxu0 0.0
      %3367 = vmatpush2.msra.mxu0 0.0
      %3368 = vmatprep.subr.mxu0 0.0
      %3369 = vmatpush2.msra.mxu0 0.0
      %3370 = vmatprep.subr.mxu0 0.0
      %3371 = vmatpush2.msra.mxu0 0.0
      %3372 = vmatprep.subr.mxu0 0.0
      %3373 = vmatpush2.msra.mxu0 0.0
      %3374 = vmatprep.subr.mxu0 0.0
      %3375 = vmatpush2.msra.mxu0 0.0
      %3376 = vmatprep.subr.mxu0 0.0
      %3377 = vmatpush2.msra.mxu0 0.0
      %3378 = vmatprep.subr.mxu0 0.0
      %3379 = vmatpush2.msra.mxu0 0.0
      %3380 = vmatprep.subr.mxu0 0.0
      %3381 = vmatpush2.msra.mxu0 0.0
      %3382 = vmatprep.subr.mxu0 0.0
      %3383 = vmatpush2.msra.mxu0 0.0
      %3384 = vmatprep.subr.mxu0 0.0
      %3385 = vmatpush2.msra.mxu0 0.0
      %3386 = vmatprep.subr.mxu0 0.0
      %3387 = vmatpush2.msra.mxu0 0.0
      %3388 = vmatprep.subr.mxu0 0.0
      %3389 = vmatpush2.msra.mxu0 %v3325
      %3390 = vmatprep.subr.mxu0 0.0
      %3391 = vmatpush2.msra.mxu0 %v3324
      %3392 = vmatprep.subr.mxu0 0.0
      %3393 = vmatpush2.msra.mxu0 %v3323
      %3394 = vmatprep.subr.mxu0 0.0
      %3395 = vmatpush2.msra.mxu0 %v3322
      %3396 = vmatprep.mubr.f32.mxu0 %v3327
      %3397 = vmatmul.mubr.f32.gmra.mxu0 %v3302
      %v3398 = vpop.f32.mrf.mxu0
      %v3399 = vadd.f32 0.0, %v3398
      %v3400 = vpop.f32.mrf.mxu0
      %3401 = vmatprep.mubr.f32.mxu0 %v3330
      %3402 = vmatmul.mubr.f32.gmra.mxu0 %v3303
      %v3403 = vpop.f32.mrf.mxu0
      %v3404 = vadd.f32 0.0, %v3403
      %v3405 = vpop.f32.mrf.mxu0
      %3406 = vdwg.mxu0
      %v3407 = vmax.f32 %v3399, 0.0
      %v3408 = vmax.f32 %v3404, 0.0
      %v3409 = vsub.f32 0.0, %v3407
      %v3410 = vsub.f32 0.0, %v3408
      %v3411 = vmul.f32 %v3409, 1.442695
      %v3412 = vpow.pop %v3411
      %v3413 = vmul.f32 %v3410, 1.442695
      %v3414 = vpow.pop %v3413
      %v3415 = vadd.f32 %v3412, 1.0
      %v3416 = vadd.f32 %v3414, 1.0
      %v3417 = vrcp.pop %v3415
      %v3418 = vmul.f32 1.0, %v3417
      %v3419 = vrcp.pop %v3416
      %v3420 = vmul.f32 1.0, %v3419
      %v3421 = vld [vmem:[%s8] sm:$0xff]
      %v3422 = vld [vmem:[%s8 + $0x8] sm:$0xff]
      %v3423 = vld [vmem:[%s8 + $0x10] sm:$0xff]
      %v3424 = vld [vmem:[%s8 + $0x18] sm:$0xff]
      %v3426 = vsel %vm3283, %v3418, 0
      %v3429 = vsel %vm3283, %v3420, 0
      %3431 = vmatprep.subr.mxu0 0.0
      %3432 = vmatpush1.msra.mxu0 0.0
      %3433 = vmatprep.subr.mxu0 0.0
      %3434 = vmatpush1.msra.mxu0 0.0
      %3435 = vmatprep.subr.mxu0 0.0
      %3436 = vmatpush1.msra.mxu0 0.0
      %3437 = vmatprep.subr.mxu0 0.0
      %3438 = vmatpush1.msra.mxu0 0.0
      %3439 = vmatprep.subr.mxu0 0.0
      %3440 = vmatpush1.msra.mxu0 0.0
      %3441 = vmatprep.subr.mxu0 0.0
      %3442 = vmatpush1.msra.mxu0 0.0
      %3443 = vmatprep.subr.mxu0 0.0
      %3444 = vmatpush1.msra.mxu0 0.0
      %3445 = vmatprep.subr.mxu0 0.0
      %3446 = vmatpush1.msra.mxu0 0.0
      %3447 = vmatprep.subr.mxu0 0.0
      %3448 = vmatpush1.msra.mxu0 0.0
      %3449 = vmatprep.subr.mxu0 0.0
      %3450 = vmatpush1.msra.mxu0 0.0
      %3451 = vmatprep.subr.mxu0 0.0
      %3452 = vmatpush1.msra.mxu0 0.0
      %3453 = vmatprep.subr.mxu0 0.0
      %3454 = vmatpush1.msra.mxu0 0.0
      %3455 = vmatprep.subr.mxu0 0.0
      %3456 = vmatpush1.msra.mxu0 0.0
      %3457 = vmatprep.subr.mxu0 0.0
      %3458 = vmatpush1.msra.mxu0 0.0
      %3459 = vmatprep.subr.mxu0 %v3424
      %3460 = vmatpush1.msra.mxu0 %v3423
      %3461 = vmatprep.subr.mxu0 %v3422
      %3462 = vmatpush1.msra.mxu0 %v3421
      %3463 = vmatprep.subr.mxu0 0.0
      %3464 = vmatpush2.msra.mxu0 0.0
      %3465 = vmatprep.subr.mxu0 0.0
      %3466 = vmatpush2.msra.mxu0 0.0
      %3467 = vmatprep.subr.mxu0 0.0
      %3468 = vmatpush2.msra.mxu0 0.0
      %3469 = vmatprep.subr.mxu0 0.0
      %3470 = vmatpush2.msra.mxu0 0.0
      %3471 = vmatprep.subr.mxu0 0.0
      %3472 = vmatpush2.msra.mxu0 0.0
      %3473 = vmatprep.subr.mxu0 0.0
      %3474 = vmatpush2.msra.mxu0 0.0
      %3475 = vmatprep.subr.mxu0 0.0
      %3476 = vmatpush2.msra.mxu0 0.0
      %3477 = vmatprep.subr.mxu0 0.0
      %3478 = vmatpush2.msra.mxu0 0.0
      %3479 = vmatprep.subr.mxu0 0.0
      %3480 = vmatpush2.msra.mxu0 0.0
      %3481 = vmatprep.subr.mxu0 0.0
      %3482 = vmatpush2.msra.mxu0 0.0
      %3483 = vmatprep.subr.mxu0 0.0
      %3484 = vmatpush2.msra.mxu0 0.0
      %3485 = vmatprep.subr.mxu0 0.0
      %3486 = vmatpush2.msra.mxu0 0.0
      %3487 = vmatprep.subr.mxu0 0.0
      %3488 = vmatpush2.msra.mxu0 0.0
      %3489 = vmatprep.subr.mxu0 0.0
      %3490 = vmatpush2.msra.mxu0 0.0
      %3491 = vmatprep.subr.mxu0 0.0
      %3492 = vmatpush2.msra.mxu0 0.0
      %3493 = vmatprep.subr.mxu0 0.0
      %3494 = vmatpush2.msra.mxu0 0.0
      %3495 = vmatprep.mubr.f32.mxu0 0.0
      %3496 = vmatmul.mubr.f32.gmra.mxu0 %v3426
      %v3497 = vpop.f32.mrf.mxu0
      %v3498 = vadd.f32 0.0, %v3497
      %v3499 = vpop.f32.mrf.mxu0
      %v3500 = vadd.f32 0.0, %v3499
      %3501 = vmatprep.mubr.f32.mxu0 0.0
      %3502 = vmatmul.mubr.f32.gmra.mxu0 %v3429
      %v3503 = vpop.f32.mrf.mxu0
      %v3504 = vadd.f32 0.0, %v3503
      %v3505 = vpop.f32.mrf.mxu0
      %v3506 = vadd.f32 0.0, %v3505
      %3507 = vdwg.mxu0
      %v3508 = vmul.f32 %v2855, %v3498
      %v3509 = vmul.f32 %v2856, %v3500
      %v3510 = vmul.f32 %v2857, %v3504
      %v3511 = vmul.f32 %v2858, %v3506
      %v3512 = vadd.f32 %v333, %v3508
      %v3513 = vadd.f32 %v334, %v3509
      %v3514 = vadd.f32 %v335, %v3510
      %v3515 = vadd.f32 %v336, %v3511
      %3516 = vst [vmem:[%s332] sm:$0xff] %v3512
      %3517 = vst [vmem:[%s332 + $0x8] sm:$0xff] %v3513
      %3518 = vst [vmem:[%s332 + $0x10] sm:$0xff] %v3514
      %3519 = vst [vmem:[%s332 + $0x18] sm:$0xff] %v3515
      %p3520 = scmp.lt.s32.totalorder %s20, 1
      %s3521 = scalar_select %p3520, %s20, 1
      %s3522 = smul.addr %s3521, 4
      %s3523 = smul.addr %s3522, 8
      %s3524 = scalar_lea.vmem %s9, %s3523
      // Predicated region
      $region57: #{rab_forward.1} parent=55 // pred_check
        %p3525 = pneg %p232
      $region58: #{rab_forward.1} parent=55 // pred_check_branch
        %3527 = sbr.rel (%p3525) target = $region60
      $region59: #{rab_forward.1} parent=55 // pred_region
        _
      $region60: #{rab_forward.1} parent=55 // pred_fallthru
        _
    $region56: #{rab_forward.1} parent=5 // pred_fallthru
      _
    %p3528 = scmp.le.s32.totalorder 2, %s15
    // Predicated region
    $region61: #{rab_forward.1} parent=5 // pred_check
      %p3529 = pneg %p3528
    $region62: #{rab_forward.1} parent=5 // pred_check_branch
      %3531 = sbr.rel (%p3529) target = $region64
    $region63: #{rab_forward.1} parent=5 // pred_region
      %s3532 = ssub.s32 %s15, 2
      // Predicated region
      $region65: #{rab_forward.1} parent=63 // pred_check
        %p3533 = pneg %p238
      $region66: #{rab_forward.1} parent=63 // pred_check_branch
        %3535 = sbr.rel (%p3533) target = $region68
      $region67: #{rab_forward.1} parent=63 // pred_region
        %p3536 = scmp.lt.s32.totalorder %s21, 1
        %s3537 = scalar_select %p3536, %s21, 1
        %s3538 = smul.addr %s3537, 4
        %s3539 = smul.addr %s3538, 8
        %s3540 = scalar_lea.vmem %s9, %s3539
      $region68: #{rab_forward.1} parent=63 // pred_fallthru
        _
    $region64: #{rab_forward.1} parent=5 // pred_fallthru
      _
  $region6: #{rab_forward.1} parent=0 // loop_footer
    %s19 = sadd.s32 1, %s15
  $region7: #{rab_forward.1} parent=0 // loop_footer_branch
    %14 = sbr.rel target = $region3
  $region8: #{rab_forward.1} parent=0 // loop_exit
    _

</llo_original>
